<compile_context>
chip_gen: v7x
topology: tpu7x:2x2x1
jax: 0.10.0
libtpu: 0.0.40
codegen_flags: <defaults>
</compile_context>

<pallas_src>
import functools

import numpy as np
import jax
import jax.numpy as jnp
from jax import lax
from jax.experimental import pallas as pl
from jax.experimental.pallas import tpu as pltpu


def _round_up(x, m):
    return (x + m - 1) // m * m


# ----------------------------- Pallas kernel ------------------------------- #
def _conv_gn_lrelu_kernel(x_ref, w_ref, bgb_ref, out_ref, patch_ref, *,
                          K, stride, Ho, Wo, Cin, Cout, Kd, Kdp,
                          layer_norm_bool, lrelu, eps):
    # One sample per grid step.
    #   x_ref:     (stride*stride, Hq, Wq, Cin) bf16  phase-decomposed padded input
    #   w_ref:     (Kdp, Cpad)                  bf16  zero-padded conv weight matrix
    #   bgb_ref:   (3, Cpad)                    f32   rows = bias, gamma, beta (zero padded)
    #   out_ref:   (1, P, Cpad)                 f32   P = Ho*Wo, Cpad multiple of 128
    #   patch_ref: (P, Kdp)                     bf16  VMEM scratch: im2col slab
    s = stride
    P = Ho * Wo

    # Zero the lane-padding columns of the patch slab once per step (real columns are
    # fully overwritten below; zero-padded weight rows make the pad columns inert).
    if Kdp > Kd:
        patch_ref[:, Kd:Kdp] = jnp.zeros((P, Kdp - Kd), dtype=patch_ref.dtype)

    # In-kernel im2col: K*K shifted, *unstrided*, statically-addressed VMEM->VMEM copies.
    # Stride handling was moved to the wrapper's phase decomposition, so every copy here
    # is a plain contiguous (Wo, Cin) slab.
    for kh in range(K):
        rh, ah = kh % s, kh // s
        for kw in range(K):
            rw, aw = kw % s, kw // s
            p = rh * s + rw
            c0 = (kh * K + kw) * Cin
            for oh in range(Ho):
                patch_ref[oh * Wo:(oh + 1) * Wo, c0:c0 + Cin] = (
                    x_ref[p, ah + oh, aw:aw + Wo, :])

    # Conv as a single MXU matmul per sample: bf16 operands, f32 accumulation.
    y = jnp.dot(patch_ref[...], w_ref[...], preferred_element_type=jnp.float32)

    bgb = bgb_ref[...]                                   # (3, Cpad) f32
    y = y + bgb[0:1, :]                                  # bias

    if layer_norm_bool:
        # GroupNorm(num_groups=1): stats over the real (P, Cout) elements of this sample.
        # Padded output columns are exactly zero (zero weight cols / zero bias), so they do
        # not perturb the sums; divide by the real element count.  One pass over y.
        inv_cnt = 1.0 / float(P * Cout)
        s1 = jnp.sum(y, keepdims=True)                   # (1, 1)
        s2 = jnp.sum(y * y, keepdims=True)               # (1, 1)
        mean = s1 * inv_cnt
        var = s2 * inv_cnt - mean * mean                 # biased variance
        y = (y - mean) * lax.rsqrt(var + eps)
        y = y * bgb[1:2, :] + bgb[2:3, :]                # affine (zeros in lane padding)

    if lrelu:
        y = jnp.where(y > 0, y, 0.2 * y)                 # LeakyReLU(0.2), f32

    out_ref[0] = y.astype(out_ref.dtype)                 # lane-dense (P, Cpad) store


# ------------------------------ JAX glue ------------------------------------ #
def _spectral_normalize(weight, u, eps=1e-12):
    """One power-iteration spectral norm (eval-mode), matching torch.nn.utils.spectral_norm."""
    cout = weight.shape[0]
    w_mat = weight.reshape(cout, -1)
    v = w_mat.T @ u
    v = v / (jnp.linalg.norm(v) + eps)
    u_new = w_mat @ v
    u_new = u_new / (jnp.linalg.norm(u_new) + eps)
    sigma = jnp.dot(u_new, w_mat @ v)
    return weight / sigma


def _pads(kernel, stride, pad):
    if (kernel - stride) % 2 == 0:
        return pad, pad, pad, pad                        # top, bottom, left, right
    pt = pad
    pb = kernel - stride - pt
    pleft = pad
    pright = kernel - stride - pleft
    return pt, pb, pleft, pright


def conv_lrelu_forward(x_nchw, weight_oihw, bias, gamma, beta, u,
                       kernel, stride, pad, layer_norm_bool=False, lrelu=True):
    N, Cin, H, W = x_nchw.shape
    Cout = weight_oihw.shape[0]
    K, s = kernel, stride
    pt, pb, pleft, pright = _pads(kernel, stride, pad)

    # spectral-norm the conv weight (parameter setup, plain JAX)
    w_sn = _spectral_normalize(weight_oihw, u)

    # NCHW -> NHWC, spatial zero-pad (== F.pad(input, (pl, pr, pt, pb, 0,0,0,0)))
    x = jnp.transpose(x_nchw, (0, 2, 3, 1))
    x_pad = jnp.pad(x, ((0, 0), (pt, pb), (pleft, pright), (0, 0)))
    Hp, Wp = H + pt + pb, W + pleft + pright
    Ho = (Hp - K) // s + 1
    Wo = (Wp - K) // s + 1
    P = Ho * Wo

    # Stride-phase decomposition (1x input size, replaces the K^2 im2col blowup):
    #   x_phase[n, rh, rw, a, b, c] = x_pad[n, a*s + rh, b*s + rw, c]
    Hp2, Wp2 = _round_up(Hp, s), _round_up(Wp, s)
    x_pad = jnp.pad(x_pad, ((0, 0), (0, Hp2 - Hp), (0, Wp2 - Wp), (0, 0)))
    Hq, Wq = Hp2 // s, Wp2 // s
    x_phase = x_pad.reshape(N, Hq, s, Wq, s, Cin)
    x_phase = jnp.transpose(x_phase, (0, 2, 4, 1, 3, 5))
    x_phase = x_phase.reshape(N * s * s, Hq, Wq, Cin).astype(jnp.bfloat16)

    # weight (Cout, Cin, KH, KW) -> (KH*KW*Cin, Cout), zero-padded so both matmul dims
    # are multiples of 128 (lane-dense loads/stores, aligned MXU contraction).
    Kd = K * K * Cin
    Kdp = _round_up(Kd, 128)
    Cpad = _round_up(Cout, 128)
    w_mat = jnp.transpose(w_sn, (2, 3, 1, 0)).reshape(Kd, Cout)
    w_mat = jnp.pad(w_mat, ((0, Kdp - Kd), (0, Cpad - Cout))).astype(jnp.bfloat16)

    # bias / gamma / beta folded into one small (3, Cpad) block (single DMA)
    bgb = jnp.stack([bias, gamma, beta], axis=0).astype(jnp.float32)
    bgb = jnp.pad(bgb, ((0, 0), (0, Cpad - Cout)))

    kern = functools.partial(
        _conv_gn_lrelu_kernel, K=K, stride=s, Ho=Ho, Wo=Wo, Cin=Cin, Cout=Cout,
        Kd=Kd, Kdp=Kdp, layer_norm_bool=layer_norm_bool, lrelu=lrelu, eps=1e-5)

    out = pl.pallas_call(
        kern,
        out_shape=jax.ShapeDtypeStruct((N, P, Cpad), jnp.float32),
        grid=(N,),
        in_specs=[
            pl.BlockSpec((s * s, Hq, Wq, Cin), lambda n: (n, 0, 0, 0)),
            pl.BlockSpec((Kdp, Cpad), lambda n: (0, 0)),
            pl.BlockSpec((3, Cpad), lambda n: (0, 0)),
        ],
        out_specs=pl.BlockSpec((1, P, Cpad), lambda n: (n, 0, 0)),
        scratch_shapes=[pltpu.VMEM((P, Kdp), jnp.bfloat16)],
        compiler_params=pltpu.CompilerParams(
            dimension_semantics=("parallel",),          # N=2 -> both v7x TensorCores
            vmem_limit_bytes=32 * 1024 * 1024),
    )(x_phase, w_mat, bgb)

    # (N, P, Cpad) -> drop lane padding -> NCHW
    out = out[:, :, :Cout].reshape(N, Ho, Wo, Cout)
    return jnp.transpose(out, (0, 3, 1, 2))


# -------------------------- pure-JAX reference ------------------------------ #
def ref_forward(x_nchw, weight_oihw, bias, gamma, beta, u,
                kernel, stride, pad, layer_norm_bool, lrelu):
    pt, pb, pleft, pright = _pads(kernel, stride, pad)
    w_sn = _spectral_normalize(weight_oihw, u)
    x_pad = jnp.pad(x_nchw, ((0, 0), (0, 0), (pt, pb), (pleft, pright)))
    y = lax.conv_general_dilated(x_pad, w_sn, (stride, stride), 'VALID',
                                 dimension_numbers=('NCHW', 'OIHW', 'NCHW'))
    y = y + bias[None, :, None, None]
    if layer_norm_bool:
        mean = jnp.mean(y, axis=(1, 2, 3), keepdims=True)
        var = jnp.mean((y - mean) ** 2, axis=(1, 2, 3), keepdims=True)
        y = (y - mean) / jnp.sqrt(var + 1e-5)
        y = y * gamma[None, :, None, None] + beta[None, :, None, None]
    if lrelu:
        y = jnp.where(y > 0, y, 0.2 * y)
    return y


# ---------------------------------- main ------------------------------------ #
if __name__ == "__main__":
    key = jax.random.PRNGKey(0)
    k1, k2, k3, k4 = jax.random.split(key, 4)

    # small discriminator-style layer: 4 -> 8 channels, 4x4 conv, stride 2, pad 1
    N, Cin, H, W = 2, 4, 16, 16
    Cout, kernel, stride, pad = 8, 4, 2, 1

    x = jax.random.normal(k1, (N, Cin, H, W), jnp.float32)
    weight = 0.02 * jax.random.normal(k2, (Cout, Cin, kernel, kernel), jnp.float32)  # normal_(0, 0.02)
    bias = 0.1 * jax.random.normal(k3, (Cout,), jnp.float32)
    u = jax.random.normal(k4, (Cout,), jnp.float32)
    u = u / (jnp.linalg.norm(u) + 1e-12)        # spectral-norm power-iteration vector
    gamma = jnp.ones((Cout,), jnp.float32)      # GroupNorm affine defaults
    beta = jnp.zeros((Cout,), jnp.float32)

    for layer_norm_bool in (False, True):       # module default False; also exercise GN path
        out = conv_lrelu_forward(x, weight, bias, gamma, beta, u,
                                 kernel, stride, pad,
                                 layer_norm_bool=layer_norm_bool, lrelu=True)
        out = jax.block_until_ready(out)
        ref = ref_forward(x, weight, bias, gamma, beta, u,
                          kernel, stride, pad, layer_norm_bool, True)
        # bf16 MXU operands (f32 accumulation) -> slightly looser tolerance than pure f32
        np.testing.assert_allclose(np.asarray(out), np.asarray(ref),
                                   rtol=2e-2, atol=2e-2)

    print("KERNEL_OK")
</pallas_src>

<mosaic_0001>
module attributes {stable_mosaic.version = 11 : i64} {
  func.func @_conv_gn_lrelu_kernel(%arg0: i32, %arg1: memref<4x9x9x4xbf16, #tpu.memory_space<vmem>>, %arg2: memref<128x128xbf16, #tpu.memory_space<vmem>>, %arg3: memref<3x128xf32, #tpu.memory_space<vmem>>, %arg4: memref<1x64x128xf32, #tpu.memory_space<vmem>>, %arg5: memref<64x128xbf16, #tpu.memory_space<vmem>>) attributes {dimension_semantics = [#tpu.dimension_semantics<parallel>], iteration_bounds = array<i64: 2>, scalar_prefetch = 0 : i64, scratch_operands = 1 : i64, tpu.core_type = #tpu.core_type<tc>, window_params = [{transform_indices = @transform_0, window_bounds = array<i64: 4, 9, 9, 4>}, {pipeline_mode = #tpu.pipeline_mode<synchronous>, transform_indices = @transform_1, window_bounds = array<i64: 128, 128>}, {pipeline_mode = #tpu.pipeline_mode<synchronous>, transform_indices = @transform_2, window_bounds = array<i64: 3, 128>}, {transform_indices = @transform_3, window_bounds = array<i64: 1, 64, 128>}]} {
    %cst = arith.constant 0.000000e+00 : bf16
    %0 = vector.broadcast %cst : bf16 to vector<64x64xbf16>
    %c0 = arith.constant 0 : index
    %c64 = arith.constant 64 : index
    %1 = vector.load %arg5[%c0, %c64] : memref<64x128xbf16, #tpu.memory_space<vmem>>, vector<64x64xbf16>
    tpu.vector_store %arg5[%c0, %c64], %0 {strides = array<i32>} : memref<64x128xbf16, #tpu.memory_space<vmem>>, vector<64x64xbf16>,
    %c0_0 = arith.constant 0 : index
    %c0_1 = arith.constant 0 : index
    %c0_2 = arith.constant 0 : index
    %c0_3 = arith.constant 0 : index
    %2 = vector.load %arg1[%c0_0, %c0_1, %c0_2, %c0_3] : memref<4x9x9x4xbf16, #tpu.memory_space<vmem>>, vector<1x1x8x4xbf16>
    %3 = vector.shape_cast %2 : vector<1x1x8x4xbf16> to vector<8x4xbf16>
    %c0_4 = arith.constant 0 : index
    %c0_5 = arith.constant 0 : index
    %4 = vector.load %arg5[%c0_4, %c0_5] : memref<64x128xbf16, #tpu.memory_space<vmem>>, vector<8x4xbf16>
    tpu.vector_store %arg5[%c0_4, %c0_5], %3 {strides = array<i32>} : memref<64x128xbf16, #tpu.memory_space<vmem>>, vector<8x4xbf16>,
    %c0_6 = arith.constant 0 : index
    %c1 = arith.constant 1 : index
    %c0_7 = arith.constant 0 : index
    %c0_8 = arith.constant 0 : index
    %5 = vector.load %arg1[%c0_6, %c1, %c0_7, %c0_8] : memref<4x9x9x4xbf16, #tpu.memory_space<vmem>>, vector<1x1x8x4xbf16>
    %6 = vector.shape_cast %5 : vector<1x1x8x4xbf16> to vector<8x4xbf16>
    %c8 = arith.constant 8 : index
    %c0_9 = arith.constant 0 : index
    %7 = vector.load %arg5[%c8, %c0_9] : memref<64x128xbf16, #tpu.memory_space<vmem>>, vector<8x4xbf16>
    tpu.vector_store %arg5[%c8, %c0_9], %6 {strides = array<i32>} : memref<64x128xbf16, #tpu.memory_space<vmem>>, vector<8x4xbf16>,
    %c0_10 = arith.constant 0 : index
    %c2 = arith.constant 2 : index
    %c0_11 = arith.constant 0 : index
    %c0_12 = arith.constant 0 : index
    %8 = vector.load %arg1[%c0_10, %c2, %c0_11, %c0_12] : memref<4x9x9x4xbf16, #tpu.memory_space<vmem>>, vector<1x1x8x4xbf16>
    %9 = vector.shape_cast %8 : vector<1x1x8x4xbf16> to vector<8x4xbf16>
    %c16 = arith.constant 16 : index
    %c0_13 = arith.constant 0 : index
    %10 = vector.load %arg5[%c16, %c0_13] : memref<64x128xbf16, #tpu.memory_space<vmem>>, vector<8x4xbf16>
    tpu.vector_store %arg5[%c16, %c0_13], %9 {strides = array<i32>} : memref<64x128xbf16, #tpu.memory_space<vmem>>, vector<8x4xbf16>,
    %c0_14 = arith.constant 0 : index
    %c3 = arith.constant 3 : index
    %c0_15 = arith.constant 0 : index
    %c0_16 = arith.constant 0 : index
    %11 = vector.load %arg1[%c0_14, %c3, %c0_15, %c0_16] : memref<4x9x9x4xbf16, #tpu.memory_space<vmem>>, vector<1x1x8x4xbf16>
    %12 = vector.shape_cast %11 : vector<1x1x8x4xbf16> to vector<8x4xbf16>
    %c24 = arith.constant 24 : index
    %c0_17 = arith.constant 0 : index
    %13 = vector.load %arg5[%c24, %c0_17] : memref<64x128xbf16, #tpu.memory_space<vmem>>, vector<8x4xbf16>
    tpu.vector_store %arg5[%c24, %c0_17], %12 {strides = array<i32>} : memref<64x128xbf16, #tpu.memory_space<vmem>>, vector<8x4xbf16>,
    %c0_18 = arith.constant 0 : index
    %c4 = arith.constant 4 : index
    %c0_19 = arith.constant 0 : index
    %c0_20 = arith.constant 0 : index
    %14 = vector.load %arg1[%c0_18, %c4, %c0_19, %c0_20] : memref<4x9x9x4xbf16, #tpu.memory_space<vmem>>, vector<1x1x8x4xbf16>
    %15 = vector.shape_cast %14 : vector<1x1x8x4xbf16> to vector<8x4xbf16>
    %c32 = arith.constant 32 : index
    %c0_21 = arith.constant 0 : index
    %16 = vector.load %arg5[%c32, %c0_21] : memref<64x128xbf16, #tpu.memory_space<vmem>>, vector<8x4xbf16>
    tpu.vector_store %arg5[%c32, %c0_21], %15 {strides = array<i32>} : memref<64x128xbf16, #tpu.memory_space<vmem>>, vector<8x4xbf16>,
    %c0_22 = arith.constant 0 : index
    %c5 = arith.constant 5 : index
    %c0_23 = arith.constant 0 : index
    %c0_24 = arith.constant 0 : index
    %17 = vector.load %arg1[%c0_22, %c5, %c0_23, %c0_24] : memref<4x9x9x4xbf16, #tpu.memory_space<vmem>>, vector<1x1x8x4xbf16>
    %18 = vector.shape_cast %17 : vector<1x1x8x4xbf16> to vector<8x4xbf16>
    %c40 = arith.constant 40 : index
    %c0_25 = arith.constant 0 : index
    %19 = vector.load %arg5[%c40, %c0_25] : memref<64x128xbf16, #tpu.memory_space<vmem>>, vector<8x4xbf16>
    tpu.vector_store %arg5[%c40, %c0_25], %18 {strides = array<i32>} : memref<64x128xbf16, #tpu.memory_space<vmem>>, vector<8x4xbf16>,
    %c0_26 = arith.constant 0 : index
    %c6 = arith.constant 6 : index
    %c0_27 = arith.constant 0 : index
    %c0_28 = arith.constant 0 : index
    %20 = vector.load %arg1[%c0_26, %c6, %c0_27, %c0_28] : memref<4x9x9x4xbf16, #tpu.memory_space<vmem>>, vector<1x1x8x4xbf16>
    %21 = vector.shape_cast %20 : vector<1x1x8x4xbf16> to vector<8x4xbf16>
    %c48 = arith.constant 48 : index
    %c0_29 = arith.constant 0 : index
    %22 = vector.load %arg5[%c48, %c0_29] : memref<64x128xbf16, #tpu.memory_space<vmem>>, vector<8x4xbf16>
    tpu.vector_store %arg5[%c48, %c0_29], %21 {strides = array<i32>} : memref<64x128xbf16, #tpu.memory_space<vmem>>, vector<8x4xbf16>,
    %c0_30 = arith.constant 0 : index
    %c7 = arith.constant 7 : index
    %c0_31 = arith.constant 0 : index
    %c0_32 = arith.constant 0 : index
    %23 = vector.load %arg1[%c0_30, %c7, %c0_31, %c0_32] : memref<4x9x9x4xbf16, #tpu.memory_space<vmem>>, vector<1x1x8x4xbf16>
    %24 = vector.shape_cast %23 : vector<1x1x8x4xbf16> to vector<8x4xbf16>
    %c56 = arith.constant 56 : index
    %c0_33 = arith.constant 0 : index
    %25 = vector.load %arg5[%c56, %c0_33] : memref<64x128xbf16, #tpu.memory_space<vmem>>, vector<8x4xbf16>
    tpu.vector_store %arg5[%c56, %c0_33], %24 {strides = array<i32>} : memref<64x128xbf16, #tpu.memory_space<vmem>>, vector<8x4xbf16>,
    %c1_34 = arith.constant 1 : index
    %c0_35 = arith.constant 0 : index
    %c0_36 = arith.constant 0 : index
    %c0_37 = arith.constant 0 : index
    %26 = vector.load %arg1[%c1_34, %c0_35, %c0_36, %c0_37] : memref<4x9x9x4xbf16, #tpu.memory_space<vmem>>, vector<1x1x8x4xbf16>
    %27 = vector.shape_cast %26 : vector<1x1x8x4xbf16> to vector<8x4xbf16>
    %c0_38 = arith.constant 0 : index
    %c4_39 = arith.constant 4 : index
    %28 = vector.load %arg5[%c0_38, %c4_39] : memref<64x128xbf16, #tpu.memory_space<vmem>>, vector<8x4xbf16>
    tpu.vector_store %arg5[%c0_38, %c4_39], %27 {strides = array<i32>} : memref<64x128xbf16, #tpu.memory_space<vmem>>, vector<8x4xbf16>,
    %c1_40 = arith.constant 1 : index
    %c1_41 = arith.constant 1 : index
    %c0_42 = arith.constant 0 : index
    %c0_43 = arith.constant 0 : index
    %29 = vector.load %arg1[%c1_40, %c1_41, %c0_42, %c0_43] : memref<4x9x9x4xbf16, #tpu.memory_space<vmem>>, vector<1x1x8x4xbf16>
    %30 = vector.shape_cast %29 : vector<1x1x8x4xbf16> to vector<8x4xbf16>
    %c8_44 = arith.constant 8 : index
    %c4_45 = arith.constant 4 : index
    %31 = vector.load %arg5[%c8_44, %c4_45] : memref<64x128xbf16, #tpu.memory_space<vmem>>, vector<8x4xbf16>
    tpu.vector_store %arg5[%c8_44, %c4_45], %30 {strides = array<i32>} : memref<64x128xbf16, #tpu.memory_space<vmem>>, vector<8x4xbf16>,
    %c1_46 = arith.constant 1 : index
    %c2_47 = arith.constant 2 : index
    %c0_48 = arith.constant 0 : index
    %c0_49 = arith.constant 0 : index
    %32 = vector.load %arg1[%c1_46, %c2_47, %c0_48, %c0_49] : memref<4x9x9x4xbf16, #tpu.memory_space<vmem>>, vector<1x1x8x4xbf16>
    %33 = vector.shape_cast %32 : vector<1x1x8x4xbf16> to vector<8x4xbf16>
    %c16_50 = arith.constant 16 : index
    %c4_51 = arith.constant 4 : index
    %34 = vector.load %arg5[%c16_50, %c4_51] : memref<64x128xbf16, #tpu.memory_space<vmem>>, vector<8x4xbf16>
    tpu.vector_store %arg5[%c16_50, %c4_51], %33 {strides = array<i32>} : memref<64x128xbf16, #tpu.memory_space<vmem>>, vector<8x4xbf16>,
    %c1_52 = arith.constant 1 : index
    %c3_53 = arith.constant 3 : index
    %c0_54 = arith.constant 0 : index
    %c0_55 = arith.constant 0 : index
    %35 = vector.load %arg1[%c1_52, %c3_53, %c0_54, %c0_55] : memref<4x9x9x4xbf16, #tpu.memory_space<vmem>>, vector<1x1x8x4xbf16>
    %36 = vector.shape_cast %35 : vector<1x1x8x4xbf16> to vector<8x4xbf16>
    %c24_56 = arith.constant 24 : index
    %c4_57 = arith.constant 4 : index
    %37 = vector.load %arg5[%c24_56, %c4_57] : memref<64x128xbf16, #tpu.memory_space<vmem>>, vector<8x4xbf16>
    tpu.vector_store %arg5[%c24_56, %c4_57], %36 {strides = array<i32>} : memref<64x128xbf16, #tpu.memory_space<vmem>>, vector<8x4xbf16>,
    %c1_58 = arith.constant 1 : index
    %c4_59 = arith.constant 4 : index
    %c0_60 = arith.constant 0 : index
    %c0_61 = arith.constant 0 : index
    %38 = vector.load %arg1[%c1_58, %c4_59, %c0_60, %c0_61] : memref<4x9x9x4xbf16, #tpu.memory_space<vmem>>, vector<1x1x8x4xbf16>
    %39 = vector.shape_cast %38 : vector<1x1x8x4xbf16> to vector<8x4xbf16>
    %c32_62 = arith.constant 32 : index
    %c4_63 = arith.constant 4 : index
    %40 = vector.load %arg5[%c32_62, %c4_63] : memref<64x128xbf16, #tpu.memory_space<vmem>>, vector<8x4xbf16>
    tpu.vector_store %arg5[%c32_62, %c4_63], %39 {strides = array<i32>} : memref<64x128xbf16, #tpu.memory_space<vmem>>, vector<8x4xbf16>,
    %c1_64 = arith.constant 1 : index
    %c5_65 = arith.constant 5 : index
    %c0_66 = arith.constant 0 : index
    %c0_67 = arith.constant 0 : index
    %41 = vector.load %arg1[%c1_64, %c5_65, %c0_66, %c0_67] : memref<4x9x9x4xbf16, #tpu.memory_space<vmem>>, vector<1x1x8x4xbf16>
    %42 = vector.shape_cast %41 : vector<1x1x8x4xbf16> to vector<8x4xbf16>
    %c40_68 = arith.constant 40 : index
    %c4_69 = arith.constant 4 : index
    %43 = vector.load %arg5[%c40_68, %c4_69] : memref<64x128xbf16, #tpu.memory_space<vmem>>, vector<8x4xbf16>
    tpu.vector_store %arg5[%c40_68, %c4_69], %42 {strides = array<i32>} : memref<64x128xbf16, #tpu.memory_space<vmem>>, vector<8x4xbf16>,
    %c1_70 = arith.constant 1 : index
    %c6_71 = arith.constant 6 : index
    %c0_72 = arith.constant 0 : index
    %c0_73 = arith.constant 0 : index
    %44 = vector.load %arg1[%c1_70, %c6_71, %c0_72, %c0_73] : memref<4x9x9x4xbf16, #tpu.memory_space<vmem>>, vector<1x1x8x4xbf16>
    %45 = vector.shape_cast %44 : vector<1x1x8x4xbf16> to vector<8x4xbf16>
    %c48_74 = arith.constant 48 : index
    %c4_75 = arith.constant 4 : index
    %46 = vector.load %arg5[%c48_74, %c4_75] : memref<64x128xbf16, #tpu.memory_space<vmem>>, vector<8x4xbf16>
    tpu.vector_store %arg5[%c48_74, %c4_75], %45 {strides = array<i32>} : memref<64x128xbf16, #tpu.memory_space<vmem>>, vector<8x4xbf16>,
    %c1_76 = arith.constant 1 : index
    %c7_77 = arith.constant 7 : index
    %c0_78 = arith.constant 0 : index
    %c0_79 = arith.constant 0 : index
    %47 = vector.load %arg1[%c1_76, %c7_77, %c0_78, %c0_79] : memref<4x9x9x4xbf16, #tpu.memory_space<vmem>>, vector<1x1x8x4xbf16>
    %48 = vector.shape_cast %47 : vector<1x1x8x4xbf16> to vector<8x4xbf16>
    %c56_80 = arith.constant 56 : index
    %c4_81 = arith.constant 4 : index
    %49 = vector.load %arg5[%c56_80, %c4_81] : memref<64x128xbf16, #tpu.memory_space<vmem>>, vector<8x4xbf16>
    tpu.vector_store %arg5[%c56_80, %c4_81], %48 {strides = array<i32>} : memref<64x128xbf16, #tpu.memory_space<vmem>>, vector<8x4xbf16>,
    %c0_82 = arith.constant 0 : index
    %c0_83 = arith.constant 0 : index
    %c1_84 = arith.constant 1 : index
    %c0_85 = arith.constant 0 : index
    %50 = vector.load %arg1[%c0_82, %c0_83, %c1_84, %c0_85] : memref<4x9x9x4xbf16, #tpu.memory_space<vmem>>, vector<1x1x8x4xbf16>
    %51 = vector.shape_cast %50 : vector<1x1x8x4xbf16> to vector<8x4xbf16>
    %c0_86 = arith.constant 0 : index
    %c8_87 = arith.constant 8 : index
    %52 = vector.load %arg5[%c0_86, %c8_87] : memref<64x128xbf16, #tpu.memory_space<vmem>>, vector<8x4xbf16>
    tpu.vector_store %arg5[%c0_86, %c8_87], %51 {strides = array<i32>} : memref<64x128xbf16, #tpu.memory_space<vmem>>, vector<8x4xbf16>,
    %c0_88 = arith.constant 0 : index
    %c1_89 = arith.constant 1 : index
    %c1_90 = arith.constant 1 : index
    %c0_91 = arith.constant 0 : index
    %53 = vector.load %arg1[%c0_88, %c1_89, %c1_90, %c0_91] : memref<4x9x9x4xbf16, #tpu.memory_space<vmem>>, vector<1x1x8x4xbf16>
    %54 = vector.shape_cast %53 : vector<1x1x8x4xbf16> to vector<8x4xbf16>
    %c8_92 = arith.constant 8 : index
    %c8_93 = arith.constant 8 : index
    %55 = vector.load %arg5[%c8_92, %c8_93] : memref<64x128xbf16, #tpu.memory_space<vmem>>, vector<8x4xbf16>
    tpu.vector_store %arg5[%c8_92, %c8_93], %54 {strides = array<i32>} : memref<64x128xbf16, #tpu.memory_space<vmem>>, vector<8x4xbf16>,
    %c0_94 = arith.constant 0 : index
    %c2_95 = arith.constant 2 : index
    %c1_96 = arith.constant 1 : index
    %c0_97 = arith.constant 0 : index
    %56 = vector.load %arg1[%c0_94, %c2_95, %c1_96, %c0_97] : memref<4x9x9x4xbf16, #tpu.memory_space<vmem>>, vector<1x1x8x4xbf16>
    %57 = vector.shape_cast %56 : vector<1x1x8x4xbf16> to vector<8x4xbf16>
    %c16_98 = arith.constant 16 : index
    %c8_99 = arith.constant 8 : index
    %58 = vector.load %arg5[%c16_98, %c8_99] : memref<64x128xbf16, #tpu.memory_space<vmem>>, vector<8x4xbf16>
    tpu.vector_store %arg5[%c16_98, %c8_99], %57 {strides = array<i32>} : memref<64x128xbf16, #tpu.memory_space<vmem>>, vector<8x4xbf16>,
    %c0_100 = arith.constant 0 : index
    %c3_101 = arith.constant 3 : index
    %c1_102 = arith.constant 1 : index
    %c0_103 = arith.constant 0 : index
    %59 = vector.load %arg1[%c0_100, %c3_101, %c1_102, %c0_103] : memref<4x9x9x4xbf16, #tpu.memory_space<vmem>>, vector<1x1x8x4xbf16>
    %60 = vector.shape_cast %59 : vector<1x1x8x4xbf16> to vector<8x4xbf16>
    %c24_104 = arith.constant 24 : index
    %c8_105 = arith.constant 8 : index
    %61 = vector.load %arg5[%c24_104, %c8_105] : memref<64x128xbf16, #tpu.memory_space<vmem>>, vector<8x4xbf16>
    tpu.vector_store %arg5[%c24_104, %c8_105], %60 {strides = array<i32>} : memref<64x128xbf16, #tpu.memory_space<vmem>>, vector<8x4xbf16>,
    %c0_106 = arith.constant 0 : index
    %c4_107 = arith.constant 4 : index
    %c1_108 = arith.constant 1 : index
    %c0_109 = arith.constant 0 : index
    %62 = vector.load %arg1[%c0_106, %c4_107, %c1_108, %c0_109] : memref<4x9x9x4xbf16, #tpu.memory_space<vmem>>, vector<1x1x8x4xbf16>
    %63 = vector.shape_cast %62 : vector<1x1x8x4xbf16> to vector<8x4xbf16>
    %c32_110 = arith.constant 32 : index
    %c8_111 = arith.constant 8 : index
    %64 = vector.load %arg5[%c32_110, %c8_111] : memref<64x128xbf16, #tpu.memory_space<vmem>>, vector<8x4xbf16>
    tpu.vector_store %arg5[%c32_110, %c8_111], %63 {strides = array<i32>} : memref<64x128xbf16, #tpu.memory_space<vmem>>, vector<8x4xbf16>,
    %c0_112 = arith.constant 0 : index
    %c5_113 = arith.constant 5 : index
    %c1_114 = arith.constant 1 : index
    %c0_115 = arith.constant 0 : index
    %65 = vector.load %arg1[%c0_112, %c5_113, %c1_114, %c0_115] : memref<4x9x9x4xbf16, #tpu.memory_space<vmem>>, vector<1x1x8x4xbf16>
    %66 = vector.shape_cast %65 : vector<1x1x8x4xbf16> to vector<8x4xbf16>
    %c40_116 = arith.constant 40 : index
    %c8_117 = arith.constant 8 : index
    %67 = vector.load %arg5[%c40_116, %c8_117] : memref<64x128xbf16, #tpu.memory_space<vmem>>, vector<8x4xbf16>
    tpu.vector_store %arg5[%c40_116, %c8_117], %66 {strides = array<i32>} : memref<64x128xbf16, #tpu.memory_space<vmem>>, vector<8x4xbf16>,
    %c0_118 = arith.constant 0 : index
    %c6_119 = arith.constant 6 : index
    %c1_120 = arith.constant 1 : index
    %c0_121 = arith.constant 0 : index
    %68 = vector.load %arg1[%c0_118, %c6_119, %c1_120, %c0_121] : memref<4x9x9x4xbf16, #tpu.memory_space<vmem>>, vector<1x1x8x4xbf16>
    %69 = vector.shape_cast %68 : vector<1x1x8x4xbf16> to vector<8x4xbf16>
    %c48_122 = arith.constant 48 : index
    %c8_123 = arith.constant 8 : index
    %70 = vector.load %arg5[%c48_122, %c8_123] : memref<64x128xbf16, #tpu.memory_space<vmem>>, vector<8x4xbf16>
    tpu.vector_store %arg5[%c48_122, %c8_123], %69 {strides = array<i32>} : memref<64x128xbf16, #tpu.memory_space<vmem>>, vector<8x4xbf16>,
    %c0_124 = arith.constant 0 : index
    %c7_125 = arith.constant 7 : index
    %c1_126 = arith.constant 1 : index
    %c0_127 = arith.constant 0 : index
    %71 = vector.load %arg1[%c0_124, %c7_125, %c1_126, %c0_127] : memref<4x9x9x4xbf16, #tpu.memory_space<vmem>>, vector<1x1x8x4xbf16>
    %72 = vector.shape_cast %71 : vector<1x1x8x4xbf16> to vector<8x4xbf16>
    %c56_128 = arith.constant 56 : index
    %c8_129 = arith.constant 8 : index
    %73 = vector.load %arg5[%c56_128, %c8_129] : memref<64x128xbf16, #tpu.memory_space<vmem>>, vector<8x4xbf16>
    tpu.vector_store %arg5[%c56_128, %c8_129], %72 {strides = array<i32>} : memref<64x128xbf16, #tpu.memory_space<vmem>>, vector<8x4xbf16>,
    %c1_130 = arith.constant 1 : index
    %c0_131 = arith.constant 0 : index
    %c1_132 = arith.constant 1 : index
    %c0_133 = arith.constant 0 : index
    %74 = vector.load %arg1[%c1_130, %c0_131, %c1_132, %c0_133] : memref<4x9x9x4xbf16, #tpu.memory_space<vmem>>, vector<1x1x8x4xbf16>
    %75 = vector.shape_cast %74 : vector<1x1x8x4xbf16> to vector<8x4xbf16>
    %c0_134 = arith.constant 0 : index
    %c12 = arith.constant 12 : index
    %76 = vector.load %arg5[%c0_134, %c12] : memref<64x128xbf16, #tpu.memory_space<vmem>>, vector<8x4xbf16>
    tpu.vector_store %arg5[%c0_134, %c12], %75 {strides = array<i32>} : memref<64x128xbf16, #tpu.memory_space<vmem>>, vector<8x4xbf16>,
    %c1_135 = arith.constant 1 : index
    %c1_136 = arith.constant 1 : index
    %c1_137 = arith.constant 1 : index
    %c0_138 = arith.constant 0 : index
    %77 = vector.load %arg1[%c1_135, %c1_136, %c1_137, %c0_138] : memref<4x9x9x4xbf16, #tpu.memory_space<vmem>>, vector<1x1x8x4xbf16>
    %78 = vector.shape_cast %77 : vector<1x1x8x4xbf16> to vector<8x4xbf16>
    %c8_139 = arith.constant 8 : index
    %c12_140 = arith.constant 12 : index
    %79 = vector.load %arg5[%c8_139, %c12_140] : memref<64x128xbf16, #tpu.memory_space<vmem>>, vector<8x4xbf16>
    tpu.vector_store %arg5[%c8_139, %c12_140], %78 {strides = array<i32>} : memref<64x128xbf16, #tpu.memory_space<vmem>>, vector<8x4xbf16>,
    %c1_141 = arith.constant 1 : index
    %c2_142 = arith.constant 2 : index
    %c1_143 = arith.constant 1 : index
    %c0_144 = arith.constant 0 : index
    %80 = vector.load %arg1[%c1_141, %c2_142, %c1_143, %c0_144] : memref<4x9x9x4xbf16, #tpu.memory_space<vmem>>, vector<1x1x8x4xbf16>
    %81 = vector.shape_cast %80 : vector<1x1x8x4xbf16> to vector<8x4xbf16>
    %c16_145 = arith.constant 16 : index
    %c12_146 = arith.constant 12 : index
    %82 = vector.load %arg5[%c16_145, %c12_146] : memref<64x128xbf16, #tpu.memory_space<vmem>>, vector<8x4xbf16>
    tpu.vector_store %arg5[%c16_145, %c12_146], %81 {strides = array<i32>} : memref<64x128xbf16, #tpu.memory_space<vmem>>, vector<8x4xbf16>,
    %c1_147 = arith.constant 1 : index
    %c3_148 = arith.constant 3 : index
    %c1_149 = arith.constant 1 : index
    %c0_150 = arith.constant 0 : index
    %83 = vector.load %arg1[%c1_147, %c3_148, %c1_149, %c0_150] : memref<4x9x9x4xbf16, #tpu.memory_space<vmem>>, vector<1x1x8x4xbf16>
    %84 = vector.shape_cast %83 : vector<1x1x8x4xbf16> to vector<8x4xbf16>
    %c24_151 = arith.constant 24 : index
    %c12_152 = arith.constant 12 : index
    %85 = vector.load %arg5[%c24_151, %c12_152] : memref<64x128xbf16, #tpu.memory_space<vmem>>, vector<8x4xbf16>
    tpu.vector_store %arg5[%c24_151, %c12_152], %84 {strides = array<i32>} : memref<64x128xbf16, #tpu.memory_space<vmem>>, vector<8x4xbf16>,
    %c1_153 = arith.constant 1 : index
    %c4_154 = arith.constant 4 : index
    %c1_155 = arith.constant 1 : index
    %c0_156 = arith.constant 0 : index
    %86 = vector.load %arg1[%c1_153, %c4_154, %c1_155, %c0_156] : memref<4x9x9x4xbf16, #tpu.memory_space<vmem>>, vector<1x1x8x4xbf16>
    %87 = vector.shape_cast %86 : vector<1x1x8x4xbf16> to vector<8x4xbf16>
    %c32_157 = arith.constant 32 : index
    %c12_158 = arith.constant 12 : index
    %88 = vector.load %arg5[%c32_157, %c12_158] : memref<64x128xbf16, #tpu.memory_space<vmem>>, vector<8x4xbf16>
    tpu.vector_store %arg5[%c32_157, %c12_158], %87 {strides = array<i32>} : memref<64x128xbf16, #tpu.memory_space<vmem>>, vector<8x4xbf16>,
    %c1_159 = arith.constant 1 : index
    %c5_160 = arith.constant 5 : index
    %c1_161 = arith.constant 1 : index
    %c0_162 = arith.constant 0 : index
    %89 = vector.load %arg1[%c1_159, %c5_160, %c1_161, %c0_162] : memref<4x9x9x4xbf16, #tpu.memory_space<vmem>>, vector<1x1x8x4xbf16>
    %90 = vector.shape_cast %89 : vector<1x1x8x4xbf16> to vector<8x4xbf16>
    %c40_163 = arith.constant 40 : index
    %c12_164 = arith.constant 12 : index
    %91 = vector.load %arg5[%c40_163, %c12_164] : memref<64x128xbf16, #tpu.memory_space<vmem>>, vector<8x4xbf16>
    tpu.vector_store %arg5[%c40_163, %c12_164], %90 {strides = array<i32>} : memref<64x128xbf16, #tpu.memory_space<vmem>>, vector<8x4xbf16>,
    %c1_165 = arith.constant 1 : index
    %c6_166 = arith.constant 6 : index
    %c1_167 = arith.constant 1 : index
    %c0_168 = arith.constant 0 : index
    %92 = vector.load %arg1[%c1_165, %c6_166, %c1_167, %c0_168] : memref<4x9x9x4xbf16, #tpu.memory_space<vmem>>, vector<1x1x8x4xbf16>
    %93 = vector.shape_cast %92 : vector<1x1x8x4xbf16> to vector<8x4xbf16>
    %c48_169 = arith.constant 48 : index
    %c12_170 = arith.constant 12 : index
    %94 = vector.load %arg5[%c48_169, %c12_170] : memref<64x128xbf16, #tpu.memory_space<vmem>>, vector<8x4xbf16>
    tpu.vector_store %arg5[%c48_169, %c12_170], %93 {strides = array<i32>} : memref<64x128xbf16, #tpu.memory_space<vmem>>, vector<8x4xbf16>,
    %c1_171 = arith.constant 1 : index
    %c7_172 = arith.constant 7 : index
    %c1_173 = arith.constant 1 : index
    %c0_174 = arith.constant 0 : index
    %95 = vector.load %arg1[%c1_171, %c7_172, %c1_173, %c0_174] : memref<4x9x9x4xbf16, #tpu.memory_space<vmem>>, vector<1x1x8x4xbf16>
    %96 = vector.shape_cast %95 : vector<1x1x8x4xbf16> to vector<8x4xbf16>
    %c56_175 = arith.constant 56 : index
    %c12_176 = arith.constant 12 : index
    %97 = vector.load %arg5[%c56_175, %c12_176] : memref<64x128xbf16, #tpu.memory_space<vmem>>, vector<8x4xbf16>
    tpu.vector_store %arg5[%c56_175, %c12_176], %96 {strides = array<i32>} : memref<64x128xbf16, #tpu.memory_space<vmem>>, vector<8x4xbf16>,
    %c2_177 = arith.constant 2 : index
    %c0_178 = arith.constant 0 : index
    %c0_179 = arith.constant 0 : index
    %c0_180 = arith.constant 0 : index
    %98 = vector.load %arg1[%c2_177, %c0_178, %c0_179, %c0_180] : memref<4x9x9x4xbf16, #tpu.memory_space<vmem>>, vector<1x1x8x4xbf16>
    %99 = vector.shape_cast %98 : vector<1x1x8x4xbf16> to vector<8x4xbf16>
    %c0_181 = arith.constant 0 : index
    %c16_182 = arith.constant 16 : index
    %100 = vector.load %arg5[%c0_181, %c16_182] : memref<64x128xbf16, #tpu.memory_space<vmem>>, vector<8x4xbf16>
    tpu.vector_store %arg5[%c0_181, %c16_182], %99 {strides = array<i32>} : memref<64x128xbf16, #tpu.memory_space<vmem>>, vector<8x4xbf16>,
    %c2_183 = arith.constant 2 : index
    %c1_184 = arith.constant 1 : index
    %c0_185 = arith.constant 0 : index
    %c0_186 = arith.constant 0 : index
    %101 = vector.load %arg1[%c2_183, %c1_184, %c0_185, %c0_186] : memref<4x9x9x4xbf16, #tpu.memory_space<vmem>>, vector<1x1x8x4xbf16>
    %102 = vector.shape_cast %101 : vector<1x1x8x4xbf16> to vector<8x4xbf16>
    %c8_187 = arith.constant 8 : index
    %c16_188 = arith.constant 16 : index
    %103 = vector.load %arg5[%c8_187, %c16_188] : memref<64x128xbf16, #tpu.memory_space<vmem>>, vector<8x4xbf16>
    tpu.vector_store %arg5[%c8_187, %c16_188], %102 {strides = array<i32>} : memref<64x128xbf16, #tpu.memory_space<vmem>>, vector<8x4xbf16>,
    %c2_189 = arith.constant 2 : index
    %c2_190 = arith.constant 2 : index
    %c0_191 = arith.constant 0 : index
    %c0_192 = arith.constant 0 : index
    %104 = vector.load %arg1[%c2_189, %c2_190, %c0_191, %c0_192] : memref<4x9x9x4xbf16, #tpu.memory_space<vmem>>, vector<1x1x8x4xbf16>
    %105 = vector.shape_cast %104 : vector<1x1x8x4xbf16> to vector<8x4xbf16>
    %c16_193 = arith.constant 16 : index
    %c16_194 = arith.constant 16 : index
    %106 = vector.load %arg5[%c16_193, %c16_194] : memref<64x128xbf16, #tpu.memory_space<vmem>>, vector<8x4xbf16>
    tpu.vector_store %arg5[%c16_193, %c16_194], %105 {strides = array<i32>} : memref<64x128xbf16, #tpu.memory_space<vmem>>, vector<8x4xbf16>,
    %c2_195 = arith.constant 2 : index
    %c3_196 = arith.constant 3 : index
    %c0_197 = arith.constant 0 : index
    %c0_198 = arith.constant 0 : index
    %107 = vector.load %arg1[%c2_195, %c3_196, %c0_197, %c0_198] : memref<4x9x9x4xbf16, #tpu.memory_space<vmem>>, vector<1x1x8x4xbf16>
    %108 = vector.shape_cast %107 : vector<1x1x8x4xbf16> to vector<8x4xbf16>
    %c24_199 = arith.constant 24 : index
    %c16_200 = arith.constant 16 : index
    %109 = vector.load %arg5[%c24_199, %c16_200] : memref<64x128xbf16, #tpu.memory_space<vmem>>, vector<8x4xbf16>
    tpu.vector_store %arg5[%c24_199, %c16_200], %108 {strides = array<i32>} : memref<64x128xbf16, #tpu.memory_space<vmem>>, vector<8x4xbf16>,
    %c2_201 = arith.constant 2 : index
    %c4_202 = arith.constant 4 : index
    %c0_203 = arith.constant 0 : index
    %c0_204 = arith.constant 0 : index
    %110 = vector.load %arg1[%c2_201, %c4_202, %c0_203, %c0_204] : memref<4x9x9x4xbf16, #tpu.memory_space<vmem>>, vector<1x1x8x4xbf16>
    %111 = vector.shape_cast %110 : vector<1x1x8x4xbf16> to vector<8x4xbf16>
    %c32_205 = arith.constant 32 : index
    %c16_206 = arith.constant 16 : index
    %112 = vector.load %arg5[%c32_205, %c16_206] : memref<64x128xbf16, #tpu.memory_space<vmem>>, vector<8x4xbf16>
    tpu.vector_store %arg5[%c32_205, %c16_206], %111 {strides = array<i32>} : memref<64x128xbf16, #tpu.memory_space<vmem>>, vector<8x4xbf16>,
    %c2_207 = arith.constant 2 : index
    %c5_208 = arith.constant 5 : index
    %c0_209 = arith.constant 0 : index
    %c0_210 = arith.constant 0 : index
    %113 = vector.load %arg1[%c2_207, %c5_208, %c0_209, %c0_210] : memref<4x9x9x4xbf16, #tpu.memory_space<vmem>>, vector<1x1x8x4xbf16>
    %114 = vector.shape_cast %113 : vector<1x1x8x4xbf16> to vector<8x4xbf16>
    %c40_211 = arith.constant 40 : index
    %c16_212 = arith.constant 16 : index
    %115 = vector.load %arg5[%c40_211, %c16_212] : memref<64x128xbf16, #tpu.memory_space<vmem>>, vector<8x4xbf16>
    tpu.vector_store %arg5[%c40_211, %c16_212], %114 {strides = array<i32>} : memref<64x128xbf16, #tpu.memory_space<vmem>>, vector<8x4xbf16>,
    %c2_213 = arith.constant 2 : index
    %c6_214 = arith.constant 6 : index
    %c0_215 = arith.constant 0 : index
    %c0_216 = arith.constant 0 : index
    %116 = vector.load %arg1[%c2_213, %c6_214, %c0_215, %c0_216] : memref<4x9x9x4xbf16, #tpu.memory_space<vmem>>, vector<1x1x8x4xbf16>
    %117 = vector.shape_cast %116 : vector<1x1x8x4xbf16> to vector<8x4xbf16>
    %c48_217 = arith.constant 48 : index
    %c16_218 = arith.constant 16 : index
    %118 = vector.load %arg5[%c48_217, %c16_218] : memref<64x128xbf16, #tpu.memory_space<vmem>>, vector<8x4xbf16>
    tpu.vector_store %arg5[%c48_217, %c16_218], %117 {strides = array<i32>} : memref<64x128xbf16, #tpu.memory_space<vmem>>, vector<8x4xbf16>,
    %c2_219 = arith.constant 2 : index
    %c7_220 = arith.constant 7 : index
    %c0_221 = arith.constant 0 : index
    %c0_222 = arith.constant 0 : index
    %119 = vector.load %arg1[%c2_219, %c7_220, %c0_221, %c0_222] : memref<4x9x9x4xbf16, #tpu.memory_space<vmem>>, vector<1x1x8x4xbf16>
    %120 = vector.shape_cast %119 : vector<1x1x8x4xbf16> to vector<8x4xbf16>
    %c56_223 = arith.constant 56 : index
    %c16_224 = arith.constant 16 : index
    %121 = vector.load %arg5[%c56_223, %c16_224] : memref<64x128xbf16, #tpu.memory_space<vmem>>, vector<8x4xbf16>
    tpu.vector_store %arg5[%c56_223, %c16_224], %120 {strides = array<i32>} : memref<64x128xbf16, #tpu.memory_space<vmem>>, vector<8x4xbf16>,
    %c3_225 = arith.constant 3 : index
    %c0_226 = arith.constant 0 : index
    %c0_227 = arith.constant 0 : index
    %c0_228 = arith.constant 0 : index
    %122 = vector.load %arg1[%c3_225, %c0_226, %c0_227, %c0_228] : memref<4x9x9x4xbf16, #tpu.memory_space<vmem>>, vector<1x1x8x4xbf16>
    %123 = vector.shape_cast %122 : vector<1x1x8x4xbf16> to vector<8x4xbf16>
    %c0_229 = arith.constant 0 : index
    %c20 = arith.constant 20 : index
    %124 = vector.load %arg5[%c0_229, %c20] : memref<64x128xbf16, #tpu.memory_space<vmem>>, vector<8x4xbf16>
    tpu.vector_store %arg5[%c0_229, %c20], %123 {strides = array<i32>} : memref<64x128xbf16, #tpu.memory_space<vmem>>, vector<8x4xbf16>,
    %c3_230 = arith.constant 3 : index
    %c1_231 = arith.constant 1 : index
    %c0_232 = arith.constant 0 : index
    %c0_233 = arith.constant 0 : index
    %125 = vector.load %arg1[%c3_230, %c1_231, %c0_232, %c0_233] : memref<4x9x9x4xbf16, #tpu.memory_space<vmem>>, vector<1x1x8x4xbf16>
    %126 = vector.shape_cast %125 : vector<1x1x8x4xbf16> to vector<8x4xbf16>
    %c8_234 = arith.constant 8 : index
    %c20_235 = arith.constant 20 : index
    %127 = vector.load %arg5[%c8_234, %c20_235] : memref<64x128xbf16, #tpu.memory_space<vmem>>, vector<8x4xbf16>
    tpu.vector_store %arg5[%c8_234, %c20_235], %126 {strides = array<i32>} : memref<64x128xbf16, #tpu.memory_space<vmem>>, vector<8x4xbf16>,
    %c3_236 = arith.constant 3 : index
    %c2_237 = arith.constant 2 : index
    %c0_238 = arith.constant 0 : index
    %c0_239 = arith.constant 0 : index
    %128 = vector.load %arg1[%c3_236, %c2_237, %c0_238, %c0_239] : memref<4x9x9x4xbf16, #tpu.memory_space<vmem>>, vector<1x1x8x4xbf16>
    %129 = vector.shape_cast %128 : vector<1x1x8x4xbf16> to vector<8x4xbf16>
    %c16_240 = arith.constant 16 : index
    %c20_241 = arith.constant 20 : index
    %130 = vector.load %arg5[%c16_240, %c20_241] : memref<64x128xbf16, #tpu.memory_space<vmem>>, vector<8x4xbf16>
    tpu.vector_store %arg5[%c16_240, %c20_241], %129 {strides = array<i32>} : memref<64x128xbf16, #tpu.memory_space<vmem>>, vector<8x4xbf16>,
    %c3_242 = arith.constant 3 : index
    %c3_243 = arith.constant 3 : index
    %c0_244 = arith.constant 0 : index
    %c0_245 = arith.constant 0 : index
    %131 = vector.load %arg1[%c3_242, %c3_243, %c0_244, %c0_245] : memref<4x9x9x4xbf16, #tpu.memory_space<vmem>>, vector<1x1x8x4xbf16>
    %132 = vector.shape_cast %131 : vector<1x1x8x4xbf16> to vector<8x4xbf16>
    %c24_246 = arith.constant 24 : index
    %c20_247 = arith.constant 20 : index
    %133 = vector.load %arg5[%c24_246, %c20_247] : memref<64x128xbf16, #tpu.memory_space<vmem>>, vector<8x4xbf16>
    tpu.vector_store %arg5[%c24_246, %c20_247], %132 {strides = array<i32>} : memref<64x128xbf16, #tpu.memory_space<vmem>>, vector<8x4xbf16>,
    %c3_248 = arith.constant 3 : index
    %c4_249 = arith.constant 4 : index
    %c0_250 = arith.constant 0 : index
    %c0_251 = arith.constant 0 : index
    %134 = vector.load %arg1[%c3_248, %c4_249, %c0_250, %c0_251] : memref<4x9x9x4xbf16, #tpu.memory_space<vmem>>, vector<1x1x8x4xbf16>
    %135 = vector.shape_cast %134 : vector<1x1x8x4xbf16> to vector<8x4xbf16>
    %c32_252 = arith.constant 32 : index
    %c20_253 = arith.constant 20 : index
    %136 = vector.load %arg5[%c32_252, %c20_253] : memref<64x128xbf16, #tpu.memory_space<vmem>>, vector<8x4xbf16>
    tpu.vector_store %arg5[%c32_252, %c20_253], %135 {strides = array<i32>} : memref<64x128xbf16, #tpu.memory_space<vmem>>, vector<8x4xbf16>,
    %c3_254 = arith.constant 3 : index
    %c5_255 = arith.constant 5 : index
    %c0_256 = arith.constant 0 : index
    %c0_257 = arith.constant 0 : index
    %137 = vector.load %arg1[%c3_254, %c5_255, %c0_256, %c0_257] : memref<4x9x9x4xbf16, #tpu.memory_space<vmem>>, vector<1x1x8x4xbf16>
    %138 = vector.shape_cast %137 : vector<1x1x8x4xbf16> to vector<8x4xbf16>
    %c40_258 = arith.constant 40 : index
    %c20_259 = arith.constant 20 : index
    %139 = vector.load %arg5[%c40_258, %c20_259] : memref<64x128xbf16, #tpu.memory_space<vmem>>, vector<8x4xbf16>
    tpu.vector_store %arg5[%c40_258, %c20_259], %138 {strides = array<i32>} : memref<64x128xbf16, #tpu.memory_space<vmem>>, vector<8x4xbf16>,
    %c3_260 = arith.constant 3 : index
    %c6_261 = arith.constant 6 : index
    %c0_262 = arith.constant 0 : index
    %c0_263 = arith.constant 0 : index
    %140 = vector.load %arg1[%c3_260, %c6_261, %c0_262, %c0_263] : memref<4x9x9x4xbf16, #tpu.memory_space<vmem>>, vector<1x1x8x4xbf16>
    %141 = vector.shape_cast %140 : vector<1x1x8x4xbf16> to vector<8x4xbf16>
    %c48_264 = arith.constant 48 : index
    %c20_265 = arith.constant 20 : index
    %142 = vector.load %arg5[%c48_264, %c20_265] : memref<64x128xbf16, #tpu.memory_space<vmem>>, vector<8x4xbf16>
    tpu.vector_store %arg5[%c48_264, %c20_265], %141 {strides = array<i32>} : memref<64x128xbf16, #tpu.memory_space<vmem>>, vector<8x4xbf16>,
    %c3_266 = arith.constant 3 : index
    %c7_267 = arith.constant 7 : index
    %c0_268 = arith.constant 0 : index
    %c0_269 = arith.constant 0 : index
    %143 = vector.load %arg1[%c3_266, %c7_267, %c0_268, %c0_269] : memref<4x9x9x4xbf16, #tpu.memory_space<vmem>>, vector<1x1x8x4xbf16>
    %144 = vector.shape_cast %143 : vector<1x1x8x4xbf16> to vector<8x4xbf16>
    %c56_270 = arith.constant 56 : index
    %c20_271 = arith.constant 20 : index
    %145 = vector.load %arg5[%c56_270, %c20_271] : memref<64x128xbf16, #tpu.memory_space<vmem>>, vector<8x4xbf16>
    tpu.vector_store %arg5[%c56_270, %c20_271], %144 {strides = array<i32>} : memref<64x128xbf16, #tpu.memory_space<vmem>>, vector<8x4xbf16>,
    %c2_272 = arith.constant 2 : index
    %c0_273 = arith.constant 0 : index
    %c1_274 = arith.constant 1 : index
    %c0_275 = arith.constant 0 : index
    %146 = vector.load %arg1[%c2_272, %c0_273, %c1_274, %c0_275] : memref<4x9x9x4xbf16, #tpu.memory_space<vmem>>, vector<1x1x8x4xbf16>
    %147 = vector.shape_cast %146 : vector<1x1x8x4xbf16> to vector<8x4xbf16>
    %c0_276 = arith.constant 0 : index
    %c24_277 = arith.constant 24 : index
    %148 = vector.load %arg5[%c0_276, %c24_277] : memref<64x128xbf16, #tpu.memory_space<vmem>>, vector<8x4xbf16>
    tpu.vector_store %arg5[%c0_276, %c24_277], %147 {strides = array<i32>} : memref<64x128xbf16, #tpu.memory_space<vmem>>, vector<8x4xbf16>,
    %c2_278 = arith.constant 2 : index
    %c1_279 = arith.constant 1 : index
    %c1_280 = arith.constant 1 : index
    %c0_281 = arith.constant 0 : index
    %149 = vector.load %arg1[%c2_278, %c1_279, %c1_280, %c0_281] : memref<4x9x9x4xbf16, #tpu.memory_space<vmem>>, vector<1x1x8x4xbf16>
    %150 = vector.shape_cast %149 : vector<1x1x8x4xbf16> to vector<8x4xbf16>
    %c8_282 = arith.constant 8 : index
    %c24_283 = arith.constant 24 : index
    %151 = vector.load %arg5[%c8_282, %c24_283] : memref<64x128xbf16, #tpu.memory_space<vmem>>, vector<8x4xbf16>
    tpu.vector_store %arg5[%c8_282, %c24_283], %150 {strides = array<i32>} : memref<64x128xbf16, #tpu.memory_space<vmem>>, vector<8x4xbf16>,
    %c2_284 = arith.constant 2 : index
    %c2_285 = arith.constant 2 : index
    %c1_286 = arith.constant 1 : index
    %c0_287 = arith.constant 0 : index
    %152 = vector.load %arg1[%c2_284, %c2_285, %c1_286, %c0_287] : memref<4x9x9x4xbf16, #tpu.memory_space<vmem>>, vector<1x1x8x4xbf16>
    %153 = vector.shape_cast %152 : vector<1x1x8x4xbf16> to vector<8x4xbf16>
    %c16_288 = arith.constant 16 : index
    %c24_289 = arith.constant 24 : index
    %154 = vector.load %arg5[%c16_288, %c24_289] : memref<64x128xbf16, #tpu.memory_space<vmem>>, vector<8x4xbf16>
    tpu.vector_store %arg5[%c16_288, %c24_289], %153 {strides = array<i32>} : memref<64x128xbf16, #tpu.memory_space<vmem>>, vector<8x4xbf16>,
    %c2_290 = arith.constant 2 : index
    %c3_291 = arith.constant 3 : index
    %c1_292 = arith.constant 1 : index
    %c0_293 = arith.constant 0 : index
    %155 = vector.load %arg1[%c2_290, %c3_291, %c1_292, %c0_293] : memref<4x9x9x4xbf16, #tpu.memory_space<vmem>>, vector<1x1x8x4xbf16>
    %156 = vector.shape_cast %155 : vector<1x1x8x4xbf16> to vector<8x4xbf16>
    %c24_294 = arith.constant 24 : index
    %c24_295 = arith.constant 24 : index
    %157 = vector.load %arg5[%c24_294, %c24_295] : memref<64x128xbf16, #tpu.memory_space<vmem>>, vector<8x4xbf16>
    tpu.vector_store %arg5[%c24_294, %c24_295], %156 {strides = array<i32>} : memref<64x128xbf16, #tpu.memory_space<vmem>>, vector<8x4xbf16>,
    %c2_296 = arith.constant 2 : index
    %c4_297 = arith.constant 4 : index
    %c1_298 = arith.constant 1 : index
    %c0_299 = arith.constant 0 : index
    %158 = vector.load %arg1[%c2_296, %c4_297, %c1_298, %c0_299] : memref<4x9x9x4xbf16, #tpu.memory_space<vmem>>, vector<1x1x8x4xbf16>
    %159 = vector.shape_cast %158 : vector<1x1x8x4xbf16> to vector<8x4xbf16>
    %c32_300 = arith.constant 32 : index
    %c24_301 = arith.constant 24 : index
    %160 = vector.load %arg5[%c32_300, %c24_301] : memref<64x128xbf16, #tpu.memory_space<vmem>>, vector<8x4xbf16>
    tpu.vector_store %arg5[%c32_300, %c24_301], %159 {strides = array<i32>} : memref<64x128xbf16, #tpu.memory_space<vmem>>, vector<8x4xbf16>,
    %c2_302 = arith.constant 2 : index
    %c5_303 = arith.constant 5 : index
    %c1_304 = arith.constant 1 : index
    %c0_305 = arith.constant 0 : index
    %161 = vector.load %arg1[%c2_302, %c5_303, %c1_304, %c0_305] : memref<4x9x9x4xbf16, #tpu.memory_space<vmem>>, vector<1x1x8x4xbf16>
    %162 = vector.shape_cast %161 : vector<1x1x8x4xbf16> to vector<8x4xbf16>
    %c40_306 = arith.constant 40 : index
    %c24_307 = arith.constant 24 : index
    %163 = vector.load %arg5[%c40_306, %c24_307] : memref<64x128xbf16, #tpu.memory_space<vmem>>, vector<8x4xbf16>
    tpu.vector_store %arg5[%c40_306, %c24_307], %162 {strides = array<i32>} : memref<64x128xbf16, #tpu.memory_space<vmem>>, vector<8x4xbf16>,
    %c2_308 = arith.constant 2 : index
    %c6_309 = arith.constant 6 : index
    %c1_310 = arith.constant 1 : index
    %c0_311 = arith.constant 0 : index
    %164 = vector.load %arg1[%c2_308, %c6_309, %c1_310, %c0_311] : memref<4x9x9x4xbf16, #tpu.memory_space<vmem>>, vector<1x1x8x4xbf16>
    %165 = vector.shape_cast %164 : vector<1x1x8x4xbf16> to vector<8x4xbf16>
    %c48_312 = arith.constant 48 : index
    %c24_313 = arith.constant 24 : index
    %166 = vector.load %arg5[%c48_312, %c24_313] : memref<64x128xbf16, #tpu.memory_space<vmem>>, vector<8x4xbf16>
    tpu.vector_store %arg5[%c48_312, %c24_313], %165 {strides = array<i32>} : memref<64x128xbf16, #tpu.memory_space<vmem>>, vector<8x4xbf16>,
    %c2_314 = arith.constant 2 : index
    %c7_315 = arith.constant 7 : index
    %c1_316 = arith.constant 1 : index
    %c0_317 = arith.constant 0 : index
    %167 = vector.load %arg1[%c2_314, %c7_315, %c1_316, %c0_317] : memref<4x9x9x4xbf16, #tpu.memory_space<vmem>>, vector<1x1x8x4xbf16>
    %168 = vector.shape_cast %167 : vector<1x1x8x4xbf16> to vector<8x4xbf16>
    %c56_318 = arith.constant 56 : index
    %c24_319 = arith.constant 24 : index
    %169 = vector.load %arg5[%c56_318, %c24_319] : memref<64x128xbf16, #tpu.memory_space<vmem>>, vector<8x4xbf16>
    tpu.vector_store %arg5[%c56_318, %c24_319], %168 {strides = array<i32>} : memref<64x128xbf16, #tpu.memory_space<vmem>>, vector<8x4xbf16>,
    %c3_320 = arith.constant 3 : index
    %c0_321 = arith.constant 0 : index
    %c1_322 = arith.constant 1 : index
    %c0_323 = arith.constant 0 : index
    %170 = vector.load %arg1[%c3_320, %c0_321, %c1_322, %c0_323] : memref<4x9x9x4xbf16, #tpu.memory_space<vmem>>, vector<1x1x8x4xbf16>
    %171 = vector.shape_cast %170 : vector<1x1x8x4xbf16> to vector<8x4xbf16>
    %c0_324 = arith.constant 0 : index
    %c28 = arith.constant 28 : index
    %172 = vector.load %arg5[%c0_324, %c28] : memref<64x128xbf16, #tpu.memory_space<vmem>>, vector<8x4xbf16>
    tpu.vector_store %arg5[%c0_324, %c28], %171 {strides = array<i32>} : memref<64x128xbf16, #tpu.memory_space<vmem>>, vector<8x4xbf16>,
    %c3_325 = arith.constant 3 : index
    %c1_326 = arith.constant 1 : index
    %c1_327 = arith.constant 1 : index
    %c0_328 = arith.constant 0 : index
    %173 = vector.load %arg1[%c3_325, %c1_326, %c1_327, %c0_328] : memref<4x9x9x4xbf16, #tpu.memory_space<vmem>>, vector<1x1x8x4xbf16>
    %174 = vector.shape_cast %173 : vector<1x1x8x4xbf16> to vector<8x4xbf16>
    %c8_329 = arith.constant 8 : index
    %c28_330 = arith.constant 28 : index
    %175 = vector.load %arg5[%c8_329, %c28_330] : memref<64x128xbf16, #tpu.memory_space<vmem>>, vector<8x4xbf16>
    tpu.vector_store %arg5[%c8_329, %c28_330], %174 {strides = array<i32>} : memref<64x128xbf16, #tpu.memory_space<vmem>>, vector<8x4xbf16>,
    %c3_331 = arith.constant 3 : index
    %c2_332 = arith.constant 2 : index
    %c1_333 = arith.constant 1 : index
    %c0_334 = arith.constant 0 : index
    %176 = vector.load %arg1[%c3_331, %c2_332, %c1_333, %c0_334] : memref<4x9x9x4xbf16, #tpu.memory_space<vmem>>, vector<1x1x8x4xbf16>
    %177 = vector.shape_cast %176 : vector<1x1x8x4xbf16> to vector<8x4xbf16>
    %c16_335 = arith.constant 16 : index
    %c28_336 = arith.constant 28 : index
    %178 = vector.load %arg5[%c16_335, %c28_336] : memref<64x128xbf16, #tpu.memory_space<vmem>>, vector<8x4xbf16>
    tpu.vector_store %arg5[%c16_335, %c28_336], %177 {strides = array<i32>} : memref<64x128xbf16, #tpu.memory_space<vmem>>, vector<8x4xbf16>,
    %c3_337 = arith.constant 3 : index
    %c3_338 = arith.constant 3 : index
    %c1_339 = arith.constant 1 : index
    %c0_340 = arith.constant 0 : index
    %179 = vector.load %arg1[%c3_337, %c3_338, %c1_339, %c0_340] : memref<4x9x9x4xbf16, #tpu.memory_space<vmem>>, vector<1x1x8x4xbf16>
    %180 = vector.shape_cast %179 : vector<1x1x8x4xbf16> to vector<8x4xbf16>
    %c24_341 = arith.constant 24 : index
    %c28_342 = arith.constant 28 : index
    %181 = vector.load %arg5[%c24_341, %c28_342] : memref<64x128xbf16, #tpu.memory_space<vmem>>, vector<8x4xbf16>
    tpu.vector_store %arg5[%c24_341, %c28_342], %180 {strides = array<i32>} : memref<64x128xbf16, #tpu.memory_space<vmem>>, vector<8x4xbf16>,
    %c3_343 = arith.constant 3 : index
    %c4_344 = arith.constant 4 : index
    %c1_345 = arith.constant 1 : index
    %c0_346 = arith.constant 0 : index
    %182 = vector.load %arg1[%c3_343, %c4_344, %c1_345, %c0_346] : memref<4x9x9x4xbf16, #tpu.memory_space<vmem>>, vector<1x1x8x4xbf16>
    %183 = vector.shape_cast %182 : vector<1x1x8x4xbf16> to vector<8x4xbf16>
    %c32_347 = arith.constant 32 : index
    %c28_348 = arith.constant 28 : index
    %184 = vector.load %arg5[%c32_347, %c28_348] : memref<64x128xbf16, #tpu.memory_space<vmem>>, vector<8x4xbf16>
    tpu.vector_store %arg5[%c32_347, %c28_348], %183 {strides = array<i32>} : memref<64x128xbf16, #tpu.memory_space<vmem>>, vector<8x4xbf16>,
    %c3_349 = arith.constant 3 : index
    %c5_350 = arith.constant 5 : index
    %c1_351 = arith.constant 1 : index
    %c0_352 = arith.constant 0 : index
    %185 = vector.load %arg1[%c3_349, %c5_350, %c1_351, %c0_352] : memref<4x9x9x4xbf16, #tpu.memory_space<vmem>>, vector<1x1x8x4xbf16>
    %186 = vector.shape_cast %185 : vector<1x1x8x4xbf16> to vector<8x4xbf16>
    %c40_353 = arith.constant 40 : index
    %c28_354 = arith.constant 28 : index
    %187 = vector.load %arg5[%c40_353, %c28_354] : memref<64x128xbf16, #tpu.memory_space<vmem>>, vector<8x4xbf16>
    tpu.vector_store %arg5[%c40_353, %c28_354], %186 {strides = array<i32>} : memref<64x128xbf16, #tpu.memory_space<vmem>>, vector<8x4xbf16>,
    %c3_355 = arith.constant 3 : index
    %c6_356 = arith.constant 6 : index
    %c1_357 = arith.constant 1 : index
    %c0_358 = arith.constant 0 : index
    %188 = vector.load %arg1[%c3_355, %c6_356, %c1_357, %c0_358] : memref<4x9x9x4xbf16, #tpu.memory_space<vmem>>, vector<1x1x8x4xbf16>
    %189 = vector.shape_cast %188 : vector<1x1x8x4xbf16> to vector<8x4xbf16>
    %c48_359 = arith.constant 48 : index
    %c28_360 = arith.constant 28 : index
    %190 = vector.load %arg5[%c48_359, %c28_360] : memref<64x128xbf16, #tpu.memory_space<vmem>>, vector<8x4xbf16>
    tpu.vector_store %arg5[%c48_359, %c28_360], %189 {strides = array<i32>} : memref<64x128xbf16, #tpu.memory_space<vmem>>, vector<8x4xbf16>,
    %c3_361 = arith.constant 3 : index
    %c7_362 = arith.constant 7 : index
    %c1_363 = arith.constant 1 : index
    %c0_364 = arith.constant 0 : index
    %191 = vector.load %arg1[%c3_361, %c7_362, %c1_363, %c0_364] : memref<4x9x9x4xbf16, #tpu.memory_space<vmem>>, vector<1x1x8x4xbf16>
    %192 = vector.shape_cast %191 : vector<1x1x8x4xbf16> to vector<8x4xbf16>
    %c56_365 = arith.constant 56 : index
    %c28_366 = arith.constant 28 : index
    %193 = vector.load %arg5[%c56_365, %c28_366] : memref<64x128xbf16, #tpu.memory_space<vmem>>, vector<8x4xbf16>
    tpu.vector_store %arg5[%c56_365, %c28_366], %192 {strides = array<i32>} : memref<64x128xbf16, #tpu.memory_space<vmem>>, vector<8x4xbf16>,
    %c0_367 = arith.constant 0 : index
    %c1_368 = arith.constant 1 : index
    %c0_369 = arith.constant 0 : index
    %c0_370 = arith.constant 0 : index
    %194 = vector.load %arg1[%c0_367, %c1_368, %c0_369, %c0_370] : memref<4x9x9x4xbf16, #tpu.memory_space<vmem>>, vector<1x1x8x4xbf16>
    %195 = vector.shape_cast %194 : vector<1x1x8x4xbf16> to vector<8x4xbf16>
    %c0_371 = arith.constant 0 : index
    %c32_372 = arith.constant 32 : index
    %196 = vector.load %arg5[%c0_371, %c32_372] : memref<64x128xbf16, #tpu.memory_space<vmem>>, vector<8x4xbf16>
    tpu.vector_store %arg5[%c0_371, %c32_372], %195 {strides = array<i32>} : memref<64x128xbf16, #tpu.memory_space<vmem>>, vector<8x4xbf16>,
    %c0_373 = arith.constant 0 : index
    %c2_374 = arith.constant 2 : index
    %c0_375 = arith.constant 0 : index
    %c0_376 = arith.constant 0 : index
    %197 = vector.load %arg1[%c0_373, %c2_374, %c0_375, %c0_376] : memref<4x9x9x4xbf16, #tpu.memory_space<vmem>>, vector<1x1x8x4xbf16>
    %198 = vector.shape_cast %197 : vector<1x1x8x4xbf16> to vector<8x4xbf16>
    %c8_377 = arith.constant 8 : index
    %c32_378 = arith.constant 32 : index
    %199 = vector.load %arg5[%c8_377, %c32_378] : memref<64x128xbf16, #tpu.memory_space<vmem>>, vector<8x4xbf16>
    tpu.vector_store %arg5[%c8_377, %c32_378], %198 {strides = array<i32>} : memref<64x128xbf16, #tpu.memory_space<vmem>>, vector<8x4xbf16>,
    %c0_379 = arith.constant 0 : index
    %c3_380 = arith.constant 3 : index
    %c0_381 = arith.constant 0 : index
    %c0_382 = arith.constant 0 : index
    %200 = vector.load %arg1[%c0_379, %c3_380, %c0_381, %c0_382] : memref<4x9x9x4xbf16, #tpu.memory_space<vmem>>, vector<1x1x8x4xbf16>
    %201 = vector.shape_cast %200 : vector<1x1x8x4xbf16> to vector<8x4xbf16>
    %c16_383 = arith.constant 16 : index
    %c32_384 = arith.constant 32 : index
    %202 = vector.load %arg5[%c16_383, %c32_384] : memref<64x128xbf16, #tpu.memory_space<vmem>>, vector<8x4xbf16>
    tpu.vector_store %arg5[%c16_383, %c32_384], %201 {strides = array<i32>} : memref<64x128xbf16, #tpu.memory_space<vmem>>, vector<8x4xbf16>,
    %c0_385 = arith.constant 0 : index
    %c4_386 = arith.constant 4 : index
    %c0_387 = arith.constant 0 : index
    %c0_388 = arith.constant 0 : index
    %203 = vector.load %arg1[%c0_385, %c4_386, %c0_387, %c0_388] : memref<4x9x9x4xbf16, #tpu.memory_space<vmem>>, vector<1x1x8x4xbf16>
    %204 = vector.shape_cast %203 : vector<1x1x8x4xbf16> to vector<8x4xbf16>
    %c24_389 = arith.constant 24 : index
    %c32_390 = arith.constant 32 : index
    %205 = vector.load %arg5[%c24_389, %c32_390] : memref<64x128xbf16, #tpu.memory_space<vmem>>, vector<8x4xbf16>
    tpu.vector_store %arg5[%c24_389, %c32_390], %204 {strides = array<i32>} : memref<64x128xbf16, #tpu.memory_space<vmem>>, vector<8x4xbf16>,
    %c0_391 = arith.constant 0 : index
    %c5_392 = arith.constant 5 : index
    %c0_393 = arith.constant 0 : index
    %c0_394 = arith.constant 0 : index
    %206 = vector.load %arg1[%c0_391, %c5_392, %c0_393, %c0_394] : memref<4x9x9x4xbf16, #tpu.memory_space<vmem>>, vector<1x1x8x4xbf16>
    %207 = vector.shape_cast %206 : vector<1x1x8x4xbf16> to vector<8x4xbf16>
    %c32_395 = arith.constant 32 : index
    %c32_396 = arith.constant 32 : index
    %208 = vector.load %arg5[%c32_395, %c32_396] : memref<64x128xbf16, #tpu.memory_space<vmem>>, vector<8x4xbf16>
    tpu.vector_store %arg5[%c32_395, %c32_396], %207 {strides = array<i32>} : memref<64x128xbf16, #tpu.memory_space<vmem>>, vector<8x4xbf16>,
    %c0_397 = arith.constant 0 : index
    %c6_398 = arith.constant 6 : index
    %c0_399 = arith.constant 0 : index
    %c0_400 = arith.constant 0 : index
    %209 = vector.load %arg1[%c0_397, %c6_398, %c0_399, %c0_400] : memref<4x9x9x4xbf16, #tpu.memory_space<vmem>>, vector<1x1x8x4xbf16>
    %210 = vector.shape_cast %209 : vector<1x1x8x4xbf16> to vector<8x4xbf16>
    %c40_401 = arith.constant 40 : index
    %c32_402 = arith.constant 32 : index
    %211 = vector.load %arg5[%c40_401, %c32_402] : memref<64x128xbf16, #tpu.memory_space<vmem>>, vector<8x4xbf16>
    tpu.vector_store %arg5[%c40_401, %c32_402], %210 {strides = array<i32>} : memref<64x128xbf16, #tpu.memory_space<vmem>>, vector<8x4xbf16>,
    %c0_403 = arith.constant 0 : index
    %c7_404 = arith.constant 7 : index
    %c0_405 = arith.constant 0 : index
    %c0_406 = arith.constant 0 : index
    %212 = vector.load %arg1[%c0_403, %c7_404, %c0_405, %c0_406] : memref<4x9x9x4xbf16, #tpu.memory_space<vmem>>, vector<1x1x8x4xbf16>
    %213 = vector.shape_cast %212 : vector<1x1x8x4xbf16> to vector<8x4xbf16>
    %c48_407 = arith.constant 48 : index
    %c32_408 = arith.constant 32 : index
    %214 = vector.load %arg5[%c48_407, %c32_408] : memref<64x128xbf16, #tpu.memory_space<vmem>>, vector<8x4xbf16>
    tpu.vector_store %arg5[%c48_407, %c32_408], %213 {strides = array<i32>} : memref<64x128xbf16, #tpu.memory_space<vmem>>, vector<8x4xbf16>,
    %c0_409 = arith.constant 0 : index
    %c8_410 = arith.constant 8 : index
    %c0_411 = arith.constant 0 : index
    %c0_412 = arith.constant 0 : index
    %215 = vector.load %arg1[%c0_409, %c8_410, %c0_411, %c0_412] : memref<4x9x9x4xbf16, #tpu.memory_space<vmem>>, vector<1x1x8x4xbf16>
    %216 = vector.shape_cast %215 : vector<1x1x8x4xbf16> to vector<8x4xbf16>
    %c56_413 = arith.constant 56 : index
    %c32_414 = arith.constant 32 : index
    %217 = vector.load %arg5[%c56_413, %c32_414] : memref<64x128xbf16, #tpu.memory_space<vmem>>, vector<8x4xbf16>
    tpu.vector_store %arg5[%c56_413, %c32_414], %216 {strides = array<i32>} : memref<64x128xbf16, #tpu.memory_space<vmem>>, vector<8x4xbf16>,
    %c1_415 = arith.constant 1 : index
    %c1_416 = arith.constant 1 : index
    %c0_417 = arith.constant 0 : index
    %c0_418 = arith.constant 0 : index
    %218 = vector.load %arg1[%c1_415, %c1_416, %c0_417, %c0_418] : memref<4x9x9x4xbf16, #tpu.memory_space<vmem>>, vector<1x1x8x4xbf16>
    %219 = vector.shape_cast %218 : vector<1x1x8x4xbf16> to vector<8x4xbf16>
    %c0_419 = arith.constant 0 : index
    %c36 = arith.constant 36 : index
    %220 = vector.load %arg5[%c0_419, %c36] : memref<64x128xbf16, #tpu.memory_space<vmem>>, vector<8x4xbf16>
    tpu.vector_store %arg5[%c0_419, %c36], %219 {strides = array<i32>} : memref<64x128xbf16, #tpu.memory_space<vmem>>, vector<8x4xbf16>,
    %c1_420 = arith.constant 1 : index
    %c2_421 = arith.constant 2 : index
    %c0_422 = arith.constant 0 : index
    %c0_423 = arith.constant 0 : index
    %221 = vector.load %arg1[%c1_420, %c2_421, %c0_422, %c0_423] : memref<4x9x9x4xbf16, #tpu.memory_space<vmem>>, vector<1x1x8x4xbf16>
    %222 = vector.shape_cast %221 : vector<1x1x8x4xbf16> to vector<8x4xbf16>
    %c8_424 = arith.constant 8 : index
    %c36_425 = arith.constant 36 : index
    %223 = vector.load %arg5[%c8_424, %c36_425] : memref<64x128xbf16, #tpu.memory_space<vmem>>, vector<8x4xbf16>
    tpu.vector_store %arg5[%c8_424, %c36_425], %222 {strides = array<i32>} : memref<64x128xbf16, #tpu.memory_space<vmem>>, vector<8x4xbf16>,
    %c1_426 = arith.constant 1 : index
    %c3_427 = arith.constant 3 : index
    %c0_428 = arith.constant 0 : index
    %c0_429 = arith.constant 0 : index
    %224 = vector.load %arg1[%c1_426, %c3_427, %c0_428, %c0_429] : memref<4x9x9x4xbf16, #tpu.memory_space<vmem>>, vector<1x1x8x4xbf16>
    %225 = vector.shape_cast %224 : vector<1x1x8x4xbf16> to vector<8x4xbf16>
    %c16_430 = arith.constant 16 : index
    %c36_431 = arith.constant 36 : index
    %226 = vector.load %arg5[%c16_430, %c36_431] : memref<64x128xbf16, #tpu.memory_space<vmem>>, vector<8x4xbf16>
    tpu.vector_store %arg5[%c16_430, %c36_431], %225 {strides = array<i32>} : memref<64x128xbf16, #tpu.memory_space<vmem>>, vector<8x4xbf16>,
    %c1_432 = arith.constant 1 : index
    %c4_433 = arith.constant 4 : index
    %c0_434 = arith.constant 0 : index
    %c0_435 = arith.constant 0 : index
    %227 = vector.load %arg1[%c1_432, %c4_433, %c0_434, %c0_435] : memref<4x9x9x4xbf16, #tpu.memory_space<vmem>>, vector<1x1x8x4xbf16>
    %228 = vector.shape_cast %227 : vector<1x1x8x4xbf16> to vector<8x4xbf16>
    %c24_436 = arith.constant 24 : index
    %c36_437 = arith.constant 36 : index
    %229 = vector.load %arg5[%c24_436, %c36_437] : memref<64x128xbf16, #tpu.memory_space<vmem>>, vector<8x4xbf16>
    tpu.vector_store %arg5[%c24_436, %c36_437], %228 {strides = array<i32>} : memref<64x128xbf16, #tpu.memory_space<vmem>>, vector<8x4xbf16>,
    %c1_438 = arith.constant 1 : index
    %c5_439 = arith.constant 5 : index
    %c0_440 = arith.constant 0 : index
    %c0_441 = arith.constant 0 : index
    %230 = vector.load %arg1[%c1_438, %c5_439, %c0_440, %c0_441] : memref<4x9x9x4xbf16, #tpu.memory_space<vmem>>, vector<1x1x8x4xbf16>
    %231 = vector.shape_cast %230 : vector<1x1x8x4xbf16> to vector<8x4xbf16>
    %c32_442 = arith.constant 32 : index
    %c36_443 = arith.constant 36 : index
    %232 = vector.load %arg5[%c32_442, %c36_443] : memref<64x128xbf16, #tpu.memory_space<vmem>>, vector<8x4xbf16>
    tpu.vector_store %arg5[%c32_442, %c36_443], %231 {strides = array<i32>} : memref<64x128xbf16, #tpu.memory_space<vmem>>, vector<8x4xbf16>,
    %c1_444 = arith.constant 1 : index
    %c6_445 = arith.constant 6 : index
    %c0_446 = arith.constant 0 : index
    %c0_447 = arith.constant 0 : index
    %233 = vector.load %arg1[%c1_444, %c6_445, %c0_446, %c0_447] : memref<4x9x9x4xbf16, #tpu.memory_space<vmem>>, vector<1x1x8x4xbf16>
    %234 = vector.shape_cast %233 : vector<1x1x8x4xbf16> to vector<8x4xbf16>
    %c40_448 = arith.constant 40 : index
    %c36_449 = arith.constant 36 : index
    %235 = vector.load %arg5[%c40_448, %c36_449] : memref<64x128xbf16, #tpu.memory_space<vmem>>, vector<8x4xbf16>
    tpu.vector_store %arg5[%c40_448, %c36_449], %234 {strides = array<i32>} : memref<64x128xbf16, #tpu.memory_space<vmem>>, vector<8x4xbf16>,
    %c1_450 = arith.constant 1 : index
    %c7_451 = arith.constant 7 : index
    %c0_452 = arith.constant 0 : index
    %c0_453 = arith.constant 0 : index
    %236 = vector.load %arg1[%c1_450, %c7_451, %c0_452, %c0_453] : memref<4x9x9x4xbf16, #tpu.memory_space<vmem>>, vector<1x1x8x4xbf16>
    %237 = vector.shape_cast %236 : vector<1x1x8x4xbf16> to vector<8x4xbf16>
    %c48_454 = arith.constant 48 : index
    %c36_455 = arith.constant 36 : index
    %238 = vector.load %arg5[%c48_454, %c36_455] : memref<64x128xbf16, #tpu.memory_space<vmem>>, vector<8x4xbf16>
    tpu.vector_store %arg5[%c48_454, %c36_455], %237 {strides = array<i32>} : memref<64x128xbf16, #tpu.memory_space<vmem>>, vector<8x4xbf16>,
    %c1_456 = arith.constant 1 : index
    %c8_457 = arith.constant 8 : index
    %c0_458 = arith.constant 0 : index
    %c0_459 = arith.constant 0 : index
    %239 = vector.load %arg1[%c1_456, %c8_457, %c0_458, %c0_459] : memref<4x9x9x4xbf16, #tpu.memory_space<vmem>>, vector<1x1x8x4xbf16>
    %240 = vector.shape_cast %239 : vector<1x1x8x4xbf16> to vector<8x4xbf16>
    %c56_460 = arith.constant 56 : index
    %c36_461 = arith.constant 36 : index
    %241 = vector.load %arg5[%c56_460, %c36_461] : memref<64x128xbf16, #tpu.memory_space<vmem>>, vector<8x4xbf16>
    tpu.vector_store %arg5[%c56_460, %c36_461], %240 {strides = array<i32>} : memref<64x128xbf16, #tpu.memory_space<vmem>>, vector<8x4xbf16>,
    %c0_462 = arith.constant 0 : index
    %c1_463 = arith.constant 1 : index
    %c1_464 = arith.constant 1 : index
    %c0_465 = arith.constant 0 : index
    %242 = vector.load %arg1[%c0_462, %c1_463, %c1_464, %c0_465] : memref<4x9x9x4xbf16, #tpu.memory_space<vmem>>, vector<1x1x8x4xbf16>
    %243 = vector.shape_cast %242 : vector<1x1x8x4xbf16> to vector<8x4xbf16>
    %c0_466 = arith.constant 0 : index
    %c40_467 = arith.constant 40 : index
    %244 = vector.load %arg5[%c0_466, %c40_467] : memref<64x128xbf16, #tpu.memory_space<vmem>>, vector<8x4xbf16>
    tpu.vector_store %arg5[%c0_466, %c40_467], %243 {strides = array<i32>} : memref<64x128xbf16, #tpu.memory_space<vmem>>, vector<8x4xbf16>,
    %c0_468 = arith.constant 0 : index
    %c2_469 = arith.constant 2 : index
    %c1_470 = arith.constant 1 : index
    %c0_471 = arith.constant 0 : index
    %245 = vector.load %arg1[%c0_468, %c2_469, %c1_470, %c0_471] : memref<4x9x9x4xbf16, #tpu.memory_space<vmem>>, vector<1x1x8x4xbf16>
    %246 = vector.shape_cast %245 : vector<1x1x8x4xbf16> to vector<8x4xbf16>
    %c8_472 = arith.constant 8 : index
    %c40_473 = arith.constant 40 : index
    %247 = vector.load %arg5[%c8_472, %c40_473] : memref<64x128xbf16, #tpu.memory_space<vmem>>, vector<8x4xbf16>
    tpu.vector_store %arg5[%c8_472, %c40_473], %246 {strides = array<i32>} : memref<64x128xbf16, #tpu.memory_space<vmem>>, vector<8x4xbf16>,
    %c0_474 = arith.constant 0 : index
    %c3_475 = arith.constant 3 : index
    %c1_476 = arith.constant 1 : index
    %c0_477 = arith.constant 0 : index
    %248 = vector.load %arg1[%c0_474, %c3_475, %c1_476, %c0_477] : memref<4x9x9x4xbf16, #tpu.memory_space<vmem>>, vector<1x1x8x4xbf16>
    %249 = vector.shape_cast %248 : vector<1x1x8x4xbf16> to vector<8x4xbf16>
    %c16_478 = arith.constant 16 : index
    %c40_479 = arith.constant 40 : index
    %250 = vector.load %arg5[%c16_478, %c40_479] : memref<64x128xbf16, #tpu.memory_space<vmem>>, vector<8x4xbf16>
    tpu.vector_store %arg5[%c16_478, %c40_479], %249 {strides = array<i32>} : memref<64x128xbf16, #tpu.memory_space<vmem>>, vector<8x4xbf16>,
    %c0_480 = arith.constant 0 : index
    %c4_481 = arith.constant 4 : index
    %c1_482 = arith.constant 1 : index
    %c0_483 = arith.constant 0 : index
    %251 = vector.load %arg1[%c0_480, %c4_481, %c1_482, %c0_483] : memref<4x9x9x4xbf16, #tpu.memory_space<vmem>>, vector<1x1x8x4xbf16>
    %252 = vector.shape_cast %251 : vector<1x1x8x4xbf16> to vector<8x4xbf16>
    %c24_484 = arith.constant 24 : index
    %c40_485 = arith.constant 40 : index
    %253 = vector.load %arg5[%c24_484, %c40_485] : memref<64x128xbf16, #tpu.memory_space<vmem>>, vector<8x4xbf16>
    tpu.vector_store %arg5[%c24_484, %c40_485], %252 {strides = array<i32>} : memref<64x128xbf16, #tpu.memory_space<vmem>>, vector<8x4xbf16>,
    %c0_486 = arith.constant 0 : index
    %c5_487 = arith.constant 5 : index
    %c1_488 = arith.constant 1 : index
    %c0_489 = arith.constant 0 : index
    %254 = vector.load %arg1[%c0_486, %c5_487, %c1_488, %c0_489] : memref<4x9x9x4xbf16, #tpu.memory_space<vmem>>, vector<1x1x8x4xbf16>
    %255 = vector.shape_cast %254 : vector<1x1x8x4xbf16> to vector<8x4xbf16>
    %c32_490 = arith.constant 32 : index
    %c40_491 = arith.constant 40 : index
    %256 = vector.load %arg5[%c32_490, %c40_491] : memref<64x128xbf16, #tpu.memory_space<vmem>>, vector<8x4xbf16>
    tpu.vector_store %arg5[%c32_490, %c40_491], %255 {strides = array<i32>} : memref<64x128xbf16, #tpu.memory_space<vmem>>, vector<8x4xbf16>,
    %c0_492 = arith.constant 0 : index
    %c6_493 = arith.constant 6 : index
    %c1_494 = arith.constant 1 : index
    %c0_495 = arith.constant 0 : index
    %257 = vector.load %arg1[%c0_492, %c6_493, %c1_494, %c0_495] : memref<4x9x9x4xbf16, #tpu.memory_space<vmem>>, vector<1x1x8x4xbf16>
    %258 = vector.shape_cast %257 : vector<1x1x8x4xbf16> to vector<8x4xbf16>
    %c40_496 = arith.constant 40 : index
    %c40_497 = arith.constant 40 : index
    %259 = vector.load %arg5[%c40_496, %c40_497] : memref<64x128xbf16, #tpu.memory_space<vmem>>, vector<8x4xbf16>
    tpu.vector_store %arg5[%c40_496, %c40_497], %258 {strides = array<i32>} : memref<64x128xbf16, #tpu.memory_space<vmem>>, vector<8x4xbf16>,
    %c0_498 = arith.constant 0 : index
    %c7_499 = arith.constant 7 : index
    %c1_500 = arith.constant 1 : index
    %c0_501 = arith.constant 0 : index
    %260 = vector.load %arg1[%c0_498, %c7_499, %c1_500, %c0_501] : memref<4x9x9x4xbf16, #tpu.memory_space<vmem>>, vector<1x1x8x4xbf16>
    %261 = vector.shape_cast %260 : vector<1x1x8x4xbf16> to vector<8x4xbf16>
    %c48_502 = arith.constant 48 : index
    %c40_503 = arith.constant 40 : index
    %262 = vector.load %arg5[%c48_502, %c40_503] : memref<64x128xbf16, #tpu.memory_space<vmem>>, vector<8x4xbf16>
    tpu.vector_store %arg5[%c48_502, %c40_503], %261 {strides = array<i32>} : memref<64x128xbf16, #tpu.memory_space<vmem>>, vector<8x4xbf16>,
    %c0_504 = arith.constant 0 : index
    %c8_505 = arith.constant 8 : index
    %c1_506 = arith.constant 1 : index
    %c0_507 = arith.constant 0 : index
    %263 = vector.load %arg1[%c0_504, %c8_505, %c1_506, %c0_507] : memref<4x9x9x4xbf16, #tpu.memory_space<vmem>>, vector<1x1x8x4xbf16>
    %264 = vector.shape_cast %263 : vector<1x1x8x4xbf16> to vector<8x4xbf16>
    %c56_508 = arith.constant 56 : index
    %c40_509 = arith.constant 40 : index
    %265 = vector.load %arg5[%c56_508, %c40_509] : memref<64x128xbf16, #tpu.memory_space<vmem>>, vector<8x4xbf16>
    tpu.vector_store %arg5[%c56_508, %c40_509], %264 {strides = array<i32>} : memref<64x128xbf16, #tpu.memory_space<vmem>>, vector<8x4xbf16>,
    %c1_510 = arith.constant 1 : index
    %c1_511 = arith.constant 1 : index
    %c1_512 = arith.constant 1 : index
    %c0_513 = arith.constant 0 : index
    %266 = vector.load %arg1[%c1_510, %c1_511, %c1_512, %c0_513] : memref<4x9x9x4xbf16, #tpu.memory_space<vmem>>, vector<1x1x8x4xbf16>
    %267 = vector.shape_cast %266 : vector<1x1x8x4xbf16> to vector<8x4xbf16>
    %c0_514 = arith.constant 0 : index
    %c44 = arith.constant 44 : index
    %268 = vector.load %arg5[%c0_514, %c44] : memref<64x128xbf16, #tpu.memory_space<vmem>>, vector<8x4xbf16>
    tpu.vector_store %arg5[%c0_514, %c44], %267 {strides = array<i32>} : memref<64x128xbf16, #tpu.memory_space<vmem>>, vector<8x4xbf16>,
    %c1_515 = arith.constant 1 : index
    %c2_516 = arith.constant 2 : index
    %c1_517 = arith.constant 1 : index
    %c0_518 = arith.constant 0 : index
    %269 = vector.load %arg1[%c1_515, %c2_516, %c1_517, %c0_518] : memref<4x9x9x4xbf16, #tpu.memory_space<vmem>>, vector<1x1x8x4xbf16>
    %270 = vector.shape_cast %269 : vector<1x1x8x4xbf16> to vector<8x4xbf16>
    %c8_519 = arith.constant 8 : index
    %c44_520 = arith.constant 44 : index
    %271 = vector.load %arg5[%c8_519, %c44_520] : memref<64x128xbf16, #tpu.memory_space<vmem>>, vector<8x4xbf16>
    tpu.vector_store %arg5[%c8_519, %c44_520], %270 {strides = array<i32>} : memref<64x128xbf16, #tpu.memory_space<vmem>>, vector<8x4xbf16>,
    %c1_521 = arith.constant 1 : index
    %c3_522 = arith.constant 3 : index
    %c1_523 = arith.constant 1 : index
    %c0_524 = arith.constant 0 : index
    %272 = vector.load %arg1[%c1_521, %c3_522, %c1_523, %c0_524] : memref<4x9x9x4xbf16, #tpu.memory_space<vmem>>, vector<1x1x8x4xbf16>
    %273 = vector.shape_cast %272 : vector<1x1x8x4xbf16> to vector<8x4xbf16>
    %c16_525 = arith.constant 16 : index
    %c44_526 = arith.constant 44 : index
    %274 = vector.load %arg5[%c16_525, %c44_526] : memref<64x128xbf16, #tpu.memory_space<vmem>>, vector<8x4xbf16>
    tpu.vector_store %arg5[%c16_525, %c44_526], %273 {strides = array<i32>} : memref<64x128xbf16, #tpu.memory_space<vmem>>, vector<8x4xbf16>,
    %c1_527 = arith.constant 1 : index
    %c4_528 = arith.constant 4 : index
    %c1_529 = arith.constant 1 : index
    %c0_530 = arith.constant 0 : index
    %275 = vector.load %arg1[%c1_527, %c4_528, %c1_529, %c0_530] : memref<4x9x9x4xbf16, #tpu.memory_space<vmem>>, vector<1x1x8x4xbf16>
    %276 = vector.shape_cast %275 : vector<1x1x8x4xbf16> to vector<8x4xbf16>
    %c24_531 = arith.constant 24 : index
    %c44_532 = arith.constant 44 : index
    %277 = vector.load %arg5[%c24_531, %c44_532] : memref<64x128xbf16, #tpu.memory_space<vmem>>, vector<8x4xbf16>
    tpu.vector_store %arg5[%c24_531, %c44_532], %276 {strides = array<i32>} : memref<64x128xbf16, #tpu.memory_space<vmem>>, vector<8x4xbf16>,
    %c1_533 = arith.constant 1 : index
    %c5_534 = arith.constant 5 : index
    %c1_535 = arith.constant 1 : index
    %c0_536 = arith.constant 0 : index
    %278 = vector.load %arg1[%c1_533, %c5_534, %c1_535, %c0_536] : memref<4x9x9x4xbf16, #tpu.memory_space<vmem>>, vector<1x1x8x4xbf16>
    %279 = vector.shape_cast %278 : vector<1x1x8x4xbf16> to vector<8x4xbf16>
    %c32_537 = arith.constant 32 : index
    %c44_538 = arith.constant 44 : index
    %280 = vector.load %arg5[%c32_537, %c44_538] : memref<64x128xbf16, #tpu.memory_space<vmem>>, vector<8x4xbf16>
    tpu.vector_store %arg5[%c32_537, %c44_538], %279 {strides = array<i32>} : memref<64x128xbf16, #tpu.memory_space<vmem>>, vector<8x4xbf16>,
    %c1_539 = arith.constant 1 : index
    %c6_540 = arith.constant 6 : index
    %c1_541 = arith.constant 1 : index
    %c0_542 = arith.constant 0 : index
    %281 = vector.load %arg1[%c1_539, %c6_540, %c1_541, %c0_542] : memref<4x9x9x4xbf16, #tpu.memory_space<vmem>>, vector<1x1x8x4xbf16>
    %282 = vector.shape_cast %281 : vector<1x1x8x4xbf16> to vector<8x4xbf16>
    %c40_543 = arith.constant 40 : index
    %c44_544 = arith.constant 44 : index
    %283 = vector.load %arg5[%c40_543, %c44_544] : memref<64x128xbf16, #tpu.memory_space<vmem>>, vector<8x4xbf16>
    tpu.vector_store %arg5[%c40_543, %c44_544], %282 {strides = array<i32>} : memref<64x128xbf16, #tpu.memory_space<vmem>>, vector<8x4xbf16>,
    %c1_545 = arith.constant 1 : index
    %c7_546 = arith.constant 7 : index
    %c1_547 = arith.constant 1 : index
    %c0_548 = arith.constant 0 : index
    %284 = vector.load %arg1[%c1_545, %c7_546, %c1_547, %c0_548] : memref<4x9x9x4xbf16, #tpu.memory_space<vmem>>, vector<1x1x8x4xbf16>
    %285 = vector.shape_cast %284 : vector<1x1x8x4xbf16> to vector<8x4xbf16>
    %c48_549 = arith.constant 48 : index
    %c44_550 = arith.constant 44 : index
    %286 = vector.load %arg5[%c48_549, %c44_550] : memref<64x128xbf16, #tpu.memory_space<vmem>>, vector<8x4xbf16>
    tpu.vector_store %arg5[%c48_549, %c44_550], %285 {strides = array<i32>} : memref<64x128xbf16, #tpu.memory_space<vmem>>, vector<8x4xbf16>,
    %c1_551 = arith.constant 1 : index
    %c8_552 = arith.constant 8 : index
    %c1_553 = arith.constant 1 : index
    %c0_554 = arith.constant 0 : index
    %287 = vector.load %arg1[%c1_551, %c8_552, %c1_553, %c0_554] : memref<4x9x9x4xbf16, #tpu.memory_space<vmem>>, vector<1x1x8x4xbf16>
    %288 = vector.shape_cast %287 : vector<1x1x8x4xbf16> to vector<8x4xbf16>
    %c56_555 = arith.constant 56 : index
    %c44_556 = arith.constant 44 : index
    %289 = vector.load %arg5[%c56_555, %c44_556] : memref<64x128xbf16, #tpu.memory_space<vmem>>, vector<8x4xbf16>
    tpu.vector_store %arg5[%c56_555, %c44_556], %288 {strides = array<i32>} : memref<64x128xbf16, #tpu.memory_space<vmem>>, vector<8x4xbf16>,
    %c2_557 = arith.constant 2 : index
    %c1_558 = arith.constant 1 : index
    %c0_559 = arith.constant 0 : index
    %c0_560 = arith.constant 0 : index
    %290 = vector.load %arg1[%c2_557, %c1_558, %c0_559, %c0_560] : memref<4x9x9x4xbf16, #tpu.memory_space<vmem>>, vector<1x1x8x4xbf16>
    %291 = vector.shape_cast %290 : vector<1x1x8x4xbf16> to vector<8x4xbf16>
    %c0_561 = arith.constant 0 : index
    %c48_562 = arith.constant 48 : index
    %292 = vector.load %arg5[%c0_561, %c48_562] : memref<64x128xbf16, #tpu.memory_space<vmem>>, vector<8x4xbf16>
    tpu.vector_store %arg5[%c0_561, %c48_562], %291 {strides = array<i32>} : memref<64x128xbf16, #tpu.memory_space<vmem>>, vector<8x4xbf16>,
    %c2_563 = arith.constant 2 : index
    %c2_564 = arith.constant 2 : index
    %c0_565 = arith.constant 0 : index
    %c0_566 = arith.constant 0 : index
    %293 = vector.load %arg1[%c2_563, %c2_564, %c0_565, %c0_566] : memref<4x9x9x4xbf16, #tpu.memory_space<vmem>>, vector<1x1x8x4xbf16>
    %294 = vector.shape_cast %293 : vector<1x1x8x4xbf16> to vector<8x4xbf16>
    %c8_567 = arith.constant 8 : index
    %c48_568 = arith.constant 48 : index
    %295 = vector.load %arg5[%c8_567, %c48_568] : memref<64x128xbf16, #tpu.memory_space<vmem>>, vector<8x4xbf16>
    tpu.vector_store %arg5[%c8_567, %c48_568], %294 {strides = array<i32>} : memref<64x128xbf16, #tpu.memory_space<vmem>>, vector<8x4xbf16>,
    %c2_569 = arith.constant 2 : index
    %c3_570 = arith.constant 3 : index
    %c0_571 = arith.constant 0 : index
    %c0_572 = arith.constant 0 : index
    %296 = vector.load %arg1[%c2_569, %c3_570, %c0_571, %c0_572] : memref<4x9x9x4xbf16, #tpu.memory_space<vmem>>, vector<1x1x8x4xbf16>
    %297 = vector.shape_cast %296 : vector<1x1x8x4xbf16> to vector<8x4xbf16>
    %c16_573 = arith.constant 16 : index
    %c48_574 = arith.constant 48 : index
    %298 = vector.load %arg5[%c16_573, %c48_574] : memref<64x128xbf16, #tpu.memory_space<vmem>>, vector<8x4xbf16>
    tpu.vector_store %arg5[%c16_573, %c48_574], %297 {strides = array<i32>} : memref<64x128xbf16, #tpu.memory_space<vmem>>, vector<8x4xbf16>,
    %c2_575 = arith.constant 2 : index
    %c4_576 = arith.constant 4 : index
    %c0_577 = arith.constant 0 : index
    %c0_578 = arith.constant 0 : index
    %299 = vector.load %arg1[%c2_575, %c4_576, %c0_577, %c0_578] : memref<4x9x9x4xbf16, #tpu.memory_space<vmem>>, vector<1x1x8x4xbf16>
    %300 = vector.shape_cast %299 : vector<1x1x8x4xbf16> to vector<8x4xbf16>
    %c24_579 = arith.constant 24 : index
    %c48_580 = arith.constant 48 : index
    %301 = vector.load %arg5[%c24_579, %c48_580] : memref<64x128xbf16, #tpu.memory_space<vmem>>, vector<8x4xbf16>
    tpu.vector_store %arg5[%c24_579, %c48_580], %300 {strides = array<i32>} : memref<64x128xbf16, #tpu.memory_space<vmem>>, vector<8x4xbf16>,
    %c2_581 = arith.constant 2 : index
    %c5_582 = arith.constant 5 : index
    %c0_583 = arith.constant 0 : index
    %c0_584 = arith.constant 0 : index
    %302 = vector.load %arg1[%c2_581, %c5_582, %c0_583, %c0_584] : memref<4x9x9x4xbf16, #tpu.memory_space<vmem>>, vector<1x1x8x4xbf16>
    %303 = vector.shape_cast %302 : vector<1x1x8x4xbf16> to vector<8x4xbf16>
    %c32_585 = arith.constant 32 : index
    %c48_586 = arith.constant 48 : index
    %304 = vector.load %arg5[%c32_585, %c48_586] : memref<64x128xbf16, #tpu.memory_space<vmem>>, vector<8x4xbf16>
    tpu.vector_store %arg5[%c32_585, %c48_586], %303 {strides = array<i32>} : memref<64x128xbf16, #tpu.memory_space<vmem>>, vector<8x4xbf16>,
    %c2_587 = arith.constant 2 : index
    %c6_588 = arith.constant 6 : index
    %c0_589 = arith.constant 0 : index
    %c0_590 = arith.constant 0 : index
    %305 = vector.load %arg1[%c2_587, %c6_588, %c0_589, %c0_590] : memref<4x9x9x4xbf16, #tpu.memory_space<vmem>>, vector<1x1x8x4xbf16>
    %306 = vector.shape_cast %305 : vector<1x1x8x4xbf16> to vector<8x4xbf16>
    %c40_591 = arith.constant 40 : index
    %c48_592 = arith.constant 48 : index
    %307 = vector.load %arg5[%c40_591, %c48_592] : memref<64x128xbf16, #tpu.memory_space<vmem>>, vector<8x4xbf16>
    tpu.vector_store %arg5[%c40_591, %c48_592], %306 {strides = array<i32>} : memref<64x128xbf16, #tpu.memory_space<vmem>>, vector<8x4xbf16>,
    %c2_593 = arith.constant 2 : index
    %c7_594 = arith.constant 7 : index
    %c0_595 = arith.constant 0 : index
    %c0_596 = arith.constant 0 : index
    %308 = vector.load %arg1[%c2_593, %c7_594, %c0_595, %c0_596] : memref<4x9x9x4xbf16, #tpu.memory_space<vmem>>, vector<1x1x8x4xbf16>
    %309 = vector.shape_cast %308 : vector<1x1x8x4xbf16> to vector<8x4xbf16>
    %c48_597 = arith.constant 48 : index
    %c48_598 = arith.constant 48 : index
    %310 = vector.load %arg5[%c48_597, %c48_598] : memref<64x128xbf16, #tpu.memory_space<vmem>>, vector<8x4xbf16>
    tpu.vector_store %arg5[%c48_597, %c48_598], %309 {strides = array<i32>} : memref<64x128xbf16, #tpu.memory_space<vmem>>, vector<8x4xbf16>,
    %c2_599 = arith.constant 2 : index
    %c8_600 = arith.constant 8 : index
    %c0_601 = arith.constant 0 : index
    %c0_602 = arith.constant 0 : index
    %311 = vector.load %arg1[%c2_599, %c8_600, %c0_601, %c0_602] : memref<4x9x9x4xbf16, #tpu.memory_space<vmem>>, vector<1x1x8x4xbf16>
    %312 = vector.shape_cast %311 : vector<1x1x8x4xbf16> to vector<8x4xbf16>
    %c56_603 = arith.constant 56 : index
    %c48_604 = arith.constant 48 : index
    %313 = vector.load %arg5[%c56_603, %c48_604] : memref<64x128xbf16, #tpu.memory_space<vmem>>, vector<8x4xbf16>
    tpu.vector_store %arg5[%c56_603, %c48_604], %312 {strides = array<i32>} : memref<64x128xbf16, #tpu.memory_space<vmem>>, vector<8x4xbf16>,
    %c3_605 = arith.constant 3 : index
    %c1_606 = arith.constant 1 : index
    %c0_607 = arith.constant 0 : index
    %c0_608 = arith.constant 0 : index
    %314 = vector.load %arg1[%c3_605, %c1_606, %c0_607, %c0_608] : memref<4x9x9x4xbf16, #tpu.memory_space<vmem>>, vector<1x1x8x4xbf16>
    %315 = vector.shape_cast %314 : vector<1x1x8x4xbf16> to vector<8x4xbf16>
    %c0_609 = arith.constant 0 : index
    %c52 = arith.constant 52 : index
    %316 = vector.load %arg5[%c0_609, %c52] : memref<64x128xbf16, #tpu.memory_space<vmem>>, vector<8x4xbf16>
    tpu.vector_store %arg5[%c0_609, %c52], %315 {strides = array<i32>} : memref<64x128xbf16, #tpu.memory_space<vmem>>, vector<8x4xbf16>,
    %c3_610 = arith.constant 3 : index
    %c2_611 = arith.constant 2 : index
    %c0_612 = arith.constant 0 : index
    %c0_613 = arith.constant 0 : index
    %317 = vector.load %arg1[%c3_610, %c2_611, %c0_612, %c0_613] : memref<4x9x9x4xbf16, #tpu.memory_space<vmem>>, vector<1x1x8x4xbf16>
    %318 = vector.shape_cast %317 : vector<1x1x8x4xbf16> to vector<8x4xbf16>
    %c8_614 = arith.constant 8 : index
    %c52_615 = arith.constant 52 : index
    %319 = vector.load %arg5[%c8_614, %c52_615] : memref<64x128xbf16, #tpu.memory_space<vmem>>, vector<8x4xbf16>
    tpu.vector_store %arg5[%c8_614, %c52_615], %318 {strides = array<i32>} : memref<64x128xbf16, #tpu.memory_space<vmem>>, vector<8x4xbf16>,
    %c3_616 = arith.constant 3 : index
    %c3_617 = arith.constant 3 : index
    %c0_618 = arith.constant 0 : index
    %c0_619 = arith.constant 0 : index
    %320 = vector.load %arg1[%c3_616, %c3_617, %c0_618, %c0_619] : memref<4x9x9x4xbf16, #tpu.memory_space<vmem>>, vector<1x1x8x4xbf16>
    %321 = vector.shape_cast %320 : vector<1x1x8x4xbf16> to vector<8x4xbf16>
    %c16_620 = arith.constant 16 : index
    %c52_621 = arith.constant 52 : index
    %322 = vector.load %arg5[%c16_620, %c52_621] : memref<64x128xbf16, #tpu.memory_space<vmem>>, vector<8x4xbf16>
    tpu.vector_store %arg5[%c16_620, %c52_621], %321 {strides = array<i32>} : memref<64x128xbf16, #tpu.memory_space<vmem>>, vector<8x4xbf16>,
    %c3_622 = arith.constant 3 : index
    %c4_623 = arith.constant 4 : index
    %c0_624 = arith.constant 0 : index
    %c0_625 = arith.constant 0 : index
    %323 = vector.load %arg1[%c3_622, %c4_623, %c0_624, %c0_625] : memref<4x9x9x4xbf16, #tpu.memory_space<vmem>>, vector<1x1x8x4xbf16>
    %324 = vector.shape_cast %323 : vector<1x1x8x4xbf16> to vector<8x4xbf16>
    %c24_626 = arith.constant 24 : index
    %c52_627 = arith.constant 52 : index
    %325 = vector.load %arg5[%c24_626, %c52_627] : memref<64x128xbf16, #tpu.memory_space<vmem>>, vector<8x4xbf16>
    tpu.vector_store %arg5[%c24_626, %c52_627], %324 {strides = array<i32>} : memref<64x128xbf16, #tpu.memory_space<vmem>>, vector<8x4xbf16>,
    %c3_628 = arith.constant 3 : index
    %c5_629 = arith.constant 5 : index
    %c0_630 = arith.constant 0 : index
    %c0_631 = arith.constant 0 : index
    %326 = vector.load %arg1[%c3_628, %c5_629, %c0_630, %c0_631] : memref<4x9x9x4xbf16, #tpu.memory_space<vmem>>, vector<1x1x8x4xbf16>
    %327 = vector.shape_cast %326 : vector<1x1x8x4xbf16> to vector<8x4xbf16>
    %c32_632 = arith.constant 32 : index
    %c52_633 = arith.constant 52 : index
    %328 = vector.load %arg5[%c32_632, %c52_633] : memref<64x128xbf16, #tpu.memory_space<vmem>>, vector<8x4xbf16>
    tpu.vector_store %arg5[%c32_632, %c52_633], %327 {strides = array<i32>} : memref<64x128xbf16, #tpu.memory_space<vmem>>, vector<8x4xbf16>,
    %c3_634 = arith.constant 3 : index
    %c6_635 = arith.constant 6 : index
    %c0_636 = arith.constant 0 : index
    %c0_637 = arith.constant 0 : index
    %329 = vector.load %arg1[%c3_634, %c6_635, %c0_636, %c0_637] : memref<4x9x9x4xbf16, #tpu.memory_space<vmem>>, vector<1x1x8x4xbf16>
    %330 = vector.shape_cast %329 : vector<1x1x8x4xbf16> to vector<8x4xbf16>
    %c40_638 = arith.constant 40 : index
    %c52_639 = arith.constant 52 : index
    %331 = vector.load %arg5[%c40_638, %c52_639] : memref<64x128xbf16, #tpu.memory_space<vmem>>, vector<8x4xbf16>
    tpu.vector_store %arg5[%c40_638, %c52_639], %330 {strides = array<i32>} : memref<64x128xbf16, #tpu.memory_space<vmem>>, vector<8x4xbf16>,
    %c3_640 = arith.constant 3 : index
    %c7_641 = arith.constant 7 : index
    %c0_642 = arith.constant 0 : index
    %c0_643 = arith.constant 0 : index
    %332 = vector.load %arg1[%c3_640, %c7_641, %c0_642, %c0_643] : memref<4x9x9x4xbf16, #tpu.memory_space<vmem>>, vector<1x1x8x4xbf16>
    %333 = vector.shape_cast %332 : vector<1x1x8x4xbf16> to vector<8x4xbf16>
    %c48_644 = arith.constant 48 : index
    %c52_645 = arith.constant 52 : index
    %334 = vector.load %arg5[%c48_644, %c52_645] : memref<64x128xbf16, #tpu.memory_space<vmem>>, vector<8x4xbf16>
    tpu.vector_store %arg5[%c48_644, %c52_645], %333 {strides = array<i32>} : memref<64x128xbf16, #tpu.memory_space<vmem>>, vector<8x4xbf16>,
    %c3_646 = arith.constant 3 : index
    %c8_647 = arith.constant 8 : index
    %c0_648 = arith.constant 0 : index
    %c0_649 = arith.constant 0 : index
    %335 = vector.load %arg1[%c3_646, %c8_647, %c0_648, %c0_649] : memref<4x9x9x4xbf16, #tpu.memory_space<vmem>>, vector<1x1x8x4xbf16>
    %336 = vector.shape_cast %335 : vector<1x1x8x4xbf16> to vector<8x4xbf16>
    %c56_650 = arith.constant 56 : index
    %c52_651 = arith.constant 52 : index
    %337 = vector.load %arg5[%c56_650, %c52_651] : memref<64x128xbf16, #tpu.memory_space<vmem>>, vector<8x4xbf16>
    tpu.vector_store %arg5[%c56_650, %c52_651], %336 {strides = array<i32>} : memref<64x128xbf16, #tpu.memory_space<vmem>>, vector<8x4xbf16>,
    %c2_652 = arith.constant 2 : index
    %c1_653 = arith.constant 1 : index
    %c1_654 = arith.constant 1 : index
    %c0_655 = arith.constant 0 : index
    %338 = vector.load %arg1[%c2_652, %c1_653, %c1_654, %c0_655] : memref<4x9x9x4xbf16, #tpu.memory_space<vmem>>, vector<1x1x8x4xbf16>
    %339 = vector.shape_cast %338 : vector<1x1x8x4xbf16> to vector<8x4xbf16>
    %c0_656 = arith.constant 0 : index
    %c56_657 = arith.constant 56 : index
    %340 = vector.load %arg5[%c0_656, %c56_657] : memref<64x128xbf16, #tpu.memory_space<vmem>>, vector<8x4xbf16>
    tpu.vector_store %arg5[%c0_656, %c56_657], %339 {strides = array<i32>} : memref<64x128xbf16, #tpu.memory_space<vmem>>, vector<8x4xbf16>,
    %c2_658 = arith.constant 2 : index
    %c2_659 = arith.constant 2 : index
    %c1_660 = arith.constant 1 : index
    %c0_661 = arith.constant 0 : index
    %341 = vector.load %arg1[%c2_658, %c2_659, %c1_660, %c0_661] : memref<4x9x9x4xbf16, #tpu.memory_space<vmem>>, vector<1x1x8x4xbf16>
    %342 = vector.shape_cast %341 : vector<1x1x8x4xbf16> to vector<8x4xbf16>
    %c8_662 = arith.constant 8 : index
    %c56_663 = arith.constant 56 : index
    %343 = vector.load %arg5[%c8_662, %c56_663] : memref<64x128xbf16, #tpu.memory_space<vmem>>, vector<8x4xbf16>
    tpu.vector_store %arg5[%c8_662, %c56_663], %342 {strides = array<i32>} : memref<64x128xbf16, #tpu.memory_space<vmem>>, vector<8x4xbf16>,
    %c2_664 = arith.constant 2 : index
    %c3_665 = arith.constant 3 : index
    %c1_666 = arith.constant 1 : index
    %c0_667 = arith.constant 0 : index
    %344 = vector.load %arg1[%c2_664, %c3_665, %c1_666, %c0_667] : memref<4x9x9x4xbf16, #tpu.memory_space<vmem>>, vector<1x1x8x4xbf16>
    %345 = vector.shape_cast %344 : vector<1x1x8x4xbf16> to vector<8x4xbf16>
    %c16_668 = arith.constant 16 : index
    %c56_669 = arith.constant 56 : index
    %346 = vector.load %arg5[%c16_668, %c56_669] : memref<64x128xbf16, #tpu.memory_space<vmem>>, vector<8x4xbf16>
    tpu.vector_store %arg5[%c16_668, %c56_669], %345 {strides = array<i32>} : memref<64x128xbf16, #tpu.memory_space<vmem>>, vector<8x4xbf16>,
    %c2_670 = arith.constant 2 : index
    %c4_671 = arith.constant 4 : index
    %c1_672 = arith.constant 1 : index
    %c0_673 = arith.constant 0 : index
    %347 = vector.load %arg1[%c2_670, %c4_671, %c1_672, %c0_673] : memref<4x9x9x4xbf16, #tpu.memory_space<vmem>>, vector<1x1x8x4xbf16>
    %348 = vector.shape_cast %347 : vector<1x1x8x4xbf16> to vector<8x4xbf16>
    %c24_674 = arith.constant 24 : index
    %c56_675 = arith.constant 56 : index
    %349 = vector.load %arg5[%c24_674, %c56_675] : memref<64x128xbf16, #tpu.memory_space<vmem>>, vector<8x4xbf16>
    tpu.vector_store %arg5[%c24_674, %c56_675], %348 {strides = array<i32>} : memref<64x128xbf16, #tpu.memory_space<vmem>>, vector<8x4xbf16>,
    %c2_676 = arith.constant 2 : index
    %c5_677 = arith.constant 5 : index
    %c1_678 = arith.constant 1 : index
    %c0_679 = arith.constant 0 : index
    %350 = vector.load %arg1[%c2_676, %c5_677, %c1_678, %c0_679] : memref<4x9x9x4xbf16, #tpu.memory_space<vmem>>, vector<1x1x8x4xbf16>
    %351 = vector.shape_cast %350 : vector<1x1x8x4xbf16> to vector<8x4xbf16>
    %c32_680 = arith.constant 32 : index
    %c56_681 = arith.constant 56 : index
    %352 = vector.load %arg5[%c32_680, %c56_681] : memref<64x128xbf16, #tpu.memory_space<vmem>>, vector<8x4xbf16>
    tpu.vector_store %arg5[%c32_680, %c56_681], %351 {strides = array<i32>} : memref<64x128xbf16, #tpu.memory_space<vmem>>, vector<8x4xbf16>,
    %c2_682 = arith.constant 2 : index
    %c6_683 = arith.constant 6 : index
    %c1_684 = arith.constant 1 : index
    %c0_685 = arith.constant 0 : index
    %353 = vector.load %arg1[%c2_682, %c6_683, %c1_684, %c0_685] : memref<4x9x9x4xbf16, #tpu.memory_space<vmem>>, vector<1x1x8x4xbf16>
    %354 = vector.shape_cast %353 : vector<1x1x8x4xbf16> to vector<8x4xbf16>
    %c40_686 = arith.constant 40 : index
    %c56_687 = arith.constant 56 : index
    %355 = vector.load %arg5[%c40_686, %c56_687] : memref<64x128xbf16, #tpu.memory_space<vmem>>, vector<8x4xbf16>
    tpu.vector_store %arg5[%c40_686, %c56_687], %354 {strides = array<i32>} : memref<64x128xbf16, #tpu.memory_space<vmem>>, vector<8x4xbf16>,
    %c2_688 = arith.constant 2 : index
    %c7_689 = arith.constant 7 : index
    %c1_690 = arith.constant 1 : index
    %c0_691 = arith.constant 0 : index
    %356 = vector.load %arg1[%c2_688, %c7_689, %c1_690, %c0_691] : memref<4x9x9x4xbf16, #tpu.memory_space<vmem>>, vector<1x1x8x4xbf16>
    %357 = vector.shape_cast %356 : vector<1x1x8x4xbf16> to vector<8x4xbf16>
    %c48_692 = arith.constant 48 : index
    %c56_693 = arith.constant 56 : index
    %358 = vector.load %arg5[%c48_692, %c56_693] : memref<64x128xbf16, #tpu.memory_space<vmem>>, vector<8x4xbf16>
    tpu.vector_store %arg5[%c48_692, %c56_693], %357 {strides = array<i32>} : memref<64x128xbf16, #tpu.memory_space<vmem>>, vector<8x4xbf16>,
    %c2_694 = arith.constant 2 : index
    %c8_695 = arith.constant 8 : index
    %c1_696 = arith.constant 1 : index
    %c0_697 = arith.constant 0 : index
    %359 = vector.load %arg1[%c2_694, %c8_695, %c1_696, %c0_697] : memref<4x9x9x4xbf16, #tpu.memory_space<vmem>>, vector<1x1x8x4xbf16>
    %360 = vector.shape_cast %359 : vector<1x1x8x4xbf16> to vector<8x4xbf16>
    %c56_698 = arith.constant 56 : index
    %c56_699 = arith.constant 56 : index
    %361 = vector.load %arg5[%c56_698, %c56_699] : memref<64x128xbf16, #tpu.memory_space<vmem>>, vector<8x4xbf16>
    tpu.vector_store %arg5[%c56_698, %c56_699], %360 {strides = array<i32>} : memref<64x128xbf16, #tpu.memory_space<vmem>>, vector<8x4xbf16>,
    %c3_700 = arith.constant 3 : index
    %c1_701 = arith.constant 1 : index
    %c1_702 = arith.constant 1 : index
    %c0_703 = arith.constant 0 : index
    %362 = vector.load %arg1[%c3_700, %c1_701, %c1_702, %c0_703] : memref<4x9x9x4xbf16, #tpu.memory_space<vmem>>, vector<1x1x8x4xbf16>
    %363 = vector.shape_cast %362 : vector<1x1x8x4xbf16> to vector<8x4xbf16>
    %c0_704 = arith.constant 0 : index
    %c60 = arith.constant 60 : index
    %364 = vector.load %arg5[%c0_704, %c60] : memref<64x128xbf16, #tpu.memory_space<vmem>>, vector<8x4xbf16>
    tpu.vector_store %arg5[%c0_704, %c60], %363 {strides = array<i32>} : memref<64x128xbf16, #tpu.memory_space<vmem>>, vector<8x4xbf16>,
    %c3_705 = arith.constant 3 : index
    %c2_706 = arith.constant 2 : index
    %c1_707 = arith.constant 1 : index
    %c0_708 = arith.constant 0 : index
    %365 = vector.load %arg1[%c3_705, %c2_706, %c1_707, %c0_708] : memref<4x9x9x4xbf16, #tpu.memory_space<vmem>>, vector<1x1x8x4xbf16>
    %366 = vector.shape_cast %365 : vector<1x1x8x4xbf16> to vector<8x4xbf16>
    %c8_709 = arith.constant 8 : index
    %c60_710 = arith.constant 60 : index
    %367 = vector.load %arg5[%c8_709, %c60_710] : memref<64x128xbf16, #tpu.memory_space<vmem>>, vector<8x4xbf16>
    tpu.vector_store %arg5[%c8_709, %c60_710], %366 {strides = array<i32>} : memref<64x128xbf16, #tpu.memory_space<vmem>>, vector<8x4xbf16>,
    %c3_711 = arith.constant 3 : index
    %c3_712 = arith.constant 3 : index
    %c1_713 = arith.constant 1 : index
    %c0_714 = arith.constant 0 : index
    %368 = vector.load %arg1[%c3_711, %c3_712, %c1_713, %c0_714] : memref<4x9x9x4xbf16, #tpu.memory_space<vmem>>, vector<1x1x8x4xbf16>
    %369 = vector.shape_cast %368 : vector<1x1x8x4xbf16> to vector<8x4xbf16>
    %c16_715 = arith.constant 16 : index
    %c60_716 = arith.constant 60 : index
    %370 = vector.load %arg5[%c16_715, %c60_716] : memref<64x128xbf16, #tpu.memory_space<vmem>>, vector<8x4xbf16>
    tpu.vector_store %arg5[%c16_715, %c60_716], %369 {strides = array<i32>} : memref<64x128xbf16, #tpu.memory_space<vmem>>, vector<8x4xbf16>,
    %c3_717 = arith.constant 3 : index
    %c4_718 = arith.constant 4 : index
    %c1_719 = arith.constant 1 : index
    %c0_720 = arith.constant 0 : index
    %371 = vector.load %arg1[%c3_717, %c4_718, %c1_719, %c0_720] : memref<4x9x9x4xbf16, #tpu.memory_space<vmem>>, vector<1x1x8x4xbf16>
    %372 = vector.shape_cast %371 : vector<1x1x8x4xbf16> to vector<8x4xbf16>
    %c24_721 = arith.constant 24 : index
    %c60_722 = arith.constant 60 : index
    %373 = vector.load %arg5[%c24_721, %c60_722] : memref<64x128xbf16, #tpu.memory_space<vmem>>, vector<8x4xbf16>
    tpu.vector_store %arg5[%c24_721, %c60_722], %372 {strides = array<i32>} : memref<64x128xbf16, #tpu.memory_space<vmem>>, vector<8x4xbf16>,
    %c3_723 = arith.constant 3 : index
    %c5_724 = arith.constant 5 : index
    %c1_725 = arith.constant 1 : index
    %c0_726 = arith.constant 0 : index
    %374 = vector.load %arg1[%c3_723, %c5_724, %c1_725, %c0_726] : memref<4x9x9x4xbf16, #tpu.memory_space<vmem>>, vector<1x1x8x4xbf16>
    %375 = vector.shape_cast %374 : vector<1x1x8x4xbf16> to vector<8x4xbf16>
    %c32_727 = arith.constant 32 : index
    %c60_728 = arith.constant 60 : index
    %376 = vector.load %arg5[%c32_727, %c60_728] : memref<64x128xbf16, #tpu.memory_space<vmem>>, vector<8x4xbf16>
    tpu.vector_store %arg5[%c32_727, %c60_728], %375 {strides = array<i32>} : memref<64x128xbf16, #tpu.memory_space<vmem>>, vector<8x4xbf16>,
    %c3_729 = arith.constant 3 : index
    %c6_730 = arith.constant 6 : index
    %c1_731 = arith.constant 1 : index
    %c0_732 = arith.constant 0 : index
    %377 = vector.load %arg1[%c3_729, %c6_730, %c1_731, %c0_732] : memref<4x9x9x4xbf16, #tpu.memory_space<vmem>>, vector<1x1x8x4xbf16>
    %378 = vector.shape_cast %377 : vector<1x1x8x4xbf16> to vector<8x4xbf16>
    %c40_733 = arith.constant 40 : index
    %c60_734 = arith.constant 60 : index
    %379 = vector.load %arg5[%c40_733, %c60_734] : memref<64x128xbf16, #tpu.memory_space<vmem>>, vector<8x4xbf16>
    tpu.vector_store %arg5[%c40_733, %c60_734], %378 {strides = array<i32>} : memref<64x128xbf16, #tpu.memory_space<vmem>>, vector<8x4xbf16>,
    %c3_735 = arith.constant 3 : index
    %c7_736 = arith.constant 7 : index
    %c1_737 = arith.constant 1 : index
    %c0_738 = arith.constant 0 : index
    %380 = vector.load %arg1[%c3_735, %c7_736, %c1_737, %c0_738] : memref<4x9x9x4xbf16, #tpu.memory_space<vmem>>, vector<1x1x8x4xbf16>
    %381 = vector.shape_cast %380 : vector<1x1x8x4xbf16> to vector<8x4xbf16>
    %c48_739 = arith.constant 48 : index
    %c60_740 = arith.constant 60 : index
    %382 = vector.load %arg5[%c48_739, %c60_740] : memref<64x128xbf16, #tpu.memory_space<vmem>>, vector<8x4xbf16>
    tpu.vector_store %arg5[%c48_739, %c60_740], %381 {strides = array<i32>} : memref<64x128xbf16, #tpu.memory_space<vmem>>, vector<8x4xbf16>,
    %c3_741 = arith.constant 3 : index
    %c8_742 = arith.constant 8 : index
    %c1_743 = arith.constant 1 : index
    %c0_744 = arith.constant 0 : index
    %383 = vector.load %arg1[%c3_741, %c8_742, %c1_743, %c0_744] : memref<4x9x9x4xbf16, #tpu.memory_space<vmem>>, vector<1x1x8x4xbf16>
    %384 = vector.shape_cast %383 : vector<1x1x8x4xbf16> to vector<8x4xbf16>
    %c56_745 = arith.constant 56 : index
    %c60_746 = arith.constant 60 : index
    %385 = vector.load %arg5[%c56_745, %c60_746] : memref<64x128xbf16, #tpu.memory_space<vmem>>, vector<8x4xbf16>
    tpu.vector_store %arg5[%c56_745, %c60_746], %384 {strides = array<i32>} : memref<64x128xbf16, #tpu.memory_space<vmem>>, vector<8x4xbf16>,
    %c0_747 = arith.constant 0 : index
    %c0_748 = arith.constant 0 : index
    %386 = vector.load %arg5[%c0_747, %c0_748] : memref<64x128xbf16, #tpu.memory_space<vmem>>, vector<64x128xbf16>
    %c0_749 = arith.constant 0 : index
    %c0_750 = arith.constant 0 : index
    %387 = vector.load %arg2[%c0_749, %c0_750] : memref<128x128xbf16, #tpu.memory_space<vmem>>, vector<128x128xbf16>
    %cst_751 = arith.constant dense<0.000000e+00> : vector<64x128xf32>
    %388 = tpu.matmul %386, %387, %cst_751 {dimension_numbers = #tpu.dot_dimension_numbers<[1], [0], [0], [1], [0, 0, 1, 1], [], []>} : vector<64x128xbf16>, vector<128x128xbf16>, vector<64x128xf32> -> vector<64x128xf32>
    %c0_752 = arith.constant 0 : index
    %c0_753 = arith.constant 0 : index
    %389 = vector.load %arg3[%c0_752, %c0_753] : memref<3x128xf32, #tpu.memory_space<vmem>>, vector<3x128xf32>
    %390 = vector.extract_strided_slice %389 {offsets = [0, 0], sizes = [1, 128], strides = [1, 1]} : vector<3x128xf32> to vector<1x128xf32>
    %391 = vector.broadcast %390 : vector<1x128xf32> to vector<64x128xf32>
    %392 = arith.addf %388, %391 : vector<64x128xf32>
    %cst_754 = arith.constant 0.000000e+00 : f32
    %393 = vector.broadcast %cst_754 : f32 to vector<64x128xf32>
    %394 = arith.cmpf ogt, %392, %393 : vector<64x128xf32>
    %cst_755 = arith.constant 2.000000e-01 : f32
    %395 = vector.broadcast %cst_755 : f32 to vector<64x128xf32>
    %396 = arith.mulf %395, %392 : vector<64x128xf32>
    %397 = arith.select %394, %392, %396 : vector<64x128xi1>, vector<64x128xf32>
    %c0_756 = arith.constant 0 : index
    %c0_757 = arith.constant 0 : index
    %c0_758 = arith.constant 0 : index
    %398 = vector.load %arg4[%c0_756, %c0_757, %c0_758] : memref<1x64x128xf32, #tpu.memory_space<vmem>>, vector<1x64x128xf32>
    %399 = vector.shape_cast %398 : vector<1x64x128xf32> to vector<64x128xf32>
    %400 = vector.shape_cast %397 : vector<64x128xf32> to vector<1x64x128xf32>
    tpu.vector_store %arg4[%c0_756, %c0_757, %c0_758], %400 {strides = array<i32>} : memref<1x64x128xf32, #tpu.memory_space<vmem>>, vector<1x64x128xf32>,
    return
  }
  func.func @transform_0(%arg0: i32) -> (i32, i32, i32, i32) {
    %c0_i32 = arith.constant 0 : i32
    %c0_i32_0 = arith.constant 0 : i32
    %c0_i32_1 = arith.constant 0 : i32
    %c0_i32_2 = arith.constant 0 : i32
    return %arg0, %c0_i32, %c0_i32_0, %c0_i32_1 : i32, i32, i32, i32
  }
  func.func @transform_1(%arg0: i32) -> (i32, i32) {
    %c0_i32 = arith.constant 0 : i32
    %c0_i32_0 = arith.constant 0 : i32
    %c0_i32_1 = arith.constant 0 : i32
    return %c0_i32, %c0_i32_0 : i32, i32
  }
  func.func @transform_2(%arg0: i32) -> (i32, i32) {
    %c0_i32 = arith.constant 0 : i32
    %c0_i32_0 = arith.constant 0 : i32
    %c0_i32_1 = arith.constant 0 : i32
    return %c0_i32, %c0_i32_0 : i32, i32
  }
  func.func @transform_3(%arg0: i32) -> (i32, i32, i32) {
    %c0_i32 = arith.constant 0 : i32
    %c0_i32_0 = arith.constant 0 : i32
    %c0_i32_1 = arith.constant 0 : i32
    return %arg0, %c0_i32, %c0_i32_0 : i32, i32, i32
  }
}

</mosaic_0001>

<llo_original>
// kernel: tpu_custom_call.1
$region0: #{tpu_custom_call.1}
  #allocation0 [shape = 'u32[]', space=smem, size = 0x4, offset = 0x4, fixed_abs, tag = 'smem constant byte address 0x4 - core index']
  #allocation1 [shape = 'u32[144,128]{1,0:T(1,128)}', space=vmem, size = 0x12000, scoped, tag = 'internal scratch']
  #allocation2 [shape = 'bf16[64,128]{1,0:T(16,128)(2,1)}', space=vmem, size = 0x4000, scoped, tag = 'scratch operand']
  %s0 = inlined_call_operand.vmem [shape: bf16[8,9,9,4], index: 0, kind: input, shape index: {}]
  %s1 = inlined_call_operand.vmem [shape: bf16[128,128], index: 1, kind: input, shape index: {}]
  %s2 = inlined_call_operand.vmem [shape: f32[3,128], index: 2, kind: input, shape index: {}]
  %s3 = inlined_call_operand.hbm [shape: f32[2,64,128], index: 3, kind: output, shape index: {}]
  %s4 = sld [smem:[#allocation0]]
  $region45: #{tpu_custom_call.1} parent=0
    _
  %s6 = ssub.s32 1, %s4
  %s7 = scalar_select 0, %s6, %s4
  $region1: #{tpu_custom_call.1} parent=0
    #allocation3 [shape = 'u8[65536]{0}', space=vmem, size = 0x10000, scoped, tag = 'output window, operand 0']
    #allocation4 [shape = 's32[2]{0}', space=sflag, size = 0x8, scoped, tag = 'scoped memory for tpu_custom_call.1']
    %8 = vsyncpa [#allocation4], 0
    %s9 = scalar_lea.sflag [#allocation4], 1
    %10 = vsyncpa %s9, 0
    loop: start=0, step=1, limit=4
    $region2: #{tpu_custom_call.1} parent=1 // loop_pre_header
      _
    $region3: #{tpu_custom_call.1} parent=1 // loop_header
      %s12 = sphi 0, %s16
      %p13 = scmp.ge.s32.totalorder %s12, 4
      %s22 = sphi 0, %s24
      %s25 = sphi 0, %s22
      %s26 = sphi 0, %s25
      %s42 = sphi 0, %s26
      %s46 = sphi 0, %s46
      %s48 = sphi 0, %s46
      %s49 = sphi 0, %s48
      %s63 = sphi 0, %s49
      %s67 = sphi 0, %s67
      %s69 = sphi 0, %s67
      %s70 = sphi 0, %s69
      %s84 = sphi 0, %s70
      %s90 = sphi 0, %s92
      %s93 = sphi 0, %s90
      %s94 = sphi 0, %s93
      %s110 = sphi 0, %s94
    $region4: #{tpu_custom_call.1} parent=1 // loop_header_branch
      %15 = sbr.rel (%p13) target = $region8
    $region5: #{tpu_custom_call.1} parent=1 // loop_body
      %s17 = ssub.s32 %s12, 1
      %s18 = ssub.s32 %s12, 2
      %s19 = sadd.s32 %s12, 1
      %s20 = ssub.s32 %s12, %s19
      %p21 = scmp.eq.s32.totalorder %s20, 0
      %s23 = sadd.s32 %s22, 1
      %s24 = scalar_select %p21, %s22, %s23
      %p27 = pneg %p21
      %p28 = scmp.eq.s32.totalorder %s12, 1
      %p29 = por %p27, %p28
      %p30 = scmp.ne.s32.totalorder %s22, %s25
      %p31 = scmp.eq.s32.totalorder %s12, 0
      %p32 = por %p30, %p31
      %p33 = scmp.ne.s32.totalorder %s22, %s25
      %p34 = scmp.eq.s32.totalorder %s17, 1
      %p35 = por %p33, %p34
      %p36 = scmp.ne.s32.totalorder %s25, %s26
      %p37 = scmp.eq.s32.totalorder %s17, 0
      %p38 = por %p36, %p37
      %p39 = scmp.ne.s32.totalorder %s25, %s26
      %p40 = scmp.eq.s32.totalorder %s18, 1
      %p41 = por %p39, %p40
      %p43 = scmp.ne.s32.totalorder %s26, %s42
      %p44 = scmp.eq.s32.totalorder %s18, 0
      %p45 = por %p43, %p44
      %s47 = sadd.s32 %s46, 1
      %p50 = scmp.eq.s32.totalorder %s12, 1
      %p51 = scmp.ne.s32.totalorder %s46, %s48
      %p52 = scmp.eq.s32.totalorder %s12, 0
      %p53 = por %p51, %p52
      %p54 = scmp.ne.s32.totalorder %s46, %s48
      %p55 = scmp.eq.s32.totalorder %s17, 1
      %p56 = por %p54, %p55
      %p57 = scmp.ne.s32.totalorder %s48, %s49
      %p58 = scmp.eq.s32.totalorder %s17, 0
      %p59 = por %p57, %p58
      %p60 = scmp.ne.s32.totalorder %s48, %s49
      %p61 = scmp.eq.s32.totalorder %s18, 1
      %p62 = por %p60, %p61
      %p64 = scmp.ne.s32.totalorder %s49, %s63
      %p65 = scmp.eq.s32.totalorder %s18, 0
      %p66 = por %p64, %p65
      %s68 = sadd.s32 %s67, 1
      %p71 = scmp.eq.s32.totalorder %s12, 1
      %p72 = scmp.ne.s32.totalorder %s67, %s69
      %p73 = scmp.eq.s32.totalorder %s12, 0
      %p74 = por %p72, %p73
      %p75 = scmp.ne.s32.totalorder %s67, %s69
      %p76 = scmp.eq.s32.totalorder %s17, 1
      %p77 = por %p75, %p76
      %p78 = scmp.ne.s32.totalorder %s69, %s70
      %p79 = scmp.eq.s32.totalorder %s17, 0
      %p80 = por %p78, %p79
      %p81 = scmp.ne.s32.totalorder %s69, %s70
      %p82 = scmp.eq.s32.totalorder %s18, 1
      %p83 = por %p81, %p82
      %p85 = scmp.ne.s32.totalorder %s70, %s84
      %p86 = scmp.eq.s32.totalorder %s18, 0
      %p87 = por %p85, %p86
      %s88 = ssub.s32 %s12, %s19
      %p89 = scmp.eq.s32.totalorder %s88, 0
      %s91 = sadd.s32 %s90, 1
      %s92 = scalar_select %p89, %s90, %s91
      %p95 = pneg %p89
      %p96 = scmp.eq.s32.totalorder %s12, 1
      %p97 = por %p95, %p96
      %p98 = scmp.ne.s32.totalorder %s90, %s93
      %p99 = scmp.eq.s32.totalorder %s12, 0
      %p100 = por %p98, %p99
      %p101 = scmp.ne.s32.totalorder %s90, %s93
      %p102 = scmp.eq.s32.totalorder %s17, 1
      %p103 = por %p101, %p102
      %p104 = scmp.ne.s32.totalorder %s93, %s94
      %p105 = scmp.eq.s32.totalorder %s17, 0
      %p106 = por %p104, %p105
      %p107 = scmp.ne.s32.totalorder %s93, %s94
      %p108 = scmp.eq.s32.totalorder %s18, 1
      %p109 = por %p107, %p108
      %p111 = scmp.ne.s32.totalorder %s94, %s110
      %p112 = scmp.eq.s32.totalorder %s18, 0
      %p113 = por %p111, %p112
      %p114 = scmp.le.s32.totalorder 1, %s12
      %p115 = scmp.lt.s32.totalorder %s12, 3
      %p116 = pnand %p114, %p115
      %p117 = pneg %p116
      // Predicated region
      $region9: #{tpu_custom_call.1} parent=5 // pred_check
        _
      $region10: #{tpu_custom_call.1} parent=5 // pred_check_branch
        %119 = sbr.rel (%p116) target = $region12
      $region11: #{tpu_custom_call.1} parent=5 // pred_region
        %s120 = ssub.s32 %s12, 1
        // Predicated region
        $region13: #{tpu_custom_call.1} parent=11 // pred_check
          %p121 = pneg %p59
        $region14: #{tpu_custom_call.1} parent=11 // pred_check_branch
          %123 = sbr.rel (%p121) target = $region16
        $region15: #{tpu_custom_call.1} parent=11 // pred_region
          _
        $region16: #{tpu_custom_call.1} parent=11 // pred_fallthru
          _
        // Predicated region
        $region17: #{tpu_custom_call.1} parent=11 // pred_check
          %p124 = pneg %p80
        $region18: #{tpu_custom_call.1} parent=11 // pred_check_branch
          %126 = sbr.rel (%p124) target = $region20
        $region19: #{tpu_custom_call.1} parent=11 // pred_region
          _
        $region20: #{tpu_custom_call.1} parent=11 // pred_fallthru
          _
      $region12: #{tpu_custom_call.1} parent=5 // pred_fallthru
        _
      %p127 = scmp.lt.s32.totalorder %s12, 2
      // Predicated region
      $region21: #{tpu_custom_call.1} parent=5 // pred_check
        %p128 = pneg %p127
      $region22: #{tpu_custom_call.1} parent=5 // pred_check_branch
        %130 = sbr.rel (%p128) target = $region24
      $region23: #{tpu_custom_call.1} parent=5 // pred_region
        // Predicated region
        $region25: #{tpu_custom_call.1} parent=23 // pred_check
          %p131 = pneg %p32
        $region26: #{tpu_custom_call.1} parent=23 // pred_check_branch
          %133 = sbr.rel (%p131) target = $region28
        $region27: #{tpu_custom_call.1} parent=23 // pred_region
          %s134 = smul.u32 4, %s12
          %p135 = scmp.lt.s32.totalorder %s134, 7
          %s136 = scalar_select %p135, %s134, 7
          %s137 = smul.addr %s136, 18
          %s138 = smul.addr %s137, 4
          %s139 = scalar_lea.vmem %s0, %s138
          %s140 = smul.u32 4, %s12
        $region28: #{tpu_custom_call.1} parent=23 // pred_fallthru
          _
      $region24: #{tpu_custom_call.1} parent=5 // pred_fallthru
        _
      %p141 = scmp.le.s32.totalorder 1, %s12
      %p142 = scmp.lt.s32.totalorder %s12, 3
      %p143 = pnand %p141, %p142
      %p144 = pneg %p143
      // Predicated region
      $region29: #{tpu_custom_call.1} parent=5 // pred_check
        _
      $region30: #{tpu_custom_call.1} parent=5 // pred_check_branch
        %146 = sbr.rel (%p143) target = $region32
      $region31: #{tpu_custom_call.1} parent=5 // pred_region
        %s147 = ssub.s32 %s12, 1
        %s148 = smul.u32 4, %s17
        %p149 = scmp.lt.s32.totalorder %s148, 7
        %s150 = scalar_select %p149, %s148, 7
        %s151 = smul.addr %s150, 18
        %s152 = smul.addr %s151, 4
        %s153 = scalar_lea.vmem %s0, %s152
        %p154 = pneg %p38
        %p155 = pneg %p35
        %p156 = pneg %p59
        %p157 = pneg %p56
        %p158 = pneg %p80
        %p159 = pneg %p77
        %p160 = pneg %p106
        %p161 = pneg %p103
        %s162 = sand.u32 %s93, 1
        %s163 = scalar_lea.sflag [#allocation4], %s162
        %s164 = sand.u32 %s93, 1
        %s165 = smul.addr %s164, 64
        %s166 = scalar_lea.vmem [#allocation3], %s165
        %s167 = smul.u32 4, %s17
        %p168 = scmp.lt.s32.totalorder %s167, 7
        %s169 = scalar_select %p168, %s167, 7
        %s170 = smul.addr %s169, 18
        %s171 = smul.addr %s170, 4
        %s172 = scalar_lea.vmem %s0, %s171
        %s173 = smul.u32 4, %s17
        %vm175 = vcmask 1048064
        %176 = vst.msk [vmem:[#allocation2] sm:$0xff] %vm175, 0
        %177 = vst.msk [vmem:[#allocation2 + $0x8] sm:$0xff] %vm175, 0
        %178 = vst.msk [vmem:[#allocation2 + $0x10] sm:$0xff] %vm175, 0
        %179 = vst.msk [vmem:[#allocation2 + $0x18] sm:$0xff] %vm175, 0
        %v180 = vld [vmem:[%s172] sm:$0xf]
        %vm181 = vcmask 27648
        %182 = vst.msk [vmem:[#allocation2] sm:$0xf] %vm181, %v180
        %s183 = scalar_lea.vmem %s172, 8
        %v184 = vld [vmem:[%s183] sm:$0xf]
        %v186 = vunpack.c.l.b16 %v184
        %v187 = vpack.c.b16 %v186, %v186
        %vm189 = vcmask 31748
        %190 = vst.msk [vmem:[#allocation2] sm:$0xf0] %vm189, %v187
        %s191 = scalar_lea.vmem %s172, 16
        %v192 = vld [vmem:[%s191] sm:$0xf]
        %193 = vst.msk [vmem:[#allocation2 + $0x8] sm:$0xf] %vm181, %v192
        %s194 = scalar_lea.vmem %s172, 24
        %v195 = vld [vmem:[%s194] sm:$0xf]
        %v197 = vunpack.c.l.b16 %v195
        %v198 = vpack.c.b16 %v197, %v197
        %200 = vst.msk [vmem:[#allocation2 + $0x8] sm:$0xf0] %vm189, %v198
        %s201 = scalar_lea.vmem %s172, 32
        %v202 = vld [vmem:[%s201] sm:$0xf]
        %203 = vst.msk [vmem:[#allocation2 + $0x10] sm:$0xf] %vm181, %v202
        %s204 = scalar_lea.vmem %s172, 40
        %v205 = vld [vmem:[%s204] sm:$0xf]
        %v207 = vunpack.c.l.b16 %v205
        %v208 = vpack.c.b16 %v207, %v207
        %210 = vst.msk [vmem:[#allocation2 + $0x10] sm:$0xf0] %vm189, %v208
        %s211 = scalar_lea.vmem %s172, 48
        %v212 = vld [vmem:[%s211] sm:$0xf]
        %213 = vst.msk [vmem:[#allocation2 + $0x18] sm:$0xf] %vm181, %v212
        %s214 = scalar_lea.vmem %s172, 56
        %v215 = vld [vmem:[%s214] sm:$0xf]
        %v217 = vunpack.c.l.b16 %v215
        %v218 = vpack.c.b16 %v217, %v217
        %220 = vst.msk [vmem:[#allocation2 + $0x18] sm:$0xf0] %vm189, %v218
        %s221 = scalar_lea.vmem %s172, 72
        %v222 = vld [vmem:[%s221] sm:$0xf]
        %v224 = vunpack.c.l.b16 %v222
        %v225 = vpack.c.b16 %v224, %v224
        %226 = vrot.lane.b32.xlu0 %v225, 4
        %v227 = vpop.permute.xlu0 %226
        %vm229 = vcmask 60448
        %230 = vst.msk [vmem:[#allocation2] sm:$0xf] %vm229, %v227
        %s231 = scalar_lea.vmem %s172, 80
        %v232 = vld [vmem:[%s231] sm:$0xf]
        %v234 = vunpack.c.l.b16 %v232
        %v235 = vpack.c.b16 %v234, %v234
        %236 = vrot.lane.b32.xlu0 %v235, 4
        %v237 = vpop.permute.xlu0 %236
        %vm239 = vcmask 64548
        %240 = vst.msk [vmem:[#allocation2] sm:$0xf0] %vm239, %v237
        %s241 = scalar_lea.vmem %s172, 88
        %v242 = vld [vmem:[%s241] sm:$0xf]
        %v244 = vunpack.c.l.b16 %v242
        %v245 = vpack.c.b16 %v244, %v244
        %246 = vrot.lane.b32.xlu0 %v245, 4
        %v247 = vpop.permute.xlu0 %246
        %249 = vst.msk [vmem:[#allocation2 + $0x8] sm:$0xf] %vm229, %v247
        %s250 = scalar_lea.vmem %s172, 96
        %v251 = vld [vmem:[%s250] sm:$0xf]
        %v253 = vunpack.c.l.b16 %v251
        %v254 = vpack.c.b16 %v253, %v253
        %255 = vrot.lane.b32.xlu0 %v254, 4
        %v256 = vpop.permute.xlu0 %255
        %258 = vst.msk [vmem:[#allocation2 + $0x8] sm:$0xf0] %vm239, %v256
        %s259 = scalar_lea.vmem %s172, 104
        %v260 = vld [vmem:[%s259] sm:$0xf]
        %v262 = vunpack.c.l.b16 %v260
        %v263 = vpack.c.b16 %v262, %v262
        %264 = vrot.lane.b32.xlu0 %v263, 4
        %v265 = vpop.permute.xlu0 %264
        %267 = vst.msk [vmem:[#allocation2 + $0x10] sm:$0xf] %vm229, %v265
        %s268 = scalar_lea.vmem %s172, 112
        %v269 = vld [vmem:[%s268] sm:$0xf]
        %v271 = vunpack.c.l.b16 %v269
        %v272 = vpack.c.b16 %v271, %v271
        %273 = vrot.lane.b32.xlu0 %v272, 4
        %v274 = vpop.permute.xlu0 %273
        %276 = vst.msk [vmem:[#allocation2 + $0x10] sm:$0xf0] %vm239, %v274
        %s277 = scalar_lea.vmem %s172, 120
        %v278 = vld [vmem:[%s277] sm:$0xf]
        %v280 = vunpack.c.l.b16 %v278
        %v281 = vpack.c.b16 %v280, %v280
        %282 = vrot.lane.b32.xlu0 %v281, 4
        %v283 = vpop.permute.xlu0 %282
        %285 = vst.msk [vmem:[#allocation2 + $0x18] sm:$0xf] %vm229, %v283
        %s286 = scalar_lea.vmem %s172, 128
        %v287 = vld [vmem:[%s286] sm:$0xf]
        %v289 = vunpack.c.l.b16 %v287
        %v290 = vpack.c.b16 %v289, %v289
        %291 = vrot.lane.b32.xlu0 %v290, 4
        %v292 = vpop.permute.xlu0 %291
        %294 = vst.msk [vmem:[#allocation2 + $0x18] sm:$0xf0] %vm239, %v292
        %v295 = vld [vmem:[%s172] sm:$0xf]
        %v296 = vld [vmem:[%s172 + $0x4] sm:$0x1]
        %v299 = vunpack.c.l.b16 %v295
        %v300 = vunpack.c.l.b16 %v296
        %v301 = vpack.c.b16 %v300, %v299
        %v303 = vshrl.u32 %v301, 16
        %v305 = vshll.u32 %v301, 16
        %v307 = vrot.slane %v305, 1
        %v308 = vor.u32 %v303, %v307
        %309 = vrot.lane.b32.xlu0 %v308, 8
        %v310 = vpop.permute.xlu0 %309
        %vm312 = vcmask 93248
        %313 = vst.msk [vmem:[#allocation2] sm:$0xf] %vm312, %v310
        %v314 = vld [vmem:[%s183] sm:$0xf]
        %v315 = vld [vmem:[%s183 + $0x4] sm:$0x1]
        %v318 = vunpack.c.l.b16 %v314
        %v319 = vunpack.c.l.b16 %v315
        %v320 = vpack.c.b16 %v319, %v318
        %v322 = vshrl.u32 %v320, 16
        %v324 = vrot.slane %v322, 4
        %v325 = vshll.u32 %v320, 16
        %v327 = vrot.slane %v325, 5
        %v328 = vor.u32 %v324, %v327
        %329 = vrot.lane.b32.xlu0 %v328, 8
        %v330 = vpop.permute.xlu0 %329
        %vm332 = vcmask 97348
        %333 = vst.msk [vmem:[#allocation2] sm:$0xf0] %vm332, %v330
        %v334 = vld [vmem:[%s191] sm:$0xf]
        %v335 = vld [vmem:[%s191 + $0x4] sm:$0x1]
        %v338 = vunpack.c.l.b16 %v334
        %v339 = vunpack.c.l.b16 %v335
        %v340 = vpack.c.b16 %v339, %v338
        %v342 = vshrl.u32 %v340, 16
        %v344 = vshll.u32 %v340, 16
        %v346 = vrot.slane %v344, 1
        %v347 = vor.u32 %v342, %v346
        %348 = vrot.lane.b32.xlu0 %v347, 8
        %v349 = vpop.permute.xlu0 %348
        %351 = vst.msk [vmem:[#allocation2 + $0x8] sm:$0xf] %vm312, %v349
        %v352 = vld [vmem:[%s194] sm:$0xf]
        %v353 = vld [vmem:[%s194 + $0x4] sm:$0x1]
        %v356 = vunpack.c.l.b16 %v352
        %v357 = vunpack.c.l.b16 %v353
        %v358 = vpack.c.b16 %v357, %v356
        %v360 = vshrl.u32 %v358, 16
        %v362 = vrot.slane %v360, 4
        %v363 = vshll.u32 %v358, 16
        %v365 = vrot.slane %v363, 5
        %v366 = vor.u32 %v362, %v365
        %367 = vrot.lane.b32.xlu0 %v366, 8
        %v368 = vpop.permute.xlu0 %367
        %370 = vst.msk [vmem:[#allocation2 + $0x8] sm:$0xf0] %vm332, %v368
        %v371 = vld [vmem:[%s201] sm:$0xf]
        %v372 = vld [vmem:[%s201 + $0x4] sm:$0x1]
        %v375 = vunpack.c.l.b16 %v371
        %v376 = vunpack.c.l.b16 %v372
        %v377 = vpack.c.b16 %v376, %v375
        %v379 = vshrl.u32 %v377, 16
        %v381 = vshll.u32 %v377, 16
        %v383 = vrot.slane %v381, 1
        %v384 = vor.u32 %v379, %v383
        %385 = vrot.lane.b32.xlu0 %v384, 8
        %v386 = vpop.permute.xlu0 %385
        %388 = vst.msk [vmem:[#allocation2 + $0x10] sm:$0xf] %vm312, %v386
        %v389 = vld [vmem:[%s204] sm:$0xf]
        %v390 = vld [vmem:[%s204 + $0x4] sm:$0x1]
        %v393 = vunpack.c.l.b16 %v389
        %v394 = vunpack.c.l.b16 %v390
        %v395 = vpack.c.b16 %v394, %v393
        %v397 = vshrl.u32 %v395, 16
        %v399 = vrot.slane %v397, 4
        %v400 = vshll.u32 %v395, 16
        %v402 = vrot.slane %v400, 5
        %v403 = vor.u32 %v399, %v402
        %404 = vrot.lane.b32.xlu0 %v403, 8
        %v405 = vpop.permute.xlu0 %404
        %407 = vst.msk [vmem:[#allocation2 + $0x10] sm:$0xf0] %vm332, %v405
        %v408 = vld [vmem:[%s211] sm:$0xf]
        %v409 = vld [vmem:[%s211 + $0x4] sm:$0x1]
        %v412 = vunpack.c.l.b16 %v408
        %v413 = vunpack.c.l.b16 %v409
        %v414 = vpack.c.b16 %v413, %v412
        %v416 = vshrl.u32 %v414, 16
        %v418 = vshll.u32 %v414, 16
        %v420 = vrot.slane %v418, 1
        %v421 = vor.u32 %v416, %v420
        %422 = vrot.lane.b32.xlu0 %v421, 8
        %v423 = vpop.permute.xlu0 %422
        %425 = vst.msk [vmem:[#allocation2 + $0x18] sm:$0xf] %vm312, %v423
        %v426 = vld [vmem:[%s214] sm:$0xf]
        %v427 = vld [vmem:[%s214 + $0x4] sm:$0x1]
        %v430 = vunpack.c.l.b16 %v426
        %v431 = vunpack.c.l.b16 %v427
        %v432 = vpack.c.b16 %v431, %v430
        %v434 = vshrl.u32 %v432, 16
        %v436 = vrot.slane %v434, 4
        %v437 = vshll.u32 %v432, 16
        %v439 = vrot.slane %v437, 5
        %v440 = vor.u32 %v436, %v439
        %441 = vrot.lane.b32.xlu0 %v440, 8
        %v442 = vpop.permute.xlu0 %441
        %444 = vst.msk [vmem:[#allocation2 + $0x18] sm:$0xf0] %vm332, %v442
        %v445 = vld [vmem:[%s221] sm:$0xf]
        %v446 = vld [vmem:[%s221 + $0x4] sm:$0x1]
        %v449 = vunpack.c.l.b16 %v445
        %v450 = vunpack.c.l.b16 %v446
        %v451 = vpack.c.b16 %v450, %v449
        %v453 = vshrl.u32 %v451, 16
        %v455 = vshll.u32 %v451, 16
        %v457 = vrot.slane %v455, 1
        %v458 = vor.u32 %v453, %v457
        %459 = vrot.lane.b32.xlu0 %v458, 12
        %v460 = vpop.permute.xlu0 %459
        %vm462 = vcmask 126048
        %463 = vst.msk [vmem:[#allocation2] sm:$0xf] %vm462, %v460
        %v464 = vld [vmem:[%s231] sm:$0xf]
        %v465 = vld [vmem:[%s231 + $0x4] sm:$0x1]
        %v468 = vunpack.c.l.b16 %v464
        %v469 = vunpack.c.l.b16 %v465
        %v470 = vpack.c.b16 %v469, %v468
        %v472 = vshrl.u32 %v470, 16
        %v474 = vrot.slane %v472, 4
        %v475 = vshll.u32 %v470, 16
        %v477 = vrot.slane %v475, 5
        %v478 = vor.u32 %v474, %v477
        %479 = vrot.lane.b32.xlu0 %v478, 12
        %v480 = vpop.permute.xlu0 %479
        %vm482 = vcmask 130148
        %483 = vst.msk [vmem:[#allocation2] sm:$0xf0] %vm482, %v480
        %v484 = vld [vmem:[%s241] sm:$0xf]
        %v485 = vld [vmem:[%s241 + $0x4] sm:$0x1]
        %v488 = vunpack.c.l.b16 %v484
        %v489 = vunpack.c.l.b16 %v485
        %v490 = vpack.c.b16 %v489, %v488
        %v492 = vshrl.u32 %v490, 16
        %v494 = vshll.u32 %v490, 16
        %v496 = vrot.slane %v494, 1
        %v497 = vor.u32 %v492, %v496
        %498 = vrot.lane.b32.xlu0 %v497, 12
        %v499 = vpop.permute.xlu0 %498
        %501 = vst.msk [vmem:[#allocation2 + $0x8] sm:$0xf] %vm462, %v499
        %v502 = vld [vmem:[%s250] sm:$0xf]
        %v503 = vld [vmem:[%s250 + $0x4] sm:$0x1]
        %v506 = vunpack.c.l.b16 %v502
        %v507 = vunpack.c.l.b16 %v503
        %v508 = vpack.c.b16 %v507, %v506
        %v510 = vshrl.u32 %v508, 16
        %v512 = vrot.slane %v510, 4
        %v513 = vshll.u32 %v508, 16
        %v515 = vrot.slane %v513, 5
        %v516 = vor.u32 %v512, %v515
        %517 = vrot.lane.b32.xlu0 %v516, 12
        %v518 = vpop.permute.xlu0 %517
        %520 = vst.msk [vmem:[#allocation2 + $0x8] sm:$0xf0] %vm482, %v518
        %v521 = vld [vmem:[%s259] sm:$0xf]
        %v522 = vld [vmem:[%s259 + $0x4] sm:$0x1]
        %v525 = vunpack.c.l.b16 %v521
        %v526 = vunpack.c.l.b16 %v522
        %v527 = vpack.c.b16 %v526, %v525
        %v529 = vshrl.u32 %v527, 16
        %v531 = vshll.u32 %v527, 16
        %v533 = vrot.slane %v531, 1
        %v534 = vor.u32 %v529, %v533
        %535 = vrot.lane.b32.xlu0 %v534, 12
        %v536 = vpop.permute.xlu0 %535
        %538 = vst.msk [vmem:[#allocation2 + $0x10] sm:$0xf] %vm462, %v536
        %v539 = vld [vmem:[%s268] sm:$0xf]
        %v540 = vld [vmem:[%s268 + $0x4] sm:$0x1]
        %v543 = vunpack.c.l.b16 %v539
        %v544 = vunpack.c.l.b16 %v540
        %v545 = vpack.c.b16 %v544, %v543
        %v547 = vshrl.u32 %v545, 16
        %v549 = vrot.slane %v547, 4
        %v550 = vshll.u32 %v545, 16
        %v552 = vrot.slane %v550, 5
        %v553 = vor.u32 %v549, %v552
        %554 = vrot.lane.b32.xlu0 %v553, 12
        %v555 = vpop.permute.xlu0 %554
        %557 = vst.msk [vmem:[#allocation2 + $0x10] sm:$0xf0] %vm482, %v555
        %v558 = vld [vmem:[%s277] sm:$0xf]
        %v559 = vld [vmem:[%s277 + $0x4] sm:$0x1]
        %v562 = vunpack.c.l.b16 %v558
        %v563 = vunpack.c.l.b16 %v559
        %v564 = vpack.c.b16 %v563, %v562
        %v566 = vshrl.u32 %v564, 16
        %v568 = vshll.u32 %v564, 16
        %v570 = vrot.slane %v568, 1
        %v571 = vor.u32 %v566, %v570
        %572 = vrot.lane.b32.xlu0 %v571, 12
        %v573 = vpop.permute.xlu0 %572
        %575 = vst.msk [vmem:[#allocation2 + $0x18] sm:$0xf] %vm462, %v573
        %v576 = vld [vmem:[%s286] sm:$0xf]
        %v577 = vld [vmem:[%s286 + $0x4] sm:$0x1]
        %v580 = vunpack.c.l.b16 %v576
        %v581 = vunpack.c.l.b16 %v577
        %v582 = vpack.c.b16 %v581, %v580
        %v584 = vshrl.u32 %v582, 16
        %v586 = vrot.slane %v584, 4
        %v587 = vshll.u32 %v582, 16
        %v589 = vrot.slane %v587, 5
        %v590 = vor.u32 %v586, %v589
        %591 = vrot.lane.b32.xlu0 %v590, 12
        %v592 = vpop.permute.xlu0 %591
        %594 = vst.msk [vmem:[#allocation2 + $0x18] sm:$0xf0] %vm482, %v592
        %s595 = scalar_lea.vmem %s172, 144
        %v596 = vld [vmem:[%s595] sm:$0xf]
        %v598 = vunpack.c.l.b16 %v596
        %v599 = vpack.c.b16 %v598, %v598
        %600 = vrot.lane.b32.xlu0 %v599, 16
        %v601 = vpop.permute.xlu0 %600
        %vm603 = vcmask 158848
        %604 = vst.msk [vmem:[#allocation2] sm:$0xf] %vm603, %v601
        %s605 = scalar_lea.vmem %s172, 152
        %v606 = vld [vmem:[%s605] sm:$0xf]
        %v608 = vunpack.c.l.b16 %v606
        %v609 = vpack.c.b16 %v608, %v608
        %610 = vrot.lane.b32.xlu0 %v609, 16
        %v611 = vpop.permute.xlu0 %610
        %vm613 = vcmask 162948
        %614 = vst.msk [vmem:[#allocation2] sm:$0xf0] %vm613, %v611
        %s615 = scalar_lea.vmem %s172, 160
        %v616 = vld [vmem:[%s615] sm:$0xf]
        %v618 = vunpack.c.l.b16 %v616
        %v619 = vpack.c.b16 %v618, %v618
        %620 = vrot.lane.b32.xlu0 %v619, 16
        %v621 = vpop.permute.xlu0 %620
        %623 = vst.msk [vmem:[#allocation2 + $0x8] sm:$0xf] %vm603, %v621
        %s624 = scalar_lea.vmem %s172, 168
        %v625 = vld [vmem:[%s624] sm:$0xf]
        %v627 = vunpack.c.l.b16 %v625
        %v628 = vpack.c.b16 %v627, %v627
        %629 = vrot.lane.b32.xlu0 %v628, 16
        %v630 = vpop.permute.xlu0 %629
        %632 = vst.msk [vmem:[#allocation2 + $0x8] sm:$0xf0] %vm613, %v630
        %s633 = scalar_lea.vmem %s172, 176
        %v634 = vld [vmem:[%s633] sm:$0xf]
        %v636 = vunpack.c.l.b16 %v634
        %v637 = vpack.c.b16 %v636, %v636
        %638 = vrot.lane.b32.xlu0 %v637, 16
        %v639 = vpop.permute.xlu0 %638
        %641 = vst.msk [vmem:[#allocation2 + $0x10] sm:$0xf] %vm603, %v639
        %s642 = scalar_lea.vmem %s172, 184
        %v643 = vld [vmem:[%s642] sm:$0xf]
        %v645 = vunpack.c.l.b16 %v643
        %v646 = vpack.c.b16 %v645, %v645
        %647 = vrot.lane.b32.xlu0 %v646, 16
        %v648 = vpop.permute.xlu0 %647
        %650 = vst.msk [vmem:[#allocation2 + $0x10] sm:$0xf0] %vm613, %v648
        %s651 = scalar_lea.vmem %s172, 192
        %v652 = vld [vmem:[%s651] sm:$0xf]
        %v654 = vunpack.c.l.b16 %v652
        %v655 = vpack.c.b16 %v654, %v654
        %656 = vrot.lane.b32.xlu0 %v655, 16
        %v657 = vpop.permute.xlu0 %656
        %659 = vst.msk [vmem:[#allocation2 + $0x18] sm:$0xf] %vm603, %v657
        %s660 = scalar_lea.vmem %s172, 200
        %v661 = vld [vmem:[%s660] sm:$0xf]
        %v663 = vunpack.c.l.b16 %v661
        %v664 = vpack.c.b16 %v663, %v663
        %665 = vrot.lane.b32.xlu0 %v664, 16
        %v666 = vpop.permute.xlu0 %665
        %668 = vst.msk [vmem:[#allocation2 + $0x18] sm:$0xf0] %vm613, %v666
        %s669 = scalar_lea.vmem %s172, 216
        %v670 = vld [vmem:[%s669] sm:$0xf]
        %v672 = vunpack.c.l.b16 %v670
        %v673 = vpack.c.b16 %v672, %v672
        %674 = vrot.lane.b32.xlu0 %v673, 20
        %v675 = vpop.permute.xlu0 %674
        %vm677 = vcmask 191648
        %678 = vst.msk [vmem:[#allocation2] sm:$0xf] %vm677, %v675
        %s679 = scalar_lea.vmem %s172, 224
        %v680 = vld [vmem:[%s679] sm:$0xf]
        %v682 = vunpack.c.l.b16 %v680
        %v683 = vpack.c.b16 %v682, %v682
        %684 = vrot.lane.b32.xlu0 %v683, 20
        %v685 = vpop.permute.xlu0 %684
        %vm687 = vcmask 195748
        %688 = vst.msk [vmem:[#allocation2] sm:$0xf0] %vm687, %v685
        %s689 = scalar_lea.vmem %s172, 232
        %v690 = vld [vmem:[%s689] sm:$0xf]
        %v692 = vunpack.c.l.b16 %v690
        %v693 = vpack.c.b16 %v692, %v692
        %694 = vrot.lane.b32.xlu0 %v693, 20
        %v695 = vpop.permute.xlu0 %694
        %697 = vst.msk [vmem:[#allocation2 + $0x8] sm:$0xf] %vm677, %v695
        %s698 = scalar_lea.vmem %s172, 240
        %v699 = vld [vmem:[%s698] sm:$0xf]
        %v701 = vunpack.c.l.b16 %v699
        %v702 = vpack.c.b16 %v701, %v701
        %703 = vrot.lane.b32.xlu0 %v702, 20
        %v704 = vpop.permute.xlu0 %703
        %706 = vst.msk [vmem:[#allocation2 + $0x8] sm:$0xf0] %vm687, %v704
        %s707 = scalar_lea.vmem %s172, 248
        %v708 = vld [vmem:[%s707] sm:$0xf]
        %v710 = vunpack.c.l.b16 %v708
        %v711 = vpack.c.b16 %v710, %v710
        %712 = vrot.lane.b32.xlu0 %v711, 20
        %v713 = vpop.permute.xlu0 %712
        %715 = vst.msk [vmem:[#allocation2 + $0x10] sm:$0xf] %vm677, %v713
        %s716 = scalar_lea.vmem %s172, 256
        %v717 = vld [vmem:[%s716] sm:$0xf]
        %v719 = vunpack.c.l.b16 %v717
        %v720 = vpack.c.b16 %v719, %v719
        %721 = vrot.lane.b32.xlu0 %v720, 20
        %v722 = vpop.permute.xlu0 %721
        %724 = vst.msk [vmem:[#allocation2 + $0x10] sm:$0xf0] %vm687, %v722
        %s725 = scalar_lea.vmem %s172, 264
        %v726 = vld [vmem:[%s725] sm:$0xf]
        %v728 = vunpack.c.l.b16 %v726
        %v729 = vpack.c.b16 %v728, %v728
        %730 = vrot.lane.b32.xlu0 %v729, 20
        %v731 = vpop.permute.xlu0 %730
        %733 = vst.msk [vmem:[#allocation2 + $0x18] sm:$0xf] %vm677, %v731
        %s734 = scalar_lea.vmem %s172, 272
        %v735 = vld [vmem:[%s734] sm:$0xf]
        %v737 = vunpack.c.l.b16 %v735
        %v738 = vpack.c.b16 %v737, %v737
        %739 = vrot.lane.b32.xlu0 %v738, 20
        %v740 = vpop.permute.xlu0 %739
        %742 = vst.msk [vmem:[#allocation2 + $0x18] sm:$0xf0] %vm687, %v740
        %v743 = vld [vmem:[%s595] sm:$0xf]
        %v744 = vld [vmem:[%s595 + $0x4] sm:$0x1]
        %v747 = vunpack.c.l.b16 %v743
        %v748 = vunpack.c.l.b16 %v744
        %v749 = vpack.c.b16 %v748, %v747
        %v751 = vshrl.u32 %v749, 16
        %v753 = vshll.u32 %v749, 16
        %v755 = vrot.slane %v753, 1
        %v756 = vor.u32 %v751, %v755
        %757 = vrot.lane.b32.xlu0 %v756, 24
        %v758 = vpop.permute.xlu0 %757
        %vm760 = vcmask 224448
        %761 = vst.msk [vmem:[#allocation2] sm:$0xf] %vm760, %v758
        %v762 = vld [vmem:[%s605] sm:$0xf]
        %v763 = vld [vmem:[%s605 + $0x4] sm:$0x1]
        %v766 = vunpack.c.l.b16 %v762
        %v767 = vunpack.c.l.b16 %v763
        %v768 = vpack.c.b16 %v767, %v766
        %v770 = vshrl.u32 %v768, 16
        %v772 = vrot.slane %v770, 4
        %v773 = vshll.u32 %v768, 16
        %v775 = vrot.slane %v773, 5
        %v776 = vor.u32 %v772, %v775
        %777 = vrot.lane.b32.xlu0 %v776, 24
        %v778 = vpop.permute.xlu0 %777
        %vm780 = vcmask 228548
        %781 = vst.msk [vmem:[#allocation2] sm:$0xf0] %vm780, %v778
        %v782 = vld [vmem:[%s615] sm:$0xf]
        %v783 = vld [vmem:[%s615 + $0x4] sm:$0x1]
        %v786 = vunpack.c.l.b16 %v782
        %v787 = vunpack.c.l.b16 %v783
        %v788 = vpack.c.b16 %v787, %v786
        %v790 = vshrl.u32 %v788, 16
        %v792 = vshll.u32 %v788, 16
        %v794 = vrot.slane %v792, 1
        %v795 = vor.u32 %v790, %v794
        %796 = vrot.lane.b32.xlu0 %v795, 24
        %v797 = vpop.permute.xlu0 %796
        %799 = vst.msk [vmem:[#allocation2 + $0x8] sm:$0xf] %vm760, %v797
        %v800 = vld [vmem:[%s624] sm:$0xf]
        %v801 = vld [vmem:[%s624 + $0x4] sm:$0x1]
        %v804 = vunpack.c.l.b16 %v800
        %v805 = vunpack.c.l.b16 %v801
        %v806 = vpack.c.b16 %v805, %v804
        %v808 = vshrl.u32 %v806, 16
        %v810 = vrot.slane %v808, 4
        %v811 = vshll.u32 %v806, 16
        %v813 = vrot.slane %v811, 5
        %v814 = vor.u32 %v810, %v813
        %815 = vrot.lane.b32.xlu0 %v814, 24
        %v816 = vpop.permute.xlu0 %815
        %818 = vst.msk [vmem:[#allocation2 + $0x8] sm:$0xf0] %vm780, %v816
        %v819 = vld [vmem:[%s633] sm:$0xf]
        %v820 = vld [vmem:[%s633 + $0x4] sm:$0x1]
        %v823 = vunpack.c.l.b16 %v819
        %v824 = vunpack.c.l.b16 %v820
        %v825 = vpack.c.b16 %v824, %v823
        %v827 = vshrl.u32 %v825, 16
        %v829 = vshll.u32 %v825, 16
        %v831 = vrot.slane %v829, 1
        %v832 = vor.u32 %v827, %v831
        %833 = vrot.lane.b32.xlu0 %v832, 24
        %v834 = vpop.permute.xlu0 %833
        %836 = vst.msk [vmem:[#allocation2 + $0x10] sm:$0xf] %vm760, %v834
        %v837 = vld [vmem:[%s642] sm:$0xf]
        %v838 = vld [vmem:[%s642 + $0x4] sm:$0x1]
        %v841 = vunpack.c.l.b16 %v837
        %v842 = vunpack.c.l.b16 %v838
        %v843 = vpack.c.b16 %v842, %v841
        %v845 = vshrl.u32 %v843, 16
        %v847 = vrot.slane %v845, 4
        %v848 = vshll.u32 %v843, 16
        %v850 = vrot.slane %v848, 5
        %v851 = vor.u32 %v847, %v850
        %852 = vrot.lane.b32.xlu0 %v851, 24
        %v853 = vpop.permute.xlu0 %852
        %855 = vst.msk [vmem:[#allocation2 + $0x10] sm:$0xf0] %vm780, %v853
        %v856 = vld [vmem:[%s651] sm:$0xf]
        %v857 = vld [vmem:[%s651 + $0x4] sm:$0x1]
        %v860 = vunpack.c.l.b16 %v856
        %v861 = vunpack.c.l.b16 %v857
        %v862 = vpack.c.b16 %v861, %v860
        %v864 = vshrl.u32 %v862, 16
        %v866 = vshll.u32 %v862, 16
        %v868 = vrot.slane %v866, 1
        %v869 = vor.u32 %v864, %v868
        %870 = vrot.lane.b32.xlu0 %v869, 24
        %v871 = vpop.permute.xlu0 %870
        %873 = vst.msk [vmem:[#allocation2 + $0x18] sm:$0xf] %vm760, %v871
        %v874 = vld [vmem:[%s660] sm:$0xf]
        %v875 = vld [vmem:[%s660 + $0x4] sm:$0x1]
        %v878 = vunpack.c.l.b16 %v874
        %v879 = vunpack.c.l.b16 %v875
        %v880 = vpack.c.b16 %v879, %v878
        %v882 = vshrl.u32 %v880, 16
        %v884 = vrot.slane %v882, 4
        %v885 = vshll.u32 %v880, 16
        %v887 = vrot.slane %v885, 5
        %v888 = vor.u32 %v884, %v887
        %889 = vrot.lane.b32.xlu0 %v888, 24
        %v890 = vpop.permute.xlu0 %889
        %892 = vst.msk [vmem:[#allocation2 + $0x18] sm:$0xf0] %vm780, %v890
        %v893 = vld [vmem:[%s669] sm:$0xf]
        %v894 = vld [vmem:[%s669 + $0x4] sm:$0x1]
        %v897 = vunpack.c.l.b16 %v893
        %v898 = vunpack.c.l.b16 %v894
        %v899 = vpack.c.b16 %v898, %v897
        %v901 = vshrl.u32 %v899, 16
        %v903 = vshll.u32 %v899, 16
        %v905 = vrot.slane %v903, 1
        %v906 = vor.u32 %v901, %v905
        %907 = vrot.lane.b32.xlu0 %v906, 28
        %v908 = vpop.permute.xlu0 %907
        %vm910 = vcmask 257248
        %911 = vst.msk [vmem:[#allocation2] sm:$0xf] %vm910, %v908
        %v912 = vld [vmem:[%s679] sm:$0xf]
        %v913 = vld [vmem:[%s679 + $0x4] sm:$0x1]
        %v916 = vunpack.c.l.b16 %v912
        %v917 = vunpack.c.l.b16 %v913
        %v918 = vpack.c.b16 %v917, %v916
        %v920 = vshrl.u32 %v918, 16
        %v922 = vrot.slane %v920, 4
        %v923 = vshll.u32 %v918, 16
        %v925 = vrot.slane %v923, 5
        %v926 = vor.u32 %v922, %v925
        %927 = vrot.lane.b32.xlu0 %v926, 28
        %v928 = vpop.permute.xlu0 %927
        %vm930 = vcmask 261348
        %931 = vst.msk [vmem:[#allocation2] sm:$0xf0] %vm930, %v928
        %v932 = vld [vmem:[%s689] sm:$0xf]
        %v933 = vld [vmem:[%s689 + $0x4] sm:$0x1]
        %v936 = vunpack.c.l.b16 %v932
        %v937 = vunpack.c.l.b16 %v933
        %v938 = vpack.c.b16 %v937, %v936
        %v940 = vshrl.u32 %v938, 16
        %v942 = vshll.u32 %v938, 16
        %v944 = vrot.slane %v942, 1
        %v945 = vor.u32 %v940, %v944
        %946 = vrot.lane.b32.xlu0 %v945, 28
        %v947 = vpop.permute.xlu0 %946
        %949 = vst.msk [vmem:[#allocation2 + $0x8] sm:$0xf] %vm910, %v947
        %v950 = vld [vmem:[%s698] sm:$0xf]
        %v951 = vld [vmem:[%s698 + $0x4] sm:$0x1]
        %v954 = vunpack.c.l.b16 %v950
        %v955 = vunpack.c.l.b16 %v951
        %v956 = vpack.c.b16 %v955, %v954
        %v958 = vshrl.u32 %v956, 16
        %v960 = vrot.slane %v958, 4
        %v961 = vshll.u32 %v956, 16
        %v963 = vrot.slane %v961, 5
        %v964 = vor.u32 %v960, %v963
        %965 = vrot.lane.b32.xlu0 %v964, 28
        %v966 = vpop.permute.xlu0 %965
        %968 = vst.msk [vmem:[#allocation2 + $0x8] sm:$0xf0] %vm930, %v966
        %v969 = vld [vmem:[%s707] sm:$0xf]
        %v970 = vld [vmem:[%s707 + $0x4] sm:$0x1]
        %v973 = vunpack.c.l.b16 %v969
        %v974 = vunpack.c.l.b16 %v970
        %v975 = vpack.c.b16 %v974, %v973
        %v977 = vshrl.u32 %v975, 16
        %v979 = vshll.u32 %v975, 16
        %v981 = vrot.slane %v979, 1
        %v982 = vor.u32 %v977, %v981
        %983 = vrot.lane.b32.xlu0 %v982, 28
        %v984 = vpop.permute.xlu0 %983
        %986 = vst.msk [vmem:[#allocation2 + $0x10] sm:$0xf] %vm910, %v984
        %v987 = vld [vmem:[%s716] sm:$0xf]
        %v988 = vld [vmem:[%s716 + $0x4] sm:$0x1]
        %v991 = vunpack.c.l.b16 %v987
        %v992 = vunpack.c.l.b16 %v988
        %v993 = vpack.c.b16 %v992, %v991
        %v995 = vshrl.u32 %v993, 16
        %v997 = vrot.slane %v995, 4
        %v998 = vshll.u32 %v993, 16
        %v1000 = vrot.slane %v998, 5
        %v1001 = vor.u32 %v997, %v1000
        %1002 = vrot.lane.b32.xlu0 %v1001, 28
        %v1003 = vpop.permute.xlu0 %1002
        %1005 = vst.msk [vmem:[#allocation2 + $0x10] sm:$0xf0] %vm930, %v1003
        %v1006 = vld [vmem:[%s725] sm:$0xf]
        %v1007 = vld [vmem:[%s725 + $0x4] sm:$0x1]
        %v1010 = vunpack.c.l.b16 %v1006
        %v1011 = vunpack.c.l.b16 %v1007
        %v1012 = vpack.c.b16 %v1011, %v1010
        %v1014 = vshrl.u32 %v1012, 16
        %v1016 = vshll.u32 %v1012, 16
        %v1018 = vrot.slane %v1016, 1
        %v1019 = vor.u32 %v1014, %v1018
        %1020 = vrot.lane.b32.xlu0 %v1019, 28
        %v1021 = vpop.permute.xlu0 %1020
        %1023 = vst.msk [vmem:[#allocation2 + $0x18] sm:$0xf] %vm910, %v1021
        %v1024 = vld [vmem:[%s734] sm:$0xf]
        %v1025 = vld [vmem:[%s734 + $0x4] sm:$0x1]
        %v1028 = vunpack.c.l.b16 %v1024
        %v1029 = vunpack.c.l.b16 %v1025
        %v1030 = vpack.c.b16 %v1029, %v1028
        %v1032 = vshrl.u32 %v1030, 16
        %v1034 = vrot.slane %v1032, 4
        %v1035 = vshll.u32 %v1030, 16
        %v1037 = vrot.slane %v1035, 5
        %v1038 = vor.u32 %v1034, %v1037
        %1039 = vrot.lane.b32.xlu0 %v1038, 28
        %v1040 = vpop.permute.xlu0 %1039
        %1042 = vst.msk [vmem:[#allocation2 + $0x18] sm:$0xf0] %vm930, %v1040
        %v1043 = vld [vmem:[%s183] sm:$0xf]
        %v1045 = vunpack.c.l.b16 %v1043
        %v1046 = vpack.c.b16 %v1045, %v1045
        %1047 = vrot.lane.b32.xlu0 %v1046, 32
        %v1048 = vpop.permute.xlu0 %1047
        %vm1050 = vcmask 290048
        %1051 = vst.msk [vmem:[#allocation2] sm:$0xf] %vm1050, %v1048
        %v1052 = vld [vmem:[%s191] sm:$0xf]
        %v1054 = vunpack.c.l.b16 %v1052
        %v1055 = vpack.c.b16 %v1054, %v1054
        %1056 = vrot.lane.b32.xlu0 %v1055, 32
        %v1057 = vpop.permute.xlu0 %1056
        %vm1059 = vcmask 294148
        %1060 = vst.msk [vmem:[#allocation2] sm:$0xf0] %vm1059, %v1057
        %v1061 = vld [vmem:[%s194] sm:$0xf]
        %v1063 = vunpack.c.l.b16 %v1061
        %v1064 = vpack.c.b16 %v1063, %v1063
        %1065 = vrot.lane.b32.xlu0 %v1064, 32
        %v1066 = vpop.permute.xlu0 %1065
        %1068 = vst.msk [vmem:[#allocation2 + $0x8] sm:$0xf] %vm1050, %v1066
        %v1069 = vld [vmem:[%s201] sm:$0xf]
        %v1071 = vunpack.c.l.b16 %v1069
        %v1072 = vpack.c.b16 %v1071, %v1071
        %1073 = vrot.lane.b32.xlu0 %v1072, 32
        %v1074 = vpop.permute.xlu0 %1073
        %1076 = vst.msk [vmem:[#allocation2 + $0x8] sm:$0xf0] %vm1059, %v1074
        %v1077 = vld [vmem:[%s204] sm:$0xf]
        %v1079 = vunpack.c.l.b16 %v1077
        %v1080 = vpack.c.b16 %v1079, %v1079
        %1081 = vrot.lane.b32.xlu0 %v1080, 32
        %v1082 = vpop.permute.xlu0 %1081
        %1084 = vst.msk [vmem:[#allocation2 + $0x10] sm:$0xf] %vm1050, %v1082
        %v1085 = vld [vmem:[%s211] sm:$0xf]
        %v1087 = vunpack.c.l.b16 %v1085
        %v1088 = vpack.c.b16 %v1087, %v1087
        %1089 = vrot.lane.b32.xlu0 %v1088, 32
        %v1090 = vpop.permute.xlu0 %1089
        %1092 = vst.msk [vmem:[#allocation2 + $0x10] sm:$0xf0] %vm1059, %v1090
        %v1093 = vld [vmem:[%s214] sm:$0xf]
        %v1095 = vunpack.c.l.b16 %v1093
        %v1096 = vpack.c.b16 %v1095, %v1095
        %1097 = vrot.lane.b32.xlu0 %v1096, 32
        %v1098 = vpop.permute.xlu0 %1097
        %1100 = vst.msk [vmem:[#allocation2 + $0x18] sm:$0xf] %vm1050, %v1098
        %s1101 = scalar_lea.vmem %s172, 64
        %v1102 = vld [vmem:[%s1101] sm:$0xf]
        %v1104 = vunpack.c.l.b16 %v1102
        %v1105 = vpack.c.b16 %v1104, %v1104
        %1106 = vrot.lane.b32.xlu0 %v1105, 32
        %v1107 = vpop.permute.xlu0 %1106
        %1109 = vst.msk [vmem:[#allocation2 + $0x18] sm:$0xf0] %vm1059, %v1107
        %v1110 = vld [vmem:[%s231] sm:$0xf]
        %v1112 = vunpack.c.l.b16 %v1110
        %v1113 = vpack.c.b16 %v1112, %v1112
        %1114 = vrot.lane.b32.xlu0 %v1113, 36
        %v1115 = vpop.permute.xlu0 %1114
        %vm1117 = vcmask 322848
        %1118 = vst.msk [vmem:[#allocation2] sm:$0xf] %vm1117, %v1115
        %v1119 = vld [vmem:[%s241] sm:$0xf]
        %v1121 = vunpack.c.l.b16 %v1119
        %v1122 = vpack.c.b16 %v1121, %v1121
        %1123 = vrot.lane.b32.xlu0 %v1122, 36
        %v1124 = vpop.permute.xlu0 %1123
        %vm1126 = vcmask 326948
        %1127 = vst.msk [vmem:[#allocation2] sm:$0xf0] %vm1126, %v1124
        %v1128 = vld [vmem:[%s250] sm:$0xf]
        %v1130 = vunpack.c.l.b16 %v1128
        %v1131 = vpack.c.b16 %v1130, %v1130
        %1132 = vrot.lane.b32.xlu0 %v1131, 36
        %v1133 = vpop.permute.xlu0 %1132
        %1135 = vst.msk [vmem:[#allocation2 + $0x8] sm:$0xf] %vm1117, %v1133
        %v1136 = vld [vmem:[%s259] sm:$0xf]
        %v1138 = vunpack.c.l.b16 %v1136
        %v1139 = vpack.c.b16 %v1138, %v1138
        %1140 = vrot.lane.b32.xlu0 %v1139, 36
        %v1141 = vpop.permute.xlu0 %1140
        %1143 = vst.msk [vmem:[#allocation2 + $0x8] sm:$0xf0] %vm1126, %v1141
        %v1144 = vld [vmem:[%s268] sm:$0xf]
        %v1146 = vunpack.c.l.b16 %v1144
        %v1147 = vpack.c.b16 %v1146, %v1146
        %1148 = vrot.lane.b32.xlu0 %v1147, 36
        %v1149 = vpop.permute.xlu0 %1148
        %1151 = vst.msk [vmem:[#allocation2 + $0x10] sm:$0xf] %vm1117, %v1149
        %v1152 = vld [vmem:[%s277] sm:$0xf]
        %v1154 = vunpack.c.l.b16 %v1152
        %v1155 = vpack.c.b16 %v1154, %v1154
        %1156 = vrot.lane.b32.xlu0 %v1155, 36
        %v1157 = vpop.permute.xlu0 %1156
        %1159 = vst.msk [vmem:[#allocation2 + $0x10] sm:$0xf0] %vm1126, %v1157
        %v1160 = vld [vmem:[%s286] sm:$0xf]
        %v1162 = vunpack.c.l.b16 %v1160
        %v1163 = vpack.c.b16 %v1162, %v1162
        %1164 = vrot.lane.b32.xlu0 %v1163, 36
        %v1165 = vpop.permute.xlu0 %1164
        %1167 = vst.msk [vmem:[#allocation2 + $0x18] sm:$0xf] %vm1117, %v1165
        %s1168 = scalar_lea.vmem %s172, 136
        %v1169 = vld [vmem:[%s1168] sm:$0xf]
        %v1171 = vunpack.c.l.b16 %v1169
        %v1172 = vpack.c.b16 %v1171, %v1171
        %1173 = vrot.lane.b32.xlu0 %v1172, 36
        %v1174 = vpop.permute.xlu0 %1173
        %1176 = vst.msk [vmem:[#allocation2 + $0x18] sm:$0xf0] %vm1126, %v1174
        %v1177 = vld [vmem:[%s183] sm:$0xf]
        %v1178 = vld [vmem:[%s183 + $0x4] sm:$0x1]
        %v1181 = vunpack.c.l.b16 %v1177
        %v1182 = vunpack.c.l.b16 %v1178
        %v1183 = vpack.c.b16 %v1182, %v1181
        %v1185 = vshrl.u32 %v1183, 16
        %v1187 = vshll.u32 %v1183, 16
        %v1189 = vrot.slane %v1187, 1
        %v1190 = vor.u32 %v1185, %v1189
        %1191 = vrot.lane.b32.xlu0 %v1190, 40
        %v1192 = vpop.permute.xlu0 %1191
        %vm1194 = vcmask 355648
        %1195 = vst.msk [vmem:[#allocation2] sm:$0xf] %vm1194, %v1192
        %v1196 = vld [vmem:[%s191] sm:$0xf]
        %v1197 = vld [vmem:[%s191 + $0x4] sm:$0x1]
        %v1200 = vunpack.c.l.b16 %v1196
        %v1201 = vunpack.c.l.b16 %v1197
        %v1202 = vpack.c.b16 %v1201, %v1200
        %v1204 = vshrl.u32 %v1202, 16
        %v1206 = vrot.slane %v1204, 4
        %v1207 = vshll.u32 %v1202, 16
        %v1209 = vrot.slane %v1207, 5
        %v1210 = vor.u32 %v1206, %v1209
        %1211 = vrot.lane.b32.xlu0 %v1210, 40
        %v1212 = vpop.permute.xlu0 %1211
        %vm1214 = vcmask 359748
        %1215 = vst.msk [vmem:[#allocation2] sm:$0xf0] %vm1214, %v1212
        %v1216 = vld [vmem:[%s194] sm:$0xf]
        %v1217 = vld [vmem:[%s194 + $0x4] sm:$0x1]
        %v1220 = vunpack.c.l.b16 %v1216
        %v1221 = vunpack.c.l.b16 %v1217
        %v1222 = vpack.c.b16 %v1221, %v1220
        %v1224 = vshrl.u32 %v1222, 16
        %v1226 = vshll.u32 %v1222, 16
        %v1228 = vrot.slane %v1226, 1
        %v1229 = vor.u32 %v1224, %v1228
        %1230 = vrot.lane.b32.xlu0 %v1229, 40
        %v1231 = vpop.permute.xlu0 %1230
        %1233 = vst.msk [vmem:[#allocation2 + $0x8] sm:$0xf] %vm1194, %v1231
        %v1234 = vld [vmem:[%s201] sm:$0xf]
        %v1235 = vld [vmem:[%s201 + $0x4] sm:$0x1]
        %v1238 = vunpack.c.l.b16 %v1234
        %v1239 = vunpack.c.l.b16 %v1235
        %v1240 = vpack.c.b16 %v1239, %v1238
        %v1242 = vshrl.u32 %v1240, 16
        %v1244 = vrot.slane %v1242, 4
        %v1245 = vshll.u32 %v1240, 16
        %v1247 = vrot.slane %v1245, 5
        %v1248 = vor.u32 %v1244, %v1247
        %1249 = vrot.lane.b32.xlu0 %v1248, 40
        %v1250 = vpop.permute.xlu0 %1249
        %1252 = vst.msk [vmem:[#allocation2 + $0x8] sm:$0xf0] %vm1214, %v1250
        %v1253 = vld [vmem:[%s204] sm:$0xf]
        %v1254 = vld [vmem:[%s204 + $0x4] sm:$0x1]
        %v1257 = vunpack.c.l.b16 %v1253
        %v1258 = vunpack.c.l.b16 %v1254
        %v1259 = vpack.c.b16 %v1258, %v1257
        %v1261 = vshrl.u32 %v1259, 16
        %v1263 = vshll.u32 %v1259, 16
        %v1265 = vrot.slane %v1263, 1
        %v1266 = vor.u32 %v1261, %v1265
        %1267 = vrot.lane.b32.xlu0 %v1266, 40
        %v1268 = vpop.permute.xlu0 %1267
        %1270 = vst.msk [vmem:[#allocation2 + $0x10] sm:$0xf] %vm1194, %v1268
        %v1271 = vld [vmem:[%s211] sm:$0xf]
        %v1272 = vld [vmem:[%s211 + $0x4] sm:$0x1]
        %v1275 = vunpack.c.l.b16 %v1271
        %v1276 = vunpack.c.l.b16 %v1272
        %v1277 = vpack.c.b16 %v1276, %v1275
        %v1279 = vshrl.u32 %v1277, 16
        %v1281 = vrot.slane %v1279, 4
        %v1282 = vshll.u32 %v1277, 16
        %v1284 = vrot.slane %v1282, 5
        %v1285 = vor.u32 %v1281, %v1284
        %1286 = vrot.lane.b32.xlu0 %v1285, 40
        %v1287 = vpop.permute.xlu0 %1286
        %1289 = vst.msk [vmem:[#allocation2 + $0x10] sm:$0xf0] %vm1214, %v1287
        %v1290 = vld [vmem:[%s214] sm:$0xf]
        %v1291 = vld [vmem:[%s214 + $0x4] sm:$0x1]
        %v1294 = vunpack.c.l.b16 %v1290
        %v1295 = vunpack.c.l.b16 %v1291
        %v1296 = vpack.c.b16 %v1295, %v1294
        %v1298 = vshrl.u32 %v1296, 16
        %v1300 = vshll.u32 %v1296, 16
        %v1302 = vrot.slane %v1300, 1
        %v1303 = vor.u32 %v1298, %v1302
        %1304 = vrot.lane.b32.xlu0 %v1303, 40
        %v1305 = vpop.permute.xlu0 %1304
        %1307 = vst.msk [vmem:[#allocation2 + $0x18] sm:$0xf] %vm1194, %v1305
        %v1308 = vld [vmem:[%s1101] sm:$0xf]
        %v1309 = vld [vmem:[%s1101 + $0x4] sm:$0x1]
        %v1312 = vunpack.c.l.b16 %v1308
        %v1313 = vunpack.c.l.b16 %v1309
        %v1314 = vpack.c.b16 %v1313, %v1312
        %v1316 = vshrl.u32 %v1314, 16
        %v1318 = vrot.slane %v1316, 4
        %v1319 = vshll.u32 %v1314, 16
        %v1321 = vrot.slane %v1319, 5
        %v1322 = vor.u32 %v1318, %v1321
        %1323 = vrot.lane.b32.xlu0 %v1322, 40
        %v1324 = vpop.permute.xlu0 %1323
        %1326 = vst.msk [vmem:[#allocation2 + $0x18] sm:$0xf0] %vm1214, %v1324
        %v1327 = vld [vmem:[%s231] sm:$0xf]
        %v1328 = vld [vmem:[%s231 + $0x4] sm:$0x1]
        %v1331 = vunpack.c.l.b16 %v1327
        %v1332 = vunpack.c.l.b16 %v1328
        %v1333 = vpack.c.b16 %v1332, %v1331
        %v1335 = vshrl.u32 %v1333, 16
        %v1337 = vshll.u32 %v1333, 16
        %v1339 = vrot.slane %v1337, 1
        %v1340 = vor.u32 %v1335, %v1339
        %1341 = vrot.lane.b32.xlu0 %v1340, 44
        %v1342 = vpop.permute.xlu0 %1341
        %vm1344 = vcmask 388448
        %1345 = vst.msk [vmem:[#allocation2] sm:$0xf] %vm1344, %v1342
        %v1346 = vld [vmem:[%s241] sm:$0xf]
        %v1347 = vld [vmem:[%s241 + $0x4] sm:$0x1]
        %v1350 = vunpack.c.l.b16 %v1346
        %v1351 = vunpack.c.l.b16 %v1347
        %v1352 = vpack.c.b16 %v1351, %v1350
        %v1354 = vshrl.u32 %v1352, 16
        %v1356 = vrot.slane %v1354, 4
        %v1357 = vshll.u32 %v1352, 16
        %v1359 = vrot.slane %v1357, 5
        %v1360 = vor.u32 %v1356, %v1359
        %1361 = vrot.lane.b32.xlu0 %v1360, 44
        %v1362 = vpop.permute.xlu0 %1361
        %vm1364 = vcmask 392548
        %1365 = vst.msk [vmem:[#allocation2] sm:$0xf0] %vm1364, %v1362
        %v1366 = vld [vmem:[%s250] sm:$0xf]
        %v1367 = vld [vmem:[%s250 + $0x4] sm:$0x1]
        %v1370 = vunpack.c.l.b16 %v1366
        %v1371 = vunpack.c.l.b16 %v1367
        %v1372 = vpack.c.b16 %v1371, %v1370
        %v1374 = vshrl.u32 %v1372, 16
        %v1376 = vshll.u32 %v1372, 16
        %v1378 = vrot.slane %v1376, 1
        %v1379 = vor.u32 %v1374, %v1378
        %1380 = vrot.lane.b32.xlu0 %v1379, 44
        %v1381 = vpop.permute.xlu0 %1380
        %1383 = vst.msk [vmem:[#allocation2 + $0x8] sm:$0xf] %vm1344, %v1381
        %v1384 = vld [vmem:[%s259] sm:$0xf]
        %v1385 = vld [vmem:[%s259 + $0x4] sm:$0x1]
        %v1388 = vunpack.c.l.b16 %v1384
        %v1389 = vunpack.c.l.b16 %v1385
        %v1390 = vpack.c.b16 %v1389, %v1388
        %v1392 = vshrl.u32 %v1390, 16
        %v1394 = vrot.slane %v1392, 4
        %v1395 = vshll.u32 %v1390, 16
        %v1397 = vrot.slane %v1395, 5
        %v1398 = vor.u32 %v1394, %v1397
        %1399 = vrot.lane.b32.xlu0 %v1398, 44
        %v1400 = vpop.permute.xlu0 %1399
        %1402 = vst.msk [vmem:[#allocation2 + $0x8] sm:$0xf0] %vm1364, %v1400
        %v1403 = vld [vmem:[%s268] sm:$0xf]
        %v1404 = vld [vmem:[%s268 + $0x4] sm:$0x1]
        %v1407 = vunpack.c.l.b16 %v1403
        %v1408 = vunpack.c.l.b16 %v1404
        %v1409 = vpack.c.b16 %v1408, %v1407
        %v1411 = vshrl.u32 %v1409, 16
        %v1413 = vshll.u32 %v1409, 16
        %v1415 = vrot.slane %v1413, 1
        %v1416 = vor.u32 %v1411, %v1415
        %1417 = vrot.lane.b32.xlu0 %v1416, 44
        %v1418 = vpop.permute.xlu0 %1417
        %1420 = vst.msk [vmem:[#allocation2 + $0x10] sm:$0xf] %vm1344, %v1418
        %v1421 = vld [vmem:[%s277] sm:$0xf]
        %v1422 = vld [vmem:[%s277 + $0x4] sm:$0x1]
        %v1425 = vunpack.c.l.b16 %v1421
        %v1426 = vunpack.c.l.b16 %v1422
        %v1427 = vpack.c.b16 %v1426, %v1425
        %v1429 = vshrl.u32 %v1427, 16
        %v1431 = vrot.slane %v1429, 4
        %v1432 = vshll.u32 %v1427, 16
        %v1434 = vrot.slane %v1432, 5
        %v1435 = vor.u32 %v1431, %v1434
        %1436 = vrot.lane.b32.xlu0 %v1435, 44
        %v1437 = vpop.permute.xlu0 %1436
        %1439 = vst.msk [vmem:[#allocation2 + $0x10] sm:$0xf0] %vm1364, %v1437
        %v1440 = vld [vmem:[%s286] sm:$0xf]
        %v1441 = vld [vmem:[%s286 + $0x4] sm:$0x1]
        %v1444 = vunpack.c.l.b16 %v1440
        %v1445 = vunpack.c.l.b16 %v1441
        %v1446 = vpack.c.b16 %v1445, %v1444
        %v1448 = vshrl.u32 %v1446, 16
        %v1450 = vshll.u32 %v1446, 16
        %v1452 = vrot.slane %v1450, 1
        %v1453 = vor.u32 %v1448, %v1452
        %1454 = vrot.lane.b32.xlu0 %v1453, 44
        %v1455 = vpop.permute.xlu0 %1454
        %1457 = vst.msk [vmem:[#allocation2 + $0x18] sm:$0xf] %vm1344, %v1455
        %v1458 = vld [vmem:[%s1168] sm:$0xf]
        %v1459 = vld [vmem:[%s1168 + $0x4] sm:$0x1]
        %v1462 = vunpack.c.l.b16 %v1458
        %v1463 = vunpack.c.l.b16 %v1459
        %v1464 = vpack.c.b16 %v1463, %v1462
        %v1466 = vshrl.u32 %v1464, 16
        %v1468 = vrot.slane %v1466, 4
        %v1469 = vshll.u32 %v1464, 16
        %v1471 = vrot.slane %v1469, 5
        %v1472 = vor.u32 %v1468, %v1471
        %1473 = vrot.lane.b32.xlu0 %v1472, 44
        %v1474 = vpop.permute.xlu0 %1473
        %1476 = vst.msk [vmem:[#allocation2 + $0x18] sm:$0xf0] %vm1364, %v1474
        %v1477 = vld [vmem:[%s605] sm:$0xf]
        %v1479 = vunpack.c.l.b16 %v1477
        %v1480 = vpack.c.b16 %v1479, %v1479
        %1481 = vrot.lane.b32.xlu0 %v1480, 48
        %v1482 = vpop.permute.xlu0 %1481
        %vm1484 = vcmask 421248
        %1485 = vst.msk [vmem:[#allocation2] sm:$0xf] %vm1484, %v1482
        %v1486 = vld [vmem:[%s615] sm:$0xf]
        %v1488 = vunpack.c.l.b16 %v1486
        %v1489 = vpack.c.b16 %v1488, %v1488
        %1490 = vrot.lane.b32.xlu0 %v1489, 48
        %v1491 = vpop.permute.xlu0 %1490
        %vm1493 = vcmask 425348
        %1494 = vst.msk [vmem:[#allocation2] sm:$0xf0] %vm1493, %v1491
        %v1495 = vld [vmem:[%s624] sm:$0xf]
        %v1497 = vunpack.c.l.b16 %v1495
        %v1498 = vpack.c.b16 %v1497, %v1497
        %1499 = vrot.lane.b32.xlu0 %v1498, 48
        %v1500 = vpop.permute.xlu0 %1499
        %1502 = vst.msk [vmem:[#allocation2 + $0x8] sm:$0xf] %vm1484, %v1500
        %v1503 = vld [vmem:[%s633] sm:$0xf]
        %v1505 = vunpack.c.l.b16 %v1503
        %v1506 = vpack.c.b16 %v1505, %v1505
        %1507 = vrot.lane.b32.xlu0 %v1506, 48
        %v1508 = vpop.permute.xlu0 %1507
        %1510 = vst.msk [vmem:[#allocation2 + $0x8] sm:$0xf0] %vm1493, %v1508
        %v1511 = vld [vmem:[%s642] sm:$0xf]
        %v1513 = vunpack.c.l.b16 %v1511
        %v1514 = vpack.c.b16 %v1513, %v1513
        %1515 = vrot.lane.b32.xlu0 %v1514, 48
        %v1516 = vpop.permute.xlu0 %1515
        %1518 = vst.msk [vmem:[#allocation2 + $0x10] sm:$0xf] %vm1484, %v1516
        %v1519 = vld [vmem:[%s651] sm:$0xf]
        %v1521 = vunpack.c.l.b16 %v1519
        %v1522 = vpack.c.b16 %v1521, %v1521
        %1523 = vrot.lane.b32.xlu0 %v1522, 48
        %v1524 = vpop.permute.xlu0 %1523
        %1526 = vst.msk [vmem:[#allocation2 + $0x10] sm:$0xf0] %vm1493, %v1524
        %v1527 = vld [vmem:[%s660] sm:$0xf]
        %v1529 = vunpack.c.l.b16 %v1527
        %v1530 = vpack.c.b16 %v1529, %v1529
        %1531 = vrot.lane.b32.xlu0 %v1530, 48
        %v1532 = vpop.permute.xlu0 %1531
        %1534 = vst.msk [vmem:[#allocation2 + $0x18] sm:$0xf] %vm1484, %v1532
        %s1535 = scalar_lea.vmem %s172, 208
        %v1536 = vld [vmem:[%s1535] sm:$0xf]
        %v1538 = vunpack.c.l.b16 %v1536
        %v1539 = vpack.c.b16 %v1538, %v1538
        %1540 = vrot.lane.b32.xlu0 %v1539, 48
        %v1541 = vpop.permute.xlu0 %1540
        %1543 = vst.msk [vmem:[#allocation2 + $0x18] sm:$0xf0] %vm1493, %v1541
        %v1544 = vld [vmem:[%s679] sm:$0xf]
        %v1546 = vunpack.c.l.b16 %v1544
        %v1547 = vpack.c.b16 %v1546, %v1546
        %1548 = vrot.lane.b32.xlu0 %v1547, 52
        %v1549 = vpop.permute.xlu0 %1548
        %vm1551 = vcmask 454048
        %1552 = vst.msk [vmem:[#allocation2] sm:$0xf] %vm1551, %v1549
        %v1553 = vld [vmem:[%s689] sm:$0xf]
        %v1555 = vunpack.c.l.b16 %v1553
        %v1556 = vpack.c.b16 %v1555, %v1555
        %1557 = vrot.lane.b32.xlu0 %v1556, 52
        %v1558 = vpop.permute.xlu0 %1557
        %vm1560 = vcmask 458148
        %1561 = vst.msk [vmem:[#allocation2] sm:$0xf0] %vm1560, %v1558
        %v1562 = vld [vmem:[%s698] sm:$0xf]
        %v1564 = vunpack.c.l.b16 %v1562
        %v1565 = vpack.c.b16 %v1564, %v1564
        %1566 = vrot.lane.b32.xlu0 %v1565, 52
        %v1567 = vpop.permute.xlu0 %1566
        %1569 = vst.msk [vmem:[#allocation2 + $0x8] sm:$0xf] %vm1551, %v1567
        %v1570 = vld [vmem:[%s707] sm:$0xf]
        %v1572 = vunpack.c.l.b16 %v1570
        %v1573 = vpack.c.b16 %v1572, %v1572
        %1574 = vrot.lane.b32.xlu0 %v1573, 52
        %v1575 = vpop.permute.xlu0 %1574
        %1577 = vst.msk [vmem:[#allocation2 + $0x8] sm:$0xf0] %vm1560, %v1575
        %v1578 = vld [vmem:[%s716] sm:$0xf]
        %v1580 = vunpack.c.l.b16 %v1578
        %v1581 = vpack.c.b16 %v1580, %v1580
        %1582 = vrot.lane.b32.xlu0 %v1581, 52
        %v1583 = vpop.permute.xlu0 %1582
        %1585 = vst.msk [vmem:[#allocation2 + $0x10] sm:$0xf] %vm1551, %v1583
        %v1586 = vld [vmem:[%s725] sm:$0xf]
        %v1588 = vunpack.c.l.b16 %v1586
        %v1589 = vpack.c.b16 %v1588, %v1588
        %1590 = vrot.lane.b32.xlu0 %v1589, 52
        %v1591 = vpop.permute.xlu0 %1590
        %1593 = vst.msk [vmem:[#allocation2 + $0x10] sm:$0xf0] %vm1560, %v1591
        %v1594 = vld [vmem:[%s734] sm:$0xf]
        %v1596 = vunpack.c.l.b16 %v1594
        %v1597 = vpack.c.b16 %v1596, %v1596
        %1598 = vrot.lane.b32.xlu0 %v1597, 52
        %v1599 = vpop.permute.xlu0 %1598
        %1601 = vst.msk [vmem:[#allocation2 + $0x18] sm:$0xf] %vm1551, %v1599
        %s1602 = scalar_lea.vmem %s172, 280
        %v1603 = vld [vmem:[%s1602] sm:$0xf]
        %v1605 = vunpack.c.l.b16 %v1603
        %v1606 = vpack.c.b16 %v1605, %v1605
        %1607 = vrot.lane.b32.xlu0 %v1606, 52
        %v1608 = vpop.permute.xlu0 %1607
        %1610 = vst.msk [vmem:[#allocation2 + $0x18] sm:$0xf0] %vm1560, %v1608
        %v1611 = vld [vmem:[%s605] sm:$0xf]
        %v1612 = vld [vmem:[%s605 + $0x4] sm:$0x1]
        %v1615 = vunpack.c.l.b16 %v1611
        %v1616 = vunpack.c.l.b16 %v1612
        %v1617 = vpack.c.b16 %v1616, %v1615
        %v1619 = vshrl.u32 %v1617, 16
        %v1621 = vshll.u32 %v1617, 16
        %v1623 = vrot.slane %v1621, 1
        %v1624 = vor.u32 %v1619, %v1623
        %1625 = vrot.lane.b32.xlu0 %v1624, 56
        %v1626 = vpop.permute.xlu0 %1625
        %vm1628 = vcmask 486848
        %1629 = vst.msk [vmem:[#allocation2] sm:$0xf] %vm1628, %v1626
        %v1630 = vld [vmem:[%s615] sm:$0xf]
        %v1631 = vld [vmem:[%s615 + $0x4] sm:$0x1]
        %v1634 = vunpack.c.l.b16 %v1630
        %v1635 = vunpack.c.l.b16 %v1631
        %v1636 = vpack.c.b16 %v1635, %v1634
        %v1638 = vshrl.u32 %v1636, 16
        %v1640 = vrot.slane %v1638, 4
        %v1641 = vshll.u32 %v1636, 16
        %v1643 = vrot.slane %v1641, 5
        %v1644 = vor.u32 %v1640, %v1643
        %1645 = vrot.lane.b32.xlu0 %v1644, 56
        %v1646 = vpop.permute.xlu0 %1645
        %vm1648 = vcmask 490948
        %1649 = vst.msk [vmem:[#allocation2] sm:$0xf0] %vm1648, %v1646
        %v1650 = vld [vmem:[%s624] sm:$0xf]
        %v1651 = vld [vmem:[%s624 + $0x4] sm:$0x1]
        %v1654 = vunpack.c.l.b16 %v1650
        %v1655 = vunpack.c.l.b16 %v1651
        %v1656 = vpack.c.b16 %v1655, %v1654
        %v1658 = vshrl.u32 %v1656, 16
        %v1660 = vshll.u32 %v1656, 16
        %v1662 = vrot.slane %v1660, 1
        %v1663 = vor.u32 %v1658, %v1662
        %1664 = vrot.lane.b32.xlu0 %v1663, 56
        %v1665 = vpop.permute.xlu0 %1664
        %1667 = vst.msk [vmem:[#allocation2 + $0x8] sm:$0xf] %vm1628, %v1665
        %v1668 = vld [vmem:[%s633] sm:$0xf]
        %v1669 = vld [vmem:[%s633 + $0x4] sm:$0x1]
        %v1672 = vunpack.c.l.b16 %v1668
        %v1673 = vunpack.c.l.b16 %v1669
        %v1674 = vpack.c.b16 %v1673, %v1672
        %v1676 = vshrl.u32 %v1674, 16
        %v1678 = vrot.slane %v1676, 4
        %v1679 = vshll.u32 %v1674, 16
        %v1681 = vrot.slane %v1679, 5
        %v1682 = vor.u32 %v1678, %v1681
        %1683 = vrot.lane.b32.xlu0 %v1682, 56
        %v1684 = vpop.permute.xlu0 %1683
        %1686 = vst.msk [vmem:[#allocation2 + $0x8] sm:$0xf0] %vm1648, %v1684
        %v1687 = vld [vmem:[%s642] sm:$0xf]
        %v1688 = vld [vmem:[%s642 + $0x4] sm:$0x1]
        %v1691 = vunpack.c.l.b16 %v1687
        %v1692 = vunpack.c.l.b16 %v1688
        %v1693 = vpack.c.b16 %v1692, %v1691
        %v1695 = vshrl.u32 %v1693, 16
        %v1697 = vshll.u32 %v1693, 16
        %v1699 = vrot.slane %v1697, 1
        %v1700 = vor.u32 %v1695, %v1699
        %1701 = vrot.lane.b32.xlu0 %v1700, 56
        %v1702 = vpop.permute.xlu0 %1701
        %1704 = vst.msk [vmem:[#allocation2 + $0x10] sm:$0xf] %vm1628, %v1702
        %v1705 = vld [vmem:[%s651] sm:$0xf]
        %v1706 = vld [vmem:[%s651 + $0x4] sm:$0x1]
        %v1709 = vunpack.c.l.b16 %v1705
        %v1710 = vunpack.c.l.b16 %v1706
        %v1711 = vpack.c.b16 %v1710, %v1709
        %v1713 = vshrl.u32 %v1711, 16
        %v1715 = vrot.slane %v1713, 4
        %v1716 = vshll.u32 %v1711, 16
        %v1718 = vrot.slane %v1716, 5
        %v1719 = vor.u32 %v1715, %v1718
        %1720 = vrot.lane.b32.xlu0 %v1719, 56
        %v1721 = vpop.permute.xlu0 %1720
        %1723 = vst.msk [vmem:[#allocation2 + $0x10] sm:$0xf0] %vm1648, %v1721
        %v1724 = vld [vmem:[%s660] sm:$0xf]
        %v1725 = vld [vmem:[%s660 + $0x4] sm:$0x1]
        %v1728 = vunpack.c.l.b16 %v1724
        %v1729 = vunpack.c.l.b16 %v1725
        %v1730 = vpack.c.b16 %v1729, %v1728
        %v1732 = vshrl.u32 %v1730, 16
        %v1734 = vshll.u32 %v1730, 16
        %v1736 = vrot.slane %v1734, 1
        %v1737 = vor.u32 %v1732, %v1736
        %1738 = vrot.lane.b32.xlu0 %v1737, 56
        %v1739 = vpop.permute.xlu0 %1738
        %1741 = vst.msk [vmem:[#allocation2 + $0x18] sm:$0xf] %vm1628, %v1739
        %v1742 = vld [vmem:[%s1535] sm:$0xf]
        %v1743 = vld [vmem:[%s1535 + $0x4] sm:$0x1]
        %v1746 = vunpack.c.l.b16 %v1742
        %v1747 = vunpack.c.l.b16 %v1743
        %v1748 = vpack.c.b16 %v1747, %v1746
        %v1750 = vshrl.u32 %v1748, 16
        %v1752 = vrot.slane %v1750, 4
        %v1753 = vshll.u32 %v1748, 16
        %v1755 = vrot.slane %v1753, 5
        %v1756 = vor.u32 %v1752, %v1755
        %1757 = vrot.lane.b32.xlu0 %v1756, 56
        %v1758 = vpop.permute.xlu0 %1757
        %1760 = vst.msk [vmem:[#allocation2 + $0x18] sm:$0xf0] %vm1648, %v1758
        %v1761 = vld [vmem:[%s679] sm:$0xf]
        %v1762 = vld [vmem:[%s679 + $0x4] sm:$0x1]
        %v1765 = vunpack.c.l.b16 %v1761
        %v1766 = vunpack.c.l.b16 %v1762
        %v1767 = vpack.c.b16 %v1766, %v1765
        %v1769 = vshrl.u32 %v1767, 16
        %v1771 = vshll.u32 %v1767, 16
        %v1773 = vrot.slane %v1771, 1
        %v1774 = vor.u32 %v1769, %v1773
        %1775 = vrot.lane.b32.xlu0 %v1774, 60
        %v1776 = vpop.permute.xlu0 %1775
        %vm1778 = vcmask 519648
        %1779 = vst.msk [vmem:[#allocation2] sm:$0xf] %vm1778, %v1776
        %v1780 = vld [vmem:[%s689] sm:$0xf]
        %v1781 = vld [vmem:[%s689 + $0x4] sm:$0x1]
        %v1784 = vunpack.c.l.b16 %v1780
        %v1785 = vunpack.c.l.b16 %v1781
        %v1786 = vpack.c.b16 %v1785, %v1784
        %v1788 = vshrl.u32 %v1786, 16
        %v1790 = vrot.slane %v1788, 4
        %v1791 = vshll.u32 %v1786, 16
        %v1793 = vrot.slane %v1791, 5
        %v1794 = vor.u32 %v1790, %v1793
        %1795 = vrot.lane.b32.xlu0 %v1794, 60
        %v1796 = vpop.permute.xlu0 %1795
        %vm1798 = vcmask 523748
        %1799 = vst.msk [vmem:[#allocation2] sm:$0xf0] %vm1798, %v1796
        %v1800 = vld [vmem:[%s698] sm:$0xf]
        %v1801 = vld [vmem:[%s698 + $0x4] sm:$0x1]
        %v1804 = vunpack.c.l.b16 %v1800
        %v1805 = vunpack.c.l.b16 %v1801
        %v1806 = vpack.c.b16 %v1805, %v1804
        %v1808 = vshrl.u32 %v1806, 16
        %v1810 = vshll.u32 %v1806, 16
        %v1812 = vrot.slane %v1810, 1
        %v1813 = vor.u32 %v1808, %v1812
        %1814 = vrot.lane.b32.xlu0 %v1813, 60
        %v1815 = vpop.permute.xlu0 %1814
        %1817 = vst.msk [vmem:[#allocation2 + $0x8] sm:$0xf] %vm1778, %v1815
        %v1818 = vld [vmem:[%s707] sm:$0xf]
        %v1819 = vld [vmem:[%s707 + $0x4] sm:$0x1]
        %v1822 = vunpack.c.l.b16 %v1818
        %v1823 = vunpack.c.l.b16 %v1819
        %v1824 = vpack.c.b16 %v1823, %v1822
        %v1826 = vshrl.u32 %v1824, 16
        %v1828 = vrot.slane %v1826, 4
        %v1829 = vshll.u32 %v1824, 16
        %v1831 = vrot.slane %v1829, 5
        %v1832 = vor.u32 %v1828, %v1831
        %1833 = vrot.lane.b32.xlu0 %v1832, 60
        %v1834 = vpop.permute.xlu0 %1833
        %1836 = vst.msk [vmem:[#allocation2 + $0x8] sm:$0xf0] %vm1798, %v1834
        %v1837 = vld [vmem:[%s716] sm:$0xf]
        %v1838 = vld [vmem:[%s716 + $0x4] sm:$0x1]
        %v1841 = vunpack.c.l.b16 %v1837
        %v1842 = vunpack.c.l.b16 %v1838
        %v1843 = vpack.c.b16 %v1842, %v1841
        %v1845 = vshrl.u32 %v1843, 16
        %v1847 = vshll.u32 %v1843, 16
        %v1849 = vrot.slane %v1847, 1
        %v1850 = vor.u32 %v1845, %v1849
        %1851 = vrot.lane.b32.xlu0 %v1850, 60
        %v1852 = vpop.permute.xlu0 %1851
        %1854 = vst.msk [vmem:[#allocation2 + $0x10] sm:$0xf] %vm1778, %v1852
        %v1855 = vld [vmem:[%s725] sm:$0xf]
        %v1856 = vld [vmem:[%s725 + $0x4] sm:$0x1]
        %v1859 = vunpack.c.l.b16 %v1855
        %v1860 = vunpack.c.l.b16 %v1856
        %v1861 = vpack.c.b16 %v1860, %v1859
        %v1863 = vshrl.u32 %v1861, 16
        %v1865 = vrot.slane %v1863, 4
        %v1866 = vshll.u32 %v1861, 16
        %v1868 = vrot.slane %v1866, 5
        %v1869 = vor.u32 %v1865, %v1868
        %1870 = vrot.lane.b32.xlu0 %v1869, 60
        %v1871 = vpop.permute.xlu0 %1870
        %1873 = vst.msk [vmem:[#allocation2 + $0x10] sm:$0xf0] %vm1798, %v1871
        %v1874 = vld [vmem:[%s734] sm:$0xf]
        %v1875 = vld [vmem:[%s734 + $0x4] sm:$0x1]
        %v1878 = vunpack.c.l.b16 %v1874
        %v1879 = vunpack.c.l.b16 %v1875
        %v1880 = vpack.c.b16 %v1879, %v1878
        %v1882 = vshrl.u32 %v1880, 16
        %v1884 = vshll.u32 %v1880, 16
        %v1886 = vrot.slane %v1884, 1
        %v1887 = vor.u32 %v1882, %v1886
        %1888 = vrot.lane.b32.xlu0 %v1887, 60
        %v1889 = vpop.permute.xlu0 %1888
        %1891 = vst.msk [vmem:[#allocation2 + $0x18] sm:$0xf] %vm1778, %v1889
        %v1892 = vld [vmem:[%s1602] sm:$0xf]
        %v1893 = vld [vmem:[%s1602 + $0x4] sm:$0x1]
        %v1896 = vunpack.c.l.b16 %v1892
        %v1897 = vunpack.c.l.b16 %v1893
        %v1898 = vpack.c.b16 %v1897, %v1896
        %v1900 = vshrl.u32 %v1898, 16
        %v1902 = vrot.slane %v1900, 4
        %v1903 = vshll.u32 %v1898, 16
        %v1905 = vrot.slane %v1903, 5
        %v1906 = vor.u32 %v1902, %v1905
        %1907 = vrot.lane.b32.xlu0 %v1906, 60
        %v1908 = vpop.permute.xlu0 %1907
        %1910 = vst.msk [vmem:[#allocation2 + $0x18] sm:$0xf0] %vm1798, %v1908
        %v1911 = vld [vmem:[#allocation2] sm:$0xff]
        %v1912 = vld [vmem:[#allocation2 + $0x8] sm:$0xff]
        %v1913 = vld [vmem:[#allocation2 + $0x10] sm:$0xff]
        %v1914 = vld [vmem:[#allocation2 + $0x18] sm:$0xff]
        %v1915 = vld [vmem:[%s1] sm:$0xf]
        %v1916 = vld [vmem:[%s1 + $0x4] sm:$0xf]
        %v1917 = vld [vmem:[%s1 + $0x8] sm:$0xf]
        %v1918 = vld [vmem:[%s1 + $0xc] sm:$0xf]
        %v1919 = vld [vmem:[%s1 + $0x10] sm:$0xf]
        %v1920 = vld [vmem:[%s1 + $0x14] sm:$0xf]
        %v1921 = vld [vmem:[%s1 + $0x18] sm:$0xf]
        %v1922 = vld [vmem:[%s1 + $0x1c] sm:$0xf]
        %v1923 = vld [vmem:[%s1 + $0x20] sm:$0xf]
        %v1924 = vld [vmem:[%s1 + $0x24] sm:$0xf]
        %v1925 = vld [vmem:[%s1 + $0x28] sm:$0xf]
        %v1926 = vld [vmem:[%s1 + $0x2c] sm:$0xf]
        %v1927 = vld [vmem:[%s1 + $0x30] sm:$0xf]
        %v1928 = vld [vmem:[%s1 + $0x34] sm:$0xf]
        %v1929 = vld [vmem:[%s1 + $0x38] sm:$0xf]
        %v1930 = vld [vmem:[%s1 + $0x3c] sm:$0xf]
        %v1931 = vld [vmem:[%s2] sm:$0x7]
        %v1932 = vlaneseq
        %v1933 = vshrl.u32 %v1932, 7
        %v1934 = vsub.s32 0, %v1933
        %v1935 = vrot.slane %v1931, %v1934
        %v1952 = vunpack.c.l.b16 %v1915
        %v1953 = vunpack.c.l.b16 %v1916
        %v1954 = vunpack.c.l.b16 %v1917
        %v1955 = vunpack.c.l.b16 %v1918
        %v1956 = vunpack.c.l.b16 %v1919
        %v1957 = vunpack.c.l.b16 %v1920
        %v1958 = vunpack.c.l.b16 %v1921
        %v1959 = vunpack.c.l.b16 %v1922
        %v1960 = vunpack.c.l.b16 %v1923
        %v1961 = vunpack.c.l.b16 %v1924
        %v1962 = vunpack.c.l.b16 %v1925
        %v1963 = vunpack.c.l.b16 %v1926
        %v1964 = vunpack.c.l.b16 %v1927
        %v1965 = vunpack.c.l.b16 %v1928
        %v1966 = vunpack.c.l.b16 %v1929
        %v1967 = vunpack.c.l.b16 %v1930
        %v1968 = vpack.c.b16 %v1953, %v1952
        %v1969 = vpack.c.b16 %v1955, %v1954
        %v1970 = vpack.c.b16 %v1957, %v1956
        %v1971 = vpack.c.b16 %v1959, %v1958
        %v1972 = vpack.c.b16 %v1961, %v1960
        %v1973 = vpack.c.b16 %v1963, %v1962
        %v1974 = vpack.c.b16 %v1965, %v1964
        %v1975 = vpack.c.b16 %v1967, %v1966
        %1984 = vmatprep.subr.bf16.mxu0 0
        %1985 = vmatpush1.bf16.msra.mxu0 %v1968
        %1986 = vmatprep.subr.bf16.mxu0 0
        %1987 = vmatpush1.bf16.msra.mxu0 %v1969
        %1988 = vmatprep.subr.bf16.mxu0 0
        %1989 = vmatpush1.bf16.msra.mxu0 %v1970
        %1990 = vmatprep.subr.bf16.mxu0 0
        %1991 = vmatpush1.bf16.msra.mxu0 %v1971
        %1992 = vmatprep.subr.bf16.mxu0 0
        %1993 = vmatpush1.bf16.msra.mxu0 %v1972
        %1994 = vmatprep.subr.bf16.mxu0 0
        %1995 = vmatpush1.bf16.msra.mxu0 %v1973
        %1996 = vmatprep.subr.bf16.mxu0 0
        %1997 = vmatpush1.bf16.msra.mxu0 %v1974
        %1998 = vmatprep.subr.bf16.mxu0 0
        %1999 = vmatpush1.bf16.msra.mxu0 %v1975
        %2000 = vmatprep.subr.bf16.mxu0 0
        %2001 = vmatpush1.bf16.msra.mxu0 0
        %2002 = vmatprep.subr.bf16.mxu0 0
        %2003 = vmatpush1.bf16.msra.mxu0 0
        %2004 = vmatprep.subr.bf16.mxu0 0
        %2005 = vmatpush1.bf16.msra.mxu0 0
        %2006 = vmatprep.subr.bf16.mxu0 0
        %2007 = vmatpush1.bf16.msra.mxu0 0
        %2008 = vmatprep.subr.bf16.mxu0 0
        %2009 = vmatpush1.bf16.msra.mxu0 0
        %2010 = vmatprep.subr.bf16.mxu0 0
        %2011 = vmatpush1.bf16.msra.mxu0 0
        %2012 = vmatprep.subr.bf16.mxu0 0
        %2013 = vmatpush1.bf16.msra.mxu0 0
        %2014 = vmatprep.subr.bf16.mxu0 0
        %2015 = vmatpush1.bf16.msra.mxu0 0
        %2016 = vmatprep.mubr.bf16.mxu0 0
        %2017 = vmatmul.mubr.bf16.gmra.mrb[0].mxu0 %v1911
        %v2018 = vpop.f32.mrb[0].mxu0
        %v2019 = vadd.f32 %v1935, %v2018
        %v2020 = vpop.f32.mrb[0].mxu0
        %v2021 = vpop.f32.mrb[0].mxu0
        %v2022 = vadd.f32 %v1935, %v2021
        %v2023 = vpop.f32.mrb[0].mxu0
        %2024 = vmatprep.mubr.bf16.mxu0 0
        %2025 = vmatmul.mubr.bf16.gmra.mrb[0].mxu0 %v1912
        %v2026 = vpop.f32.mrb[0].mxu0
        %v2027 = vadd.f32 %v1935, %v2026
        %v2028 = vpop.f32.mrb[0].mxu0
        %v2029 = vpop.f32.mrb[0].mxu0
        %v2030 = vadd.f32 %v1935, %v2029
        %v2031 = vpop.f32.mrb[0].mxu0
        %2032 = vmatprep.mubr.bf16.mxu0 0
        %2033 = vmatmul.mubr.bf16.gmra.mrb[0].mxu0 %v1913
        %v2034 = vpop.f32.mrb[0].mxu0
        %v2035 = vadd.f32 %v1935, %v2034
        %v2036 = vpop.f32.mrb[0].mxu0
        %v2037 = vpop.f32.mrb[0].mxu0
        %v2038 = vadd.f32 %v1935, %v2037
        %v2039 = vpop.f32.mrb[0].mxu0
        %2040 = vmatprep.mubr.bf16.mxu0 0
        %2041 = vmatmul.mubr.bf16.gmra.mrb[0].mxu0 %v1914
        %v2042 = vpop.f32.mrb[0].mxu0
        %v2043 = vadd.f32 %v1935, %v2042
        %v2044 = vpop.f32.mrb[0].mxu0
        %v2045 = vpop.f32.mrb[0].mxu0
        %v2046 = vadd.f32 %v1935, %v2045
        %v2047 = vpop.f32.mrb[0].mxu0
        %2048 = vdwg.mxu0
        %vm2049 = vcmp.gt.f32.partialorder %v2019, 0.0
        %vm2050 = vcmp.gt.f32.partialorder %v2022, 0.0
        %vm2051 = vcmp.gt.f32.partialorder %v2027, 0.0
        %vm2052 = vcmp.gt.f32.partialorder %v2030, 0.0
        %vm2053 = vcmp.gt.f32.partialorder %v2035, 0.0
        %vm2054 = vcmp.gt.f32.partialorder %v2038, 0.0
        %vm2055 = vcmp.gt.f32.partialorder %v2043, 0.0
        %vm2056 = vcmp.gt.f32.partialorder %v2046, 0.0
        %v2057 = vmul.f32 %v2019, 0.2
        %v2058 = vmul.f32 %v2022, 0.2
        %v2059 = vmul.f32 %v2027, 0.2
        %v2060 = vmul.f32 %v2030, 0.2
        %v2061 = vmul.f32 %v2035, 0.2
        %v2062 = vmul.f32 %v2038, 0.2
        %v2063 = vmul.f32 %v2043, 0.2
        %v2064 = vmul.f32 %v2046, 0.2
        %v2065 = vsel %vm2049, %v2019, %v2057
        %v2066 = vsel %vm2050, %v2022, %v2058
        %v2067 = vsel %vm2051, %v2027, %v2059
        %v2068 = vsel %vm2052, %v2030, %v2060
        %v2069 = vsel %vm2053, %v2035, %v2061
        %v2070 = vsel %vm2054, %v2038, %v2062
        %v2071 = vsel %vm2055, %v2043, %v2063
        %v2072 = vsel %vm2056, %v2046, %v2064
        %2073 = vst [vmem:[%s166] sm:$0xff] %v2065
        %2074 = vst [vmem:[%s166 + $0x8] sm:$0xff] %v2066
        %2075 = vst [vmem:[%s166 + $0x10] sm:$0xff] %v2067
        %2076 = vst [vmem:[%s166 + $0x18] sm:$0xff] %v2068
        %2077 = vst [vmem:[%s166 + $0x20] sm:$0xff] %v2069
        %2078 = vst [vmem:[%s166 + $0x28] sm:$0xff] %v2070
        %2079 = vst [vmem:[%s166 + $0x30] sm:$0xff] %v2071
        %2080 = vst [vmem:[%s166 + $0x38] sm:$0xff] %v2072
        %s2081 = sand.u32 %s93, 1
        %s2082 = scalar_lea.sflag [#allocation4], %s2081
        %s2083 = sand.u32 %s93, 1
        %s2084 = smul.addr %s2083, 64
        %s2085 = scalar_lea.vmem [#allocation3], %s2084
        // Predicated region
        $region33: #{tpu_custom_call.1} parent=31 // pred_check
          %p2086 = pneg %p103
        $region34: #{tpu_custom_call.1} parent=31 // pred_check_branch
          %2088 = sbr.rel (%p2086) target = $region36
        $region35: #{tpu_custom_call.1} parent=31 // pred_region
          %s2090 = ssub.s32 1024, 1024
          %2091 = vsyncadd %s2082, %s2090
          %s2092 = smul.addr %s17, 8
          %s2093 = smul.addr %s2092, 128
          %s2094 = scalar_lea.hbm %s3, %s2093
          %s2095 = sshll.u32 %s2085, 4
          %s2096 = int_to_ptr.vmem [resolvable:$true] %s2095
          %2101 = dma.vmem_to_hbm [thread:$0]  %s2096, 1024, %s2094, %s2082, 128, 128, 8
        $region36: #{tpu_custom_call.1} parent=31 // pred_fallthru
          _
      $region32: #{tpu_custom_call.1} parent=5 // pred_fallthru
        _
      %p2102 = scmp.le.s32.totalorder 2, %s12
      // Predicated region
      $region37: #{tpu_custom_call.1} parent=5 // pred_check
        %p2103 = pneg %p2102
      $region38: #{tpu_custom_call.1} parent=5 // pred_check_branch
        %2105 = sbr.rel (%p2103) target = $region40
      $region39: #{tpu_custom_call.1} parent=5 // pred_region
        %s2106 = ssub.s32 %s12, 2
        // Predicated region
        $region41: #{tpu_custom_call.1} parent=39 // pred_check
          %p2107 = pneg %p109
        $region42: #{tpu_custom_call.1} parent=39 // pred_check_branch
          %2109 = sbr.rel (%p2107) target = $region44
        $region43: #{tpu_custom_call.1} parent=39 // pred_region
          %s2110 = sand.u32 %s94, 1
          %s2111 = scalar_lea.sflag [#allocation4], %s2110
          %s2112 = sand.u32 %s94, 1
          %s2113 = smul.addr %s2112, 64
          %s2114 = scalar_lea.vmem [#allocation3], %s2113
          %2115 = dma.done %s2111, 1024
        $region44: #{tpu_custom_call.1} parent=39 // pred_fallthru
          _
      $region40: #{tpu_custom_call.1} parent=5 // pred_fallthru
        _
    $region6: #{tpu_custom_call.1} parent=1 // loop_footer
      %s16 = sadd.s32 1, %s12
    $region7: #{tpu_custom_call.1} parent=1 // loop_footer_branch
      %11 = sbr.rel target = $region3
    $region8: #{tpu_custom_call.1} parent=1 // loop_exit
      _
    %2116 = vsyncpa [#allocation4], 1
    %s2117 = scalar_lea.sflag [#allocation4], 1
    %2118 = vsyncpa %s2117, 1

</llo_original>
